<compile_context>
chip_gen: v7x
topology: tpu7x:2x2x1
jax: 0.10.0
libtpu: 0.0.40
codegen_flags: <defaults>
</compile_context>

<pallas_src>
import functools

import jax
import jax.numpy as jnp
from jax.experimental import pallas as pl
from jax.experimental.pallas import tpu as pltpu

EPS = 1e-5  # nn.InstanceNorm2d default eps


# ----------------------------- Pallas kernels ------------------------------

def conv_in_relu_kernel(p_ref, w_ref, o_ref):
    """One image: conv-as-matmul + InstanceNorm2d (training stats) + ReLU.

    p_ref: (1, K, P)    im2col patches, K = Cin*5*5, P = Hout*Wout
    w_ref: (Cout, K)    flattened conv weight (VMEM-resident across grid)
    o_ref: (1, Cout, P) output already in flattened-NCHW orientation

    Conv bias is intentionally absent: InstanceNorm's per-channel mean
    subtraction cancels it exactly and the variance is unaffected.
    """
    y = jnp.dot(w_ref[...], p_ref[0],
                preferred_element_type=jnp.float32)          # (Cout, P) on MXU
    # InstanceNorm2d: per-channel stats over the P spatial positions,
    # training-mode biased variance, affine=False.  Single pass E[y^2]-m^2.
    mean = jnp.mean(y, axis=1, keepdims=True)                 # lane reduce (XLU)
    var = jnp.mean(y * y, axis=1, keepdims=True) - mean * mean
    var = jnp.maximum(var, 0.0)
    y = (y - mean) * jax.lax.rsqrt(var + EPS)                 # rsqrt -> EUP
    o_ref[0] = jnp.maximum(y, 0.0)                            # ReLU


def conv4_heads_kernel(p_ref, w_ref, wh_ref, bh_ref, o_ref):
    """conv4 + InstanceNorm + ReLU + flatten + 3 fused Linear heads, batched.

    p_ref:  (N*4, K4)    conv4 im2col patches, row r = n*4 + p (p = h*2 + w)
    w_ref:  (K4, 128)    conv4 weight, transposed (no bias: cancelled by IN)
    wh_ref: (4, 128, O)  heads weight with wh[p, c, o] = W_heads[o, c*4 + p]
                         (PyTorch flatten order folded into the layout)
    bh_ref: (1, O)       concatenated head biases [mu | logvar | class]
    o_ref:  (N, O)       concatenated head outputs
    """
    n = o_ref.shape[0]
    # One batched MXU matmul: M = N*4 rows instead of N separate M=4 matmuls.
    y = jnp.dot(p_ref[...], w_ref[...],
                preferred_element_type=jnp.float32)           # (N*4, 128)
    y = y.reshape(n, 4, 128)                                  # [n, p, c]
    # InstanceNorm2d over the 4 spatial positions per (sample, channel):
    # sublane reduce over axis=1, training-mode biased variance.
    mean = jnp.mean(y, axis=1, keepdims=True)                 # (N, 1, 128)
    var = jnp.mean(y * y, axis=1, keepdims=True) - mean * mean
    var = jnp.maximum(var, 0.0)
    y = jnp.maximum((y - mean) * jax.lax.rsqrt(var + EPS), 0.0)
    # Heads: flatten order is folded into wh, so the heads become 4
    # accumulating (N,128)x(128,O) MXU matmuls -- no in-kernel (C*H*W) reshape.
    acc = bh_ref[...] + jnp.dot(y[:, 0, :], wh_ref[0],
                                preferred_element_type=jnp.float32)
    for p4 in range(1, 4):
        acc = acc + jnp.dot(y[:, p4, :], wh_ref[p4],
                            preferred_element_type=jnp.float32)
    o_ref[...] = acc                                          # (N, O)


# ------------------------------- JAX glue ----------------------------------

def im2col_kp(x, k=5, stride=2, pad=1):
    """NCHW -> (N, Cin*k*k, Hout*Wout) patches; K is channel-major so it
    matches torch weight.reshape(Cout, Cin*k*k) flattening."""
    N, C, H, W = x.shape
    Hout = (H + 2 * pad - k) // stride + 1
    Wout = (W + 2 * pad - k) // stride + 1
    xp = jnp.pad(x, ((0, 0), (0, 0), (pad, pad), (pad, pad)))
    cols = []
    for kh in range(k):
        for kw in range(k):
            cols.append(xp[:, :, kh:kh + stride * (Hout - 1) + 1:stride,
                              kw:kw + stride * (Wout - 1) + 1:stride])
    p = jnp.stack(cols, axis=2)                    # (N, C, k*k, Hout, Wout)
    return p.reshape(N, C * k * k, Hout * Wout), Hout, Wout


def conv_in_relu(x, w2d):
    """Conv2d(k=5, s=2, p=1) + InstanceNorm2d + ReLU, one fused kernel.

    w2d is the pre-flattened (Cout, Cin*25) weight from prepare_params.
    """
    N = x.shape[0]
    Cout, K = w2d.shape
    patches, Hout, Wout = im2col_kp(x)             # (N, K, P), no transpose
    P = patches.shape[2]
    out = pl.pallas_call(
        conv_in_relu_kernel,
        out_shape=jax.ShapeDtypeStruct((N, Cout, P), jnp.float32),
        grid=(N,),
        in_specs=[pl.BlockSpec((1, K, P), lambda n: (n, 0, 0)),
                  pl.BlockSpec((Cout, K), lambda n: (0, 0))],  # weight resident
        out_specs=pl.BlockSpec((1, Cout, P), lambda n: (n, 0, 0)),
        compiler_params=pltpu.CompilerParams(
            dimension_semantics=("parallel",)),    # 1 image per TC on v7x
    )(patches, w2d)
    # (Cout, P) is already NCHW-flattened: no transpose needed.
    return out.reshape(N, Cout, Hout, Wout)


def conv4_and_heads(x, w4t, wh, bh):
    """conv4 block fused with the three Linear heads, batched over N."""
    N = x.shape[0]
    patches, _, _ = im2col_kp(x)                   # (N, K4, 4)
    K = patches.shape[1]
    patches = jnp.transpose(patches, (0, 2, 1)).reshape(N * 4, K)  # tiny
    O = wh.shape[-1]
    return pl.pallas_call(
        conv4_heads_kernel,
        out_shape=jax.ShapeDtypeStruct((N, O), jnp.float32),
    )(patches, w4t, wh, bh)


def prepare_params(params):
    """One-time, outside-the-jit parameter preprocessing -> kernel-ready layouts.

    Conv biases are dropped (exactly cancelled by the following InstanceNorm);
    head weights are concatenated and permuted so the PyTorch (C*H*W) flatten
    order (flat = c*4 + p, p = h*2 + w) is baked into the layout.
    """
    kp = {}
    for i in range(1, 4):
        w = params[f"conv{i}_w"]
        kp[f"conv{i}_w"] = w.reshape(w.shape[0], -1)           # (Cout, Cin*25)
    w4 = params["conv4_w"]
    kp["conv4_wt"] = w4.reshape(w4.shape[0], -1).T             # (1600, 128)
    wcat = jnp.concatenate(
        [params["mu_w"], params["lv_w"], params["cl_w"]], axis=0)   # (O, 512)
    kp["heads_w"] = jnp.transpose(
        wcat.reshape(wcat.shape[0], 128, 4), (2, 1, 0))        # (4, 128, O)
    kp["heads_b"] = jnp.concatenate(
        [params["mu_b"], params["lv_b"], params["cl_b"]]).reshape(1, -1)
    return kp


@functools.partial(jax.jit, static_argnames=("style_dim",))
def encoder_forward(kparams, x, *, style_dim):
    h = x
    for i in range(1, 4):
        h = conv_in_relu(h, kparams[f"conv{i}_w"])
    out = conv4_and_heads(h, kparams["conv4_wt"],
                          kparams["heads_w"], kparams["heads_b"])
    return (out[:, :style_dim],
            out[:, style_dim:2 * style_dim],
            out[:, 2 * style_dim:])


# TODO(synk): InstanceNorm2d(track_running_stats=True) also momentum-updates
# running buffers during training; those buffer updates do not affect this
# (training-mode) forward output and are not replicated.  Eval-mode
# normalization with the running buffers is likewise not implemented.

def init_params(key, style_dim, class_dim):
    """Deterministic synthetic parameters (uniform in +/- 1/sqrt(fan_in))."""
    params = {}
    chans = [(3, 16), (16, 32), (32, 64), (64, 128)]
    keys = jax.random.split(key, 2 * len(chans) + 6)
    ki = 0
    for i, (cin, cout) in enumerate(chans, start=1):
        bound = 1.0 / jnp.sqrt(cin * 5 * 5)
        params[f"conv{i}_w"] = jax.random.uniform(
            keys[ki], (cout, cin, 5, 5), jnp.float32, -bound, bound); ki += 1
        params[f"conv{i}_b"] = jax.random.uniform(
            keys[ki], (cout,), jnp.float32, -bound, bound); ki += 1
    bound = 1.0 / jnp.sqrt(512.0)
    for name, odim in (("mu", style_dim), ("lv", style_dim), ("cl", class_dim)):
        params[f"{name}_w"] = jax.random.uniform(
            keys[ki], (odim, 512), jnp.float32, -bound, bound); ki += 1
        params[f"{name}_b"] = jax.random.uniform(
            keys[ki], (odim,), jnp.float32, -bound, bound); ki += 1
    return params


if __name__ == "__main__":
    style_dim, class_dim = 8, 16
    # Input spatial size must reduce to 2x2 after four stride-2 k=5 p=1 convs
    # (128*2*2 = 512 = Linear in_features) -> 60x60 input.
    N, C, H, W = 2, 3, 60, 60

    key = jax.random.PRNGKey(0)
    pkey, xkey = jax.random.split(key)
    params = init_params(pkey, style_dim, class_dim)
    x = jax.random.normal(xkey, (N, C, H, W), jnp.float32)

    # One-time parameter preprocessing OUTSIDE the per-step jit: the per-call
    # forward never re-executes weight reshapes/transposes/concats.
    kparams = jax.tree_util.tree_map(jnp.asarray, prepare_params(params))
    jax.block_until_ready(kparams)

    mu, logvar, cls = encoder_forward(kparams, x, style_dim=style_dim)
    jax.block_until_ready((mu, logvar, cls))

    assert mu.shape == (N, style_dim)
    assert logvar.shape == (N, style_dim)
    assert cls.shape == (N, class_dim)
    assert bool(jnp.all(jnp.isfinite(mu)))
    assert bool(jnp.all(jnp.isfinite(logvar)))
    assert bool(jnp.all(jnp.isfinite(cls)))
    print("KERNEL_OK")
</pallas_src>

<mosaic_0001>
module attributes {stable_mosaic.version = 11 : i64} {
  func.func @conv_in_relu_kernel(%arg0: i32, %arg1: memref<1x75x841xf32, #tpu.memory_space<vmem>>, %arg2: memref<16x75xf32, #tpu.memory_space<vmem>>, %arg3: memref<1x16x841xf32, #tpu.memory_space<vmem>>) attributes {dimension_semantics = [#tpu.dimension_semantics<parallel>], iteration_bounds = array<i64: 2>, scalar_prefetch = 0 : i64, scratch_operands = 0 : i64, tpu.core_type = #tpu.core_type<tc>, window_params = [{transform_indices = @transform_0, window_bounds = array<i64: 1, 75, 841>}, {pipeline_mode = #tpu.pipeline_mode<synchronous>, transform_indices = @transform_1, window_bounds = array<i64: 16, 75>}, {transform_indices = @transform_2, window_bounds = array<i64: 1, 16, 841>}]} {
    %c0 = arith.constant 0 : index
    %c0_0 = arith.constant 0 : index
    %0 = vector.load %arg2[%c0, %c0_0] : memref<16x75xf32, #tpu.memory_space<vmem>>, vector<16x75xf32>
    %c0_1 = arith.constant 0 : index
    %c0_2 = arith.constant 0 : index
    %c0_3 = arith.constant 0 : index
    %1 = vector.load %arg1[%c0_1, %c0_2, %c0_3] : memref<1x75x841xf32, #tpu.memory_space<vmem>>, vector<1x75x841xf32>
    %2 = vector.shape_cast %1 : vector<1x75x841xf32> to vector<75x841xf32>
    %cst = arith.constant dense<0.000000e+00> : vector<16x841xf32>
    %3 = tpu.matmul %0, %2, %cst {dimension_numbers = #tpu.dot_dimension_numbers<[1], [0], [0], [1], [0, 0, 1, 1], [], []>} : vector<16x75xf32>, vector<75x841xf32>, vector<16x841xf32> -> vector<16x841xf32>
    %cst_4 = arith.constant dense<0.000000e+00> : vector<16xf32>
    %4 = vector.multi_reduction <add>, %3, %cst_4 [1] : vector<16x841xf32> to vector<16xf32>
    %5 = vector.shape_cast %4 : vector<16xf32> to vector<16x1xf32>
    %cst_5 = arith.constant 8.410000e+02 : f32
    %6 = vector.broadcast %cst_5 : f32 to vector<16x1xf32>
    %7 = arith.divf %5, %6 : vector<16x1xf32>
    %8 = arith.mulf %3, %3 : vector<16x841xf32>
    %cst_6 = arith.constant dense<0.000000e+00> : vector<16xf32>
    %9 = vector.multi_reduction <add>, %8, %cst_6 [1] : vector<16x841xf32> to vector<16xf32>
    %10 = vector.shape_cast %9 : vector<16xf32> to vector<16x1xf32>
    %cst_7 = arith.constant 8.410000e+02 : f32
    %11 = vector.broadcast %cst_7 : f32 to vector<16x1xf32>
    %12 = arith.divf %10, %11 : vector<16x1xf32>
    %13 = arith.mulf %7, %7 : vector<16x1xf32>
    %14 = arith.subf %12, %13 : vector<16x1xf32>
    %cst_8 = arith.constant 0.000000e+00 : f32
    %15 = vector.broadcast %cst_8 : f32 to vector<16x1xf32>
    %16 = arith.maximumf %14, %15 : vector<16x1xf32>
    %17 = vector.broadcast %7 : vector<16x1xf32> to vector<16x841xf32>
    %18 = arith.subf %3, %17 : vector<16x841xf32>
    %cst_9 = arith.constant 9.99999974E-6 : f32
    %19 = vector.broadcast %cst_9 : f32 to vector<16x1xf32>
    %20 = arith.addf %16, %19 : vector<16x1xf32>
    %21 = math.rsqrt %20 : vector<16x1xf32>
    %22 = vector.broadcast %21 : vector<16x1xf32> to vector<16x841xf32>
    %23 = arith.mulf %18, %22 : vector<16x841xf32>
    %cst_10 = arith.constant 0.000000e+00 : f32
    %24 = vector.broadcast %cst_10 : f32 to vector<16x841xf32>
    %25 = arith.maximumf %23, %24 : vector<16x841xf32>
    %c0_11 = arith.constant 0 : index
    %c0_12 = arith.constant 0 : index
    %c0_13 = arith.constant 0 : index
    %26 = vector.load %arg3[%c0_11, %c0_12, %c0_13] : memref<1x16x841xf32, #tpu.memory_space<vmem>>, vector<1x16x841xf32>
    %27 = vector.shape_cast %26 : vector<1x16x841xf32> to vector<16x841xf32>
    %28 = vector.shape_cast %25 : vector<16x841xf32> to vector<1x16x841xf32>
    tpu.vector_store %arg3[%c0_11, %c0_12, %c0_13], %28 {strides = array<i32>} : memref<1x16x841xf32, #tpu.memory_space<vmem>>, vector<1x16x841xf32>,
    return
  }
  func.func @transform_0(%arg0: i32) -> (i32, i32, i32) {
    %c0_i32 = arith.constant 0 : i32
    %c0_i32_0 = arith.constant 0 : i32
    %c0_i32_1 = arith.constant 0 : i32
    return %arg0, %c0_i32, %c0_i32_0 : i32, i32, i32
  }
  func.func @transform_1(%arg0: i32) -> (i32, i32) {
    %c0_i32 = arith.constant 0 : i32
    %c0_i32_0 = arith.constant 0 : i32
    %c0_i32_1 = arith.constant 0 : i32
    return %c0_i32, %c0_i32_0 : i32, i32
  }
  func.func @transform_2(%arg0: i32) -> (i32, i32, i32) {
    %c0_i32 = arith.constant 0 : i32
    %c0_i32_0 = arith.constant 0 : i32
    %c0_i32_1 = arith.constant 0 : i32
    return %arg0, %c0_i32, %c0_i32_0 : i32, i32, i32
  }
}

module attributes {stable_mosaic.version = 11 : i64} {
  func.func @conv_in_relu_kernel(%arg0: i32, %arg1: memref<1x400x196xf32, #tpu.memory_space<vmem>>, %arg2: memref<32x400xf32, #tpu.memory_space<vmem>>, %arg3: memref<1x32x196xf32, #tpu.memory_space<vmem>>) attributes {dimension_semantics = [#tpu.dimension_semantics<parallel>], iteration_bounds = array<i64: 2>, scalar_prefetch = 0 : i64, scratch_operands = 0 : i64, tpu.core_type = #tpu.core_type<tc>, window_params = [{transform_indices = @transform_0, window_bounds = array<i64: 1, 400, 196>}, {pipeline_mode = #tpu.pipeline_mode<synchronous>, transform_indices = @transform_1, window_bounds = array<i64: 32, 400>}, {transform_indices = @transform_2, window_bounds = array<i64: 1, 32, 196>}]} {
    %c0 = arith.constant 0 : index
    %c0_0 = arith.constant 0 : index
    %0 = vector.load %arg2[%c0, %c0_0] : memref<32x400xf32, #tpu.memory_space<vmem>>, vector<32x400xf32>
    %c0_1 = arith.constant 0 : index
    %c0_2 = arith.constant 0 : index
    %c0_3 = arith.constant 0 : index
    %1 = vector.load %arg1[%c0_1, %c0_2, %c0_3] : memref<1x400x196xf32, #tpu.memory_space<vmem>>, vector<1x400x196xf32>
    %2 = vector.shape_cast %1 : vector<1x400x196xf32> to vector<400x196xf32>
    %cst = arith.constant dense<0.000000e+00> : vector<32x196xf32>
    %3 = tpu.matmul %0, %2, %cst {dimension_numbers = #tpu.dot_dimension_numbers<[1], [0], [0], [1], [0, 0, 1, 1], [], []>} : vector<32x400xf32>, vector<400x196xf32>, vector<32x196xf32> -> vector<32x196xf32>
    %cst_4 = arith.constant dense<0.000000e+00> : vector<32xf32>
    %4 = vector.multi_reduction <add>, %3, %cst_4 [1] : vector<32x196xf32> to vector<32xf32>
    %5 = vector.shape_cast %4 : vector<32xf32> to vector<32x1xf32>
    %cst_5 = arith.constant 1.960000e+02 : f32
    %6 = vector.broadcast %cst_5 : f32 to vector<32x1xf32>
    %7 = arith.divf %5, %6 : vector<32x1xf32>
    %8 = arith.mulf %3, %3 : vector<32x196xf32>
    %cst_6 = arith.constant dense<0.000000e+00> : vector<32xf32>
    %9 = vector.multi_reduction <add>, %8, %cst_6 [1] : vector<32x196xf32> to vector<32xf32>
    %10 = vector.shape_cast %9 : vector<32xf32> to vector<32x1xf32>
    %cst_7 = arith.constant 1.960000e+02 : f32
    %11 = vector.broadcast %cst_7 : f32 to vector<32x1xf32>
    %12 = arith.divf %10, %11 : vector<32x1xf32>
    %13 = arith.mulf %7, %7 : vector<32x1xf32>
    %14 = arith.subf %12, %13 : vector<32x1xf32>
    %cst_8 = arith.constant 0.000000e+00 : f32
    %15 = vector.broadcast %cst_8 : f32 to vector<32x1xf32>
    %16 = arith.maximumf %14, %15 : vector<32x1xf32>
    %17 = vector.broadcast %7 : vector<32x1xf32> to vector<32x196xf32>
    %18 = arith.subf %3, %17 : vector<32x196xf32>
    %cst_9 = arith.constant 9.99999974E-6 : f32
    %19 = vector.broadcast %cst_9 : f32 to vector<32x1xf32>
    %20 = arith.addf %16, %19 : vector<32x1xf32>
    %21 = math.rsqrt %20 : vector<32x1xf32>
    %22 = vector.broadcast %21 : vector<32x1xf32> to vector<32x196xf32>
    %23 = arith.mulf %18, %22 : vector<32x196xf32>
    %cst_10 = arith.constant 0.000000e+00 : f32
    %24 = vector.broadcast %cst_10 : f32 to vector<32x196xf32>
    %25 = arith.maximumf %23, %24 : vector<32x196xf32>
    %c0_11 = arith.constant 0 : index
    %c0_12 = arith.constant 0 : index
    %c0_13 = arith.constant 0 : index
    %26 = vector.load %arg3[%c0_11, %c0_12, %c0_13] : memref<1x32x196xf32, #tpu.memory_space<vmem>>, vector<1x32x196xf32>
    %27 = vector.shape_cast %26 : vector<1x32x196xf32> to vector<32x196xf32>
    %28 = vector.shape_cast %25 : vector<32x196xf32> to vector<1x32x196xf32>
    tpu.vector_store %arg3[%c0_11, %c0_12, %c0_13], %28 {strides = array<i32>} : memref<1x32x196xf32, #tpu.memory_space<vmem>>, vector<1x32x196xf32>,
    return
  }
  func.func @transform_0(%arg0: i32) -> (i32, i32, i32) {
    %c0_i32 = arith.constant 0 : i32
    %c0_i32_0 = arith.constant 0 : i32
    %c0_i32_1 = arith.constant 0 : i32
    return %arg0, %c0_i32, %c0_i32_0 : i32, i32, i32
  }
  func.func @transform_1(%arg0: i32) -> (i32, i32) {
    %c0_i32 = arith.constant 0 : i32
    %c0_i32_0 = arith.constant 0 : i32
    %c0_i32_1 = arith.constant 0 : i32
    return %c0_i32, %c0_i32_0 : i32, i32
  }
  func.func @transform_2(%arg0: i32) -> (i32, i32, i32) {
    %c0_i32 = arith.constant 0 : i32
    %c0_i32_0 = arith.constant 0 : i32
    %c0_i32_1 = arith.constant 0 : i32
    return %arg0, %c0_i32, %c0_i32_0 : i32, i32, i32
  }
}

module attributes {stable_mosaic.version = 11 : i64} {
  func.func @conv_in_relu_kernel(%arg0: i32, %arg1: memref<1x800x36xf32, #tpu.memory_space<vmem>>, %arg2: memref<64x800xf32, #tpu.memory_space<vmem>>, %arg3: memref<1x64x36xf32, #tpu.memory_space<vmem>>) attributes {dimension_semantics = [#tpu.dimension_semantics<parallel>], iteration_bounds = array<i64: 2>, scalar_prefetch = 0 : i64, scratch_operands = 0 : i64, tpu.core_type = #tpu.core_type<tc>, window_params = [{transform_indices = @transform_0, window_bounds = array<i64: 1, 800, 36>}, {pipeline_mode = #tpu.pipeline_mode<synchronous>, transform_indices = @transform_1, window_bounds = array<i64: 64, 800>}, {transform_indices = @transform_2, window_bounds = array<i64: 1, 64, 36>}]} {
    %c0 = arith.constant 0 : index
    %c0_0 = arith.constant 0 : index
    %0 = vector.load %arg2[%c0, %c0_0] : memref<64x800xf32, #tpu.memory_space<vmem>>, vector<64x800xf32>
    %c0_1 = arith.constant 0 : index
    %c0_2 = arith.constant 0 : index
    %c0_3 = arith.constant 0 : index
    %1 = vector.load %arg1[%c0_1, %c0_2, %c0_3] : memref<1x800x36xf32, #tpu.memory_space<vmem>>, vector<1x800x36xf32>
    %2 = vector.shape_cast %1 : vector<1x800x36xf32> to vector<800x36xf32>
    %cst = arith.constant dense<0.000000e+00> : vector<64x36xf32>
    %3 = tpu.matmul %0, %2, %cst {dimension_numbers = #tpu.dot_dimension_numbers<[1], [0], [0], [1], [0, 0, 1, 1], [], []>} : vector<64x800xf32>, vector<800x36xf32>, vector<64x36xf32> -> vector<64x36xf32>
    %cst_4 = arith.constant dense<0.000000e+00> : vector<64xf32>
    %4 = vector.multi_reduction <add>, %3, %cst_4 [1] : vector<64x36xf32> to vector<64xf32>
    %5 = vector.shape_cast %4 : vector<64xf32> to vector<64x1xf32>
    %cst_5 = arith.constant 3.600000e+01 : f32
    %6 = vector.broadcast %cst_5 : f32 to vector<64x1xf32>
    %7 = arith.divf %5, %6 : vector<64x1xf32>
    %8 = arith.mulf %3, %3 : vector<64x36xf32>
    %cst_6 = arith.constant dense<0.000000e+00> : vector<64xf32>
    %9 = vector.multi_reduction <add>, %8, %cst_6 [1] : vector<64x36xf32> to vector<64xf32>
    %10 = vector.shape_cast %9 : vector<64xf32> to vector<64x1xf32>
    %cst_7 = arith.constant 3.600000e+01 : f32
    %11 = vector.broadcast %cst_7 : f32 to vector<64x1xf32>
    %12 = arith.divf %10, %11 : vector<64x1xf32>
    %13 = arith.mulf %7, %7 : vector<64x1xf32>
    %14 = arith.subf %12, %13 : vector<64x1xf32>
    %cst_8 = arith.constant 0.000000e+00 : f32
    %15 = vector.broadcast %cst_8 : f32 to vector<64x1xf32>
    %16 = arith.maximumf %14, %15 : vector<64x1xf32>
    %17 = vector.broadcast %7 : vector<64x1xf32> to vector<64x36xf32>
    %18 = arith.subf %3, %17 : vector<64x36xf32>
    %cst_9 = arith.constant 9.99999974E-6 : f32
    %19 = vector.broadcast %cst_9 : f32 to vector<64x1xf32>
    %20 = arith.addf %16, %19 : vector<64x1xf32>
    %21 = math.rsqrt %20 : vector<64x1xf32>
    %22 = vector.broadcast %21 : vector<64x1xf32> to vector<64x36xf32>
    %23 = arith.mulf %18, %22 : vector<64x36xf32>
    %cst_10 = arith.constant 0.000000e+00 : f32
    %24 = vector.broadcast %cst_10 : f32 to vector<64x36xf32>
    %25 = arith.maximumf %23, %24 : vector<64x36xf32>
    %c0_11 = arith.constant 0 : index
    %c0_12 = arith.constant 0 : index
    %c0_13 = arith.constant 0 : index
    %26 = vector.load %arg3[%c0_11, %c0_12, %c0_13] : memref<1x64x36xf32, #tpu.memory_space<vmem>>, vector<1x64x36xf32>
    %27 = vector.shape_cast %26 : vector<1x64x36xf32> to vector<64x36xf32>
    %28 = vector.shape_cast %25 : vector<64x36xf32> to vector<1x64x36xf32>
    tpu.vector_store %arg3[%c0_11, %c0_12, %c0_13], %28 {strides = array<i32>} : memref<1x64x36xf32, #tpu.memory_space<vmem>>, vector<1x64x36xf32>,
    return
  }
  func.func @transform_0(%arg0: i32) -> (i32, i32, i32) {
    %c0_i32 = arith.constant 0 : i32
    %c0_i32_0 = arith.constant 0 : i32
    %c0_i32_1 = arith.constant 0 : i32
    return %arg0, %c0_i32, %c0_i32_0 : i32, i32, i32
  }
  func.func @transform_1(%arg0: i32) -> (i32, i32) {
    %c0_i32 = arith.constant 0 : i32
    %c0_i32_0 = arith.constant 0 : i32
    %c0_i32_1 = arith.constant 0 : i32
    return %c0_i32, %c0_i32_0 : i32, i32
  }
  func.func @transform_2(%arg0: i32) -> (i32, i32, i32) {
    %c0_i32 = arith.constant 0 : i32
    %c0_i32_0 = arith.constant 0 : i32
    %c0_i32_1 = arith.constant 0 : i32
    return %arg0, %c0_i32, %c0_i32_0 : i32, i32, i32
  }
}

module attributes {stable_mosaic.version = 11 : i64} {
  func.func @conv4_heads_kernel(%arg0: memref<8x1600xf32, #tpu.memory_space<vmem>>, %arg1: memref<1600x128xf32, #tpu.memory_space<vmem>>, %arg2: memref<4x128x32xf32, #tpu.memory_space<vmem>>, %arg3: memref<1x32xf32, #tpu.memory_space<vmem>>, %arg4: memref<2x32xf32, #tpu.memory_space<vmem>>) attributes {dimension_semantics = [], scalar_prefetch = 0 : i64, scratch_operands = 0 : i64, tpu.core_type = #tpu.core_type<tc>} {
    %c0 = arith.constant 0 : index
    %c0_0 = arith.constant 0 : index
    %0 = vector.load %arg0[%c0, %c0_0] : memref<8x1600xf32, #tpu.memory_space<vmem>>, vector<8x1600xf32>
    %c0_1 = arith.constant 0 : index
    %c0_2 = arith.constant 0 : index
    %1 = vector.load %arg1[%c0_1, %c0_2] : memref<1600x128xf32, #tpu.memory_space<vmem>>, vector<1600x128xf32>
    %cst = arith.constant dense<0.000000e+00> : vector<8x128xf32>
    %2 = tpu.matmul %0, %1, %cst {dimension_numbers = #tpu.dot_dimension_numbers<[1], [0], [0], [1], [0, 0, 1, 1], [], []>} : vector<8x1600xf32>, vector<1600x128xf32>, vector<8x128xf32> -> vector<8x128xf32>
    %3 = vector.shape_cast %2 : vector<8x128xf32> to vector<2x4x128xf32>
    %cst_3 = arith.constant dense<0.000000e+00> : vector<2x128xf32>
    %4 = vector.multi_reduction <add>, %3, %cst_3 [1] : vector<2x4x128xf32> to vector<2x128xf32>
    %5 = vector.shape_cast %4 : vector<2x128xf32> to vector<2x1x128xf32>
    %cst_4 = arith.constant 4.000000e+00 : f32
    %6 = vector.broadcast %cst_4 : f32 to vector<2x1x128xf32>
    %7 = arith.divf %5, %6 : vector<2x1x128xf32>
    %8 = arith.mulf %3, %3 : vector<2x4x128xf32>
    %cst_5 = arith.constant dense<0.000000e+00> : vector<2x128xf32>
    %9 = vector.multi_reduction <add>, %8, %cst_5 [1] : vector<2x4x128xf32> to vector<2x128xf32>
    %10 = vector.shape_cast %9 : vector<2x128xf32> to vector<2x1x128xf32>
    %cst_6 = arith.constant 4.000000e+00 : f32
    %11 = vector.broadcast %cst_6 : f32 to vector<2x1x128xf32>
    %12 = arith.divf %10, %11 : vector<2x1x128xf32>
    %13 = arith.mulf %7, %7 : vector<2x1x128xf32>
    %14 = arith.subf %12, %13 : vector<2x1x128xf32>
    %cst_7 = arith.constant 0.000000e+00 : f32
    %15 = vector.broadcast %cst_7 : f32 to vector<2x1x128xf32>
    %16 = arith.maximumf %14, %15 : vector<2x1x128xf32>
    %17 = vector.broadcast %7 : vector<2x1x128xf32> to vector<2x4x128xf32>
    %18 = arith.subf %3, %17 : vector<2x4x128xf32>
    %cst_8 = arith.constant 9.99999974E-6 : f32
    %19 = vector.broadcast %cst_8 : f32 to vector<2x1x128xf32>
    %20 = arith.addf %16, %19 : vector<2x1x128xf32>
    %21 = math.rsqrt %20 : vector<2x1x128xf32>
    %22 = vector.broadcast %21 : vector<2x1x128xf32> to vector<2x4x128xf32>
    %23 = arith.mulf %18, %22 : vector<2x4x128xf32>
    %cst_9 = arith.constant 0.000000e+00 : f32
    %24 = vector.broadcast %cst_9 : f32 to vector<2x4x128xf32>
    %25 = arith.maximumf %23, %24 : vector<2x4x128xf32>
    %c0_10 = arith.constant 0 : index
    %c0_11 = arith.constant 0 : index
    %26 = vector.load %arg3[%c0_10, %c0_11] : memref<1x32xf32, #tpu.memory_space<vmem>>, vector<1x32xf32>
    %27 = vector.extract_strided_slice %25 {offsets = [0, 0, 0], sizes = [2, 1, 128], strides = [1, 1, 1]} : vector<2x4x128xf32> to vector<2x1x128xf32>
    %28 = vector.shape_cast %27 : vector<2x1x128xf32> to vector<2x128xf32>
    %c0_12 = arith.constant 0 : index
    %c0_13 = arith.constant 0 : index
    %c0_14 = arith.constant 0 : index
    %29 = vector.load %arg2[%c0_12, %c0_13, %c0_14] : memref<4x128x32xf32, #tpu.memory_space<vmem>>, vector<1x128x32xf32>
    %30 = vector.shape_cast %29 : vector<1x128x32xf32> to vector<128x32xf32>
    %cst_15 = arith.constant dense<0.000000e+00> : vector<2x32xf32>
    %31 = tpu.matmul %28, %30, %cst_15 {dimension_numbers = #tpu.dot_dimension_numbers<[1], [0], [0], [1], [0, 0, 1, 1], [], []>} : vector<2x128xf32>, vector<128x32xf32>, vector<2x32xf32> -> vector<2x32xf32>
    %32 = vector.broadcast %26 : vector<1x32xf32> to vector<2x32xf32>
    %33 = arith.addf %32, %31 : vector<2x32xf32>
    %34 = vector.extract_strided_slice %25 {offsets = [0, 1, 0], sizes = [2, 1, 128], strides = [1, 1, 1]} : vector<2x4x128xf32> to vector<2x1x128xf32>
    %35 = vector.shape_cast %34 : vector<2x1x128xf32> to vector<2x128xf32>
    %c1 = arith.constant 1 : index
    %c0_16 = arith.constant 0 : index
    %c0_17 = arith.constant 0 : index
    %36 = vector.load %arg2[%c1, %c0_16, %c0_17] : memref<4x128x32xf32, #tpu.memory_space<vmem>>, vector<1x128x32xf32>
    %37 = vector.shape_cast %36 : vector<1x128x32xf32> to vector<128x32xf32>
    %cst_18 = arith.constant dense<0.000000e+00> : vector<2x32xf32>
    %38 = tpu.matmul %35, %37, %cst_18 {dimension_numbers = #tpu.dot_dimension_numbers<[1], [0], [0], [1], [0, 0, 1, 1], [], []>} : vector<2x128xf32>, vector<128x32xf32>, vector<2x32xf32> -> vector<2x32xf32>
    %39 = arith.addf %33, %38 : vector<2x32xf32>
    %40 = vector.extract_strided_slice %25 {offsets = [0, 2, 0], sizes = [2, 1, 128], strides = [1, 1, 1]} : vector<2x4x128xf32> to vector<2x1x128xf32>
    %41 = vector.shape_cast %40 : vector<2x1x128xf32> to vector<2x128xf32>
    %c2 = arith.constant 2 : index
    %c0_19 = arith.constant 0 : index
    %c0_20 = arith.constant 0 : index
    %42 = vector.load %arg2[%c2, %c0_19, %c0_20] : memref<4x128x32xf32, #tpu.memory_space<vmem>>, vector<1x128x32xf32>
    %43 = vector.shape_cast %42 : vector<1x128x32xf32> to vector<128x32xf32>
    %cst_21 = arith.constant dense<0.000000e+00> : vector<2x32xf32>
    %44 = tpu.matmul %41, %43, %cst_21 {dimension_numbers = #tpu.dot_dimension_numbers<[1], [0], [0], [1], [0, 0, 1, 1], [], []>} : vector<2x128xf32>, vector<128x32xf32>, vector<2x32xf32> -> vector<2x32xf32>
    %45 = arith.addf %39, %44 : vector<2x32xf32>
    %46 = vector.extract_strided_slice %25 {offsets = [0, 3, 0], sizes = [2, 1, 128], strides = [1, 1, 1]} : vector<2x4x128xf32> to vector<2x1x128xf32>
    %47 = vector.shape_cast %46 : vector<2x1x128xf32> to vector<2x128xf32>
    %c3 = arith.constant 3 : index
    %c0_22 = arith.constant 0 : index
    %c0_23 = arith.constant 0 : index
    %48 = vector.load %arg2[%c3, %c0_22, %c0_23] : memref<4x128x32xf32, #tpu.memory_space<vmem>>, vector<1x128x32xf32>
    %49 = vector.shape_cast %48 : vector<1x128x32xf32> to vector<128x32xf32>
    %cst_24 = arith.constant dense<0.000000e+00> : vector<2x32xf32>
    %50 = tpu.matmul %47, %49, %cst_24 {dimension_numbers = #tpu.dot_dimension_numbers<[1], [0], [0], [1], [0, 0, 1, 1], [], []>} : vector<2x128xf32>, vector<128x32xf32>, vector<2x32xf32> -> vector<2x32xf32>
    %51 = arith.addf %45, %50 : vector<2x32xf32>
    %c0_25 = arith.constant 0 : index
    %c0_26 = arith.constant 0 : index
    %52 = vector.load %arg4[%c0_25, %c0_26] : memref<2x32xf32, #tpu.memory_space<vmem>>, vector<2x32xf32>
    tpu.vector_store %arg4[%c0_25, %c0_26], %51 {strides = array<i32>} : memref<2x32xf32, #tpu.memory_space<vmem>>, vector<2x32xf32>,
    return
  }
}

</mosaic_0001>

<llo_original>
// kernel: encoder_forward.4
$region0: #{encoder_forward.4}
  #allocation0 [shape = 'u32[]', space=smem, size = 0x4, offset = 0x4, fixed_abs, tag = 'smem constant byte address 0x4 - core index']
  #allocation1 [shape = 'u32[144,128]{1,0:T(1,128)}', space=vmem, size = 0x12000, scoped, tag = 'internal scratch']
  %s0 = inlined_call_operand.vmem [shape: f32[2,75,841], index: 0, kind: input, shape index: {}]
  %s1 = inlined_call_operand.vmem [shape: f32[16,75], index: 1, kind: input, shape index: {}]
  %s2 = inlined_call_operand.vmem [shape: f32[2,16,841], index: 2, kind: output, shape index: {}]
  %s3 = sld [smem:[#allocation0]]
  $region41: #{encoder_forward.4} parent=0
    _
  %s5 = ssub.s32 1, %s3
  %s6 = scalar_select 0, %s5, %s3
  loop: start=0, step=1, limit=4
  $region2: #{encoder_forward.4} parent=0 // loop_pre_header
    _
  $region3: #{encoder_forward.4} parent=0 // loop_header
    %s8 = sphi 0, %s12
    %p9 = scmp.ge.s32.totalorder %s8, 4
    %s18 = sphi 0, %s20
    %s21 = sphi 0, %s18
    %s22 = sphi 0, %s21
    %s38 = sphi 0, %s22
    %s42 = sphi 0, %s42
    %s44 = sphi 0, %s42
    %s45 = sphi 0, %s44
    %s59 = sphi 0, %s45
    %s65 = sphi 0, %s67
    %s68 = sphi 0, %s65
    %s69 = sphi 0, %s68
    %s85 = sphi 0, %s69
  $region4: #{encoder_forward.4} parent=0 // loop_header_branch
    %11 = sbr.rel (%p9) target = $region8
  $region5: #{encoder_forward.4} parent=0 // loop_body
    %s13 = ssub.s32 %s8, 1
    %s14 = ssub.s32 %s8, 2
    %s15 = sadd.s32 %s8, 1
    %s16 = ssub.s32 %s8, %s15
    %p17 = scmp.eq.s32.totalorder %s16, 0
    %s19 = sadd.s32 %s18, 1
    %s20 = scalar_select %p17, %s18, %s19
    %p23 = pneg %p17
    %p24 = scmp.eq.s32.totalorder %s8, 1
    %p25 = por %p23, %p24
    %p26 = scmp.ne.s32.totalorder %s18, %s21
    %p27 = scmp.eq.s32.totalorder %s8, 0
    %p28 = por %p26, %p27
    %p29 = scmp.ne.s32.totalorder %s18, %s21
    %p30 = scmp.eq.s32.totalorder %s13, 1
    %p31 = por %p29, %p30
    %p32 = scmp.ne.s32.totalorder %s21, %s22
    %p33 = scmp.eq.s32.totalorder %s13, 0
    %p34 = por %p32, %p33
    %p35 = scmp.ne.s32.totalorder %s21, %s22
    %p36 = scmp.eq.s32.totalorder %s14, 1
    %p37 = por %p35, %p36
    %p39 = scmp.ne.s32.totalorder %s22, %s38
    %p40 = scmp.eq.s32.totalorder %s14, 0
    %p41 = por %p39, %p40
    %s43 = sadd.s32 %s42, 1
    %p46 = scmp.eq.s32.totalorder %s8, 1
    %p47 = scmp.ne.s32.totalorder %s42, %s44
    %p48 = scmp.eq.s32.totalorder %s8, 0
    %p49 = por %p47, %p48
    %p50 = scmp.ne.s32.totalorder %s42, %s44
    %p51 = scmp.eq.s32.totalorder %s13, 1
    %p52 = por %p50, %p51
    %p53 = scmp.ne.s32.totalorder %s44, %s45
    %p54 = scmp.eq.s32.totalorder %s13, 0
    %p55 = por %p53, %p54
    %p56 = scmp.ne.s32.totalorder %s44, %s45
    %p57 = scmp.eq.s32.totalorder %s14, 1
    %p58 = por %p56, %p57
    %p60 = scmp.ne.s32.totalorder %s45, %s59
    %p61 = scmp.eq.s32.totalorder %s14, 0
    %p62 = por %p60, %p61
    %s63 = ssub.s32 %s8, %s15
    %p64 = scmp.eq.s32.totalorder %s63, 0
    %s66 = sadd.s32 %s65, 1
    %s67 = scalar_select %p64, %s65, %s66
    %p70 = pneg %p64
    %p71 = scmp.eq.s32.totalorder %s8, 1
    %p72 = por %p70, %p71
    %p73 = scmp.ne.s32.totalorder %s65, %s68
    %p74 = scmp.eq.s32.totalorder %s8, 0
    %p75 = por %p73, %p74
    %p76 = scmp.ne.s32.totalorder %s65, %s68
    %p77 = scmp.eq.s32.totalorder %s13, 1
    %p78 = por %p76, %p77
    %p79 = scmp.ne.s32.totalorder %s68, %s69
    %p80 = scmp.eq.s32.totalorder %s13, 0
    %p81 = por %p79, %p80
    %p82 = scmp.ne.s32.totalorder %s68, %s69
    %p83 = scmp.eq.s32.totalorder %s14, 1
    %p84 = por %p82, %p83
    %p86 = scmp.ne.s32.totalorder %s69, %s85
    %p87 = scmp.eq.s32.totalorder %s14, 0
    %p88 = por %p86, %p87
    %p89 = scmp.le.s32.totalorder 1, %s8
    %p90 = scmp.lt.s32.totalorder %s8, 3
    %p91 = pnand %p89, %p90
    %p92 = pneg %p91
    // Predicated region
    $region9: #{encoder_forward.4} parent=5 // pred_check
      _
    $region10: #{encoder_forward.4} parent=5 // pred_check_branch
      %94 = sbr.rel (%p91) target = $region12
    $region11: #{encoder_forward.4} parent=5 // pred_region
      %s95 = ssub.s32 %s8, 1
      // Predicated region
      $region13: #{encoder_forward.4} parent=11 // pred_check
        %p96 = pneg %p55
      $region14: #{encoder_forward.4} parent=11 // pred_check_branch
        %98 = sbr.rel (%p96) target = $region16
      $region15: #{encoder_forward.4} parent=11 // pred_region
        _
      $region16: #{encoder_forward.4} parent=11 // pred_fallthru
        _
    $region12: #{encoder_forward.4} parent=5 // pred_fallthru
      _
    %p99 = scmp.lt.s32.totalorder %s8, 2
    // Predicated region
    $region17: #{encoder_forward.4} parent=5 // pred_check
      %p100 = pneg %p99
    $region18: #{encoder_forward.4} parent=5 // pred_check_branch
      %102 = sbr.rel (%p100) target = $region20
    $region19: #{encoder_forward.4} parent=5 // pred_region
      // Predicated region
      $region21: #{encoder_forward.4} parent=19 // pred_check
        %p103 = pneg %p28
      $region22: #{encoder_forward.4} parent=19 // pred_check_branch
        %105 = sbr.rel (%p103) target = $region24
      $region23: #{encoder_forward.4} parent=19 // pred_region
        %p106 = scmp.lt.s32.totalorder %s8, 1
        %s107 = scalar_select %p106, %s8, 1
        %s108 = smul.addr %s107, 70
        %s109 = smul.addr %s108, 8
        %s110 = scalar_lea.vmem %s0, %s109
      $region24: #{encoder_forward.4} parent=19 // pred_fallthru
        _
    $region20: #{encoder_forward.4} parent=5 // pred_fallthru
      _
    %p111 = scmp.le.s32.totalorder 1, %s8
    %p112 = scmp.lt.s32.totalorder %s8, 3
    %p113 = pnand %p111, %p112
    %p114 = pneg %p113
    // Predicated region
    $region25: #{encoder_forward.4} parent=5 // pred_check
      _
    $region26: #{encoder_forward.4} parent=5 // pred_check_branch
      %116 = sbr.rel (%p113) target = $region28
    $region27: #{encoder_forward.4} parent=5 // pred_region
      %s117 = ssub.s32 %s8, 1
      %p118 = scmp.lt.s32.totalorder %s13, 1
      %s119 = scalar_select %p118, %s13, 1
      %s120 = smul.addr %s119, 70
      %s121 = smul.addr %s120, 8
      %s122 = scalar_lea.vmem %s0, %s121
      %p123 = pneg %p34
      %p124 = pneg %p31
      %p125 = pneg %p55
      %p126 = pneg %p52
      %p127 = pneg %p81
      %p128 = pneg %p78
      %p129 = scmp.lt.s32.totalorder %s13, 1
      %s130 = scalar_select %p129, %s13, 1
      %s131 = smul.addr %s130, 14
      %s132 = smul.addr %s131, 8
      %s133 = scalar_lea.vmem %s2, %s132
      %p134 = scmp.lt.s32.totalorder %s13, 1
      %s135 = scalar_select %p134, %s13, 1
      %s136 = smul.addr %s135, 70
      %s137 = smul.addr %s136, 8
      %s138 = scalar_lea.vmem %s0, %s137
      %p139 = scmp.lt.s32.totalorder %s13, 1
      %s140 = scalar_select %p139, %s13, 1
      %s141 = smul.addr %s140, 14
      %s142 = smul.addr %s141, 8
      %s143 = scalar_lea.vmem %s2, %s142
      %v144 = vld [vmem:[%s1] sm:$0xff]
      %v145 = vld [vmem:[%s1 + $0x8] sm:$0xff]
      %v146 = vld [vmem:[%s138] sm:$0xff]
      %v147 = vld [vmem:[%s138 + $0x8] sm:$0xff]
      %v148 = vld [vmem:[%s138 + $0x10] sm:$0xff]
      %v149 = vld [vmem:[%s138 + $0x18] sm:$0xff]
      %v150 = vld [vmem:[%s138 + $0x20] sm:$0xff]
      %v151 = vld [vmem:[%s138 + $0x28] sm:$0xff]
      %v152 = vld [vmem:[%s138 + $0x30] sm:$0xff]
      %v153 = vld [vmem:[%s138 + $0x38] sm:$0xff]
      %v154 = vld [vmem:[%s138 + $0x40] sm:$0xff]
      %v155 = vld [vmem:[%s138 + $0x48] sm:$0xff]
      %v156 = vld [vmem:[%s138 + $0x50] sm:$0xff]
      %v157 = vld [vmem:[%s138 + $0x58] sm:$0xff]
      %v158 = vld [vmem:[%s138 + $0x60] sm:$0xff]
      %v159 = vld [vmem:[%s138 + $0x68] sm:$0xff]
      %v160 = vld [vmem:[%s138 + $0x70] sm:$0xff]
      %v161 = vld [vmem:[%s138 + $0x78] sm:$0xff]
      %v162 = vld [vmem:[%s138 + $0x80] sm:$0xff]
      %v163 = vld [vmem:[%s138 + $0x88] sm:$0xff]
      %v164 = vld [vmem:[%s138 + $0x90] sm:$0xff]
      %v165 = vld [vmem:[%s138 + $0x98] sm:$0xff]
      %v166 = vld [vmem:[%s138 + $0xa0] sm:$0xff]
      %v167 = vld [vmem:[%s138 + $0xa8] sm:$0xff]
      %v168 = vld [vmem:[%s138 + $0xb0] sm:$0xff]
      %v169 = vld [vmem:[%s138 + $0xb8] sm:$0xff]
      %v170 = vld [vmem:[%s138 + $0xc0] sm:$0xff]
      %v171 = vld [vmem:[%s138 + $0xc8] sm:$0xff]
      %v172 = vld [vmem:[%s138 + $0xd0] sm:$0xff]
      %v173 = vld [vmem:[%s138 + $0xd8] sm:$0xff]
      %v174 = vld [vmem:[%s138 + $0xe0] sm:$0xff]
      %v175 = vld [vmem:[%s138 + $0xe8] sm:$0xff]
      %v176 = vld [vmem:[%s138 + $0xf0] sm:$0xff]
      %v177 = vld [vmem:[%s138 + $0xf8] sm:$0xff]
      %v178 = vld [vmem:[%s138 + $0x100] sm:$0xff]
      %v179 = vld [vmem:[%s138 + $0x108] sm:$0xff]
      %v180 = vld [vmem:[%s138 + $0x110] sm:$0xff]
      %v181 = vld [vmem:[%s138 + $0x118] sm:$0xff]
      %v182 = vld [vmem:[%s138 + $0x120] sm:$0xff]
      %v183 = vld [vmem:[%s138 + $0x128] sm:$0xff]
      %v184 = vld [vmem:[%s138 + $0x130] sm:$0xff]
      %v185 = vld [vmem:[%s138 + $0x138] sm:$0xff]
      %v186 = vld [vmem:[%s138 + $0x140] sm:$0xff]
      %v187 = vld [vmem:[%s138 + $0x148] sm:$0xff]
      %v188 = vld [vmem:[%s138 + $0x150] sm:$0xff]
      %v189 = vld [vmem:[%s138 + $0x158] sm:$0xff]
      %v190 = vld [vmem:[%s138 + $0x160] sm:$0xff]
      %v191 = vld [vmem:[%s138 + $0x168] sm:$0xff]
      %v192 = vld [vmem:[%s138 + $0x170] sm:$0xff]
      %v193 = vld [vmem:[%s138 + $0x178] sm:$0xff]
      %v194 = vld [vmem:[%s138 + $0x180] sm:$0xff]
      %v195 = vld [vmem:[%s138 + $0x188] sm:$0xff]
      %v196 = vld [vmem:[%s138 + $0x190] sm:$0xff]
      %v197 = vld [vmem:[%s138 + $0x198] sm:$0xff]
      %v198 = vld [vmem:[%s138 + $0x1a0] sm:$0xff]
      %v199 = vld [vmem:[%s138 + $0x1a8] sm:$0xff]
      %v200 = vld [vmem:[%s138 + $0x1b0] sm:$0xff]
      %v201 = vld [vmem:[%s138 + $0x1b8] sm:$0xff]
      %v202 = vld [vmem:[%s138 + $0x1c0] sm:$0xff]
      %v203 = vld [vmem:[%s138 + $0x1c8] sm:$0xff]
      %v204 = vld [vmem:[%s138 + $0x1d0] sm:$0xff]
      %v205 = vld [vmem:[%s138 + $0x1d8] sm:$0xff]
      %v206 = vld [vmem:[%s138 + $0x1e0] sm:$0xff]
      %v207 = vld [vmem:[%s138 + $0x1e8] sm:$0xff]
      %v208 = vld [vmem:[%s138 + $0x1f0] sm:$0xff]
      %v209 = vld [vmem:[%s138 + $0x1f8] sm:$0x7]
      %v210 = vld [vmem:[%s138 + $0x200] sm:$0x7]
      %v211 = vld [vmem:[%s138 + $0x208] sm:$0x7]
      %v212 = vld [vmem:[%s138 + $0x210] sm:$0x7]
      %v213 = vld [vmem:[%s138 + $0x218] sm:$0x7]
      %v214 = vld [vmem:[%s138 + $0x220] sm:$0x7]
      %v215 = vld [vmem:[%s138 + $0x228] sm:$0x7]
      %vm216 = vcmask 613376
      %v218 = vsel %vm216, %v144, 0
      %v221 = vsel %vm216, %v145, 0
      %vm223 = vcmask 1042432
      %v225 = vsel %vm223, %v209, 0
      %v228 = vsel %vm223, %v210, 0
      %v231 = vsel %vm223, %v211, 0
      %v234 = vsel %vm223, %v212, 0
      %v237 = vsel %vm223, %v213, 0
      %v240 = vsel %vm223, %v214, 0
      %v243 = vsel %vm223, %v215, 0
      %245 = vmatprep.subr.mxu0 %v147
      %246 = vmatpush1.msra.mxu0 %v146
      %247 = vmatprep.subr.mxu0 %v154
      %248 = vmatpush1.msra.mxu0 %v153
      %249 = vmatprep.subr.mxu0 %v161
      %250 = vmatpush1.msra.mxu0 %v160
      %251 = vmatprep.subr.mxu0 %v168
      %252 = vmatpush1.msra.mxu0 %v167
      %253 = vmatprep.subr.mxu0 %v175
      %254 = vmatpush1.msra.mxu0 %v174
      %255 = vmatprep.subr.mxu0 %v182
      %256 = vmatpush1.msra.mxu0 %v181
      %257 = vmatprep.subr.mxu0 %v189
      %258 = vmatpush1.msra.mxu0 %v188
      %259 = vmatprep.subr.mxu0 %v196
      %260 = vmatpush1.msra.mxu0 %v195
      %261 = vmatprep.subr.mxu0 %v203
      %262 = vmatpush1.msra.mxu0 %v202
      %263 = vmatprep.subr.mxu0 %v228
      %264 = vmatpush1.msra.mxu0 %v225
      %265 = vmatprep.subr.mxu0 0.0
      %266 = vmatpush1.msra.mxu0 0.0
      %267 = vmatprep.subr.mxu0 0.0
      %268 = vmatpush1.msra.mxu0 0.0
      %269 = vmatprep.subr.mxu0 0.0
      %270 = vmatpush1.msra.mxu0 0.0
      %271 = vmatprep.subr.mxu0 0.0
      %272 = vmatpush1.msra.mxu0 0.0
      %273 = vmatprep.subr.mxu0 0.0
      %274 = vmatpush1.msra.mxu0 0.0
      %275 = vmatprep.subr.mxu0 0.0
      %276 = vmatpush1.msra.mxu0 0.0
      %277 = vmatprep.subr.mxu0 0.0
      %278 = vmatpush1.msra.mxu0 0.0
      %279 = vmatprep.subr.mxu0 0.0
      %280 = vmatpush1.msra.mxu0 0.0
      %281 = vmatprep.subr.mxu0 0.0
      %282 = vmatpush1.msra.mxu0 0.0
      %283 = vmatprep.subr.mxu0 0.0
      %284 = vmatpush1.msra.mxu0 0.0
      %285 = vmatprep.subr.mxu0 0.0
      %286 = vmatpush1.msra.mxu0 0.0
      %287 = vmatprep.subr.mxu0 0.0
      %288 = vmatpush1.msra.mxu0 0.0
      %289 = vmatprep.subr.mxu0 0.0
      %290 = vmatpush1.msra.mxu0 0.0
      %291 = vmatprep.subr.mxu0 0.0
      %292 = vmatpush1.msra.mxu0 0.0
      %293 = vmatprep.subr.mxu0 0.0
      %294 = vmatpush1.msra.mxu0 0.0
      %295 = vmatprep.subr.mxu0 0.0
      %296 = vmatpush1.msra.mxu0 0.0
      %297 = vmatprep.subr.mxu0 0.0
      %298 = vmatpush1.msra.mxu0 0.0
      %299 = vmatprep.subr.mxu0 0.0
      %300 = vmatpush1.msra.mxu0 0.0
      %301 = vmatprep.subr.mxu0 0.0
      %302 = vmatpush1.msra.mxu0 0.0
      %303 = vmatprep.subr.mxu0 0.0
      %304 = vmatpush1.msra.mxu0 0.0
      %305 = vmatprep.subr.mxu0 0.0
      %306 = vmatpush1.msra.mxu0 0.0
      %307 = vmatprep.subr.mxu0 0.0
      %308 = vmatpush1.msra.mxu0 0.0
      %309 = vmatprep.mubr.f32.mxu0 0.0
      %310 = vmatmul.mubr.f32.gmra.mrb[0].mxu0 %v218
      %v311 = vpop.f32.mrb[0].mxu0
      %v312 = vadd.f32 0.0, %v311
      %v313 = vpop.f32.mrb[0].mxu0
      %v314 = vadd.f32 0.0, %v313
      %315 = vmatprep.mubr.f32.mxu0 0.0
      %316 = vmatmul.mubr.f32.gmra.mrb[0].mxu0 %v221
      %v317 = vpop.f32.mrb[0].mxu0
      %v318 = vadd.f32 0.0, %v317
      %v319 = vpop.f32.mrb[0].mxu0
      %v320 = vadd.f32 0.0, %v319
      %321 = vdwg.mxu0
      %322 = vmatprep.subr.mxu0 %v149
      %323 = vmatpush1.msra.mxu0 %v148
      %324 = vmatprep.subr.mxu0 %v156
      %325 = vmatpush1.msra.mxu0 %v155
      %326 = vmatprep.subr.mxu0 %v163
      %327 = vmatpush1.msra.mxu0 %v162
      %328 = vmatprep.subr.mxu0 %v170
      %329 = vmatpush1.msra.mxu0 %v169
      %330 = vmatprep.subr.mxu0 %v177
      %331 = vmatpush1.msra.mxu0 %v176
      %332 = vmatprep.subr.mxu0 %v184
      %333 = vmatpush1.msra.mxu0 %v183
      %334 = vmatprep.subr.mxu0 %v191
      %335 = vmatpush1.msra.mxu0 %v190
      %336 = vmatprep.subr.mxu0 %v198
      %337 = vmatpush1.msra.mxu0 %v197
      %338 = vmatprep.subr.mxu0 %v205
      %339 = vmatpush1.msra.mxu0 %v204
      %340 = vmatprep.subr.mxu0 %v234
      %341 = vmatpush1.msra.mxu0 %v231
      %342 = vmatprep.subr.mxu0 0.0
      %343 = vmatpush1.msra.mxu0 0.0
      %344 = vmatprep.subr.mxu0 0.0
      %345 = vmatpush1.msra.mxu0 0.0
      %346 = vmatprep.subr.mxu0 0.0
      %347 = vmatpush1.msra.mxu0 0.0
      %348 = vmatprep.subr.mxu0 0.0
      %349 = vmatpush1.msra.mxu0 0.0
      %350 = vmatprep.subr.mxu0 0.0
      %351 = vmatpush1.msra.mxu0 0.0
      %352 = vmatprep.subr.mxu0 0.0
      %353 = vmatpush1.msra.mxu0 0.0
      %354 = vmatprep.subr.mxu0 0.0
      %355 = vmatpush1.msra.mxu0 0.0
      %356 = vmatprep.subr.mxu0 0.0
      %357 = vmatpush1.msra.mxu0 0.0
      %358 = vmatprep.subr.mxu0 0.0
      %359 = vmatpush1.msra.mxu0 0.0
      %360 = vmatprep.subr.mxu0 0.0
      %361 = vmatpush1.msra.mxu0 0.0
      %362 = vmatprep.subr.mxu0 0.0
      %363 = vmatpush1.msra.mxu0 0.0
      %364 = vmatprep.subr.mxu0 0.0
      %365 = vmatpush1.msra.mxu0 0.0
      %366 = vmatprep.subr.mxu0 0.0
      %367 = vmatpush1.msra.mxu0 0.0
      %368 = vmatprep.subr.mxu0 0.0
      %369 = vmatpush1.msra.mxu0 0.0
      %370 = vmatprep.subr.mxu0 0.0
      %371 = vmatpush1.msra.mxu0 0.0
      %372 = vmatprep.subr.mxu0 0.0
      %373 = vmatpush1.msra.mxu0 0.0
      %374 = vmatprep.subr.mxu0 0.0
      %375 = vmatpush1.msra.mxu0 0.0
      %376 = vmatprep.subr.mxu0 0.0
      %377 = vmatpush1.msra.mxu0 0.0
      %378 = vmatprep.subr.mxu0 0.0
      %379 = vmatpush1.msra.mxu0 0.0
      %380 = vmatprep.subr.mxu0 0.0
      %381 = vmatpush1.msra.mxu0 0.0
      %382 = vmatprep.subr.mxu0 0.0
      %383 = vmatpush1.msra.mxu0 0.0
      %384 = vmatprep.subr.mxu0 0.0
      %385 = vmatpush1.msra.mxu0 0.0
      %386 = vmatprep.mubr.f32.mxu0 0.0
      %387 = vmatmul.mubr.f32.gmra.mrb[0].mxu0 %v218
      %v388 = vpop.f32.mrb[0].mxu0
      %v389 = vadd.f32 0.0, %v388
      %v390 = vpop.f32.mrb[0].mxu0
      %v391 = vadd.f32 0.0, %v390
      %392 = vmatprep.mubr.f32.mxu0 0.0
      %393 = vmatmul.mubr.f32.gmra.mrb[0].mxu0 %v221
      %v394 = vpop.f32.mrb[0].mxu0
      %v395 = vadd.f32 0.0, %v394
      %v396 = vpop.f32.mrb[0].mxu0
      %v397 = vadd.f32 0.0, %v396
      %398 = vdwg.mxu0
      %399 = vmatprep.subr.mxu0 %v151
      %400 = vmatpush1.msra.mxu0 %v150
      %401 = vmatprep.subr.mxu0 %v158
      %402 = vmatpush1.msra.mxu0 %v157
      %403 = vmatprep.subr.mxu0 %v165
      %404 = vmatpush1.msra.mxu0 %v164
      %405 = vmatprep.subr.mxu0 %v172
      %406 = vmatpush1.msra.mxu0 %v171
      %407 = vmatprep.subr.mxu0 %v179
      %408 = vmatpush1.msra.mxu0 %v178
      %409 = vmatprep.subr.mxu0 %v186
      %410 = vmatpush1.msra.mxu0 %v185
      %411 = vmatprep.subr.mxu0 %v193
      %412 = vmatpush1.msra.mxu0 %v192
      %413 = vmatprep.subr.mxu0 %v200
      %414 = vmatpush1.msra.mxu0 %v199
      %415 = vmatprep.subr.mxu0 %v207
      %416 = vmatpush1.msra.mxu0 %v206
      %417 = vmatprep.subr.mxu0 %v240
      %418 = vmatpush1.msra.mxu0 %v237
      %419 = vmatprep.subr.mxu0 0.0
      %420 = vmatpush1.msra.mxu0 0.0
      %421 = vmatprep.subr.mxu0 0.0
      %422 = vmatpush1.msra.mxu0 0.0
      %423 = vmatprep.subr.mxu0 0.0
      %424 = vmatpush1.msra.mxu0 0.0
      %425 = vmatprep.subr.mxu0 0.0
      %426 = vmatpush1.msra.mxu0 0.0
      %427 = vmatprep.subr.mxu0 0.0
      %428 = vmatpush1.msra.mxu0 0.0
      %429 = vmatprep.subr.mxu0 0.0
      %430 = vmatpush1.msra.mxu0 0.0
      %431 = vmatprep.subr.mxu0 0.0
      %432 = vmatpush1.msra.mxu0 0.0
      %433 = vmatprep.subr.mxu0 0.0
      %434 = vmatpush1.msra.mxu0 0.0
      %435 = vmatprep.subr.mxu0 0.0
      %436 = vmatpush1.msra.mxu0 0.0
      %437 = vmatprep.subr.mxu0 0.0
      %438 = vmatpush1.msra.mxu0 0.0
      %439 = vmatprep.subr.mxu0 0.0
      %440 = vmatpush1.msra.mxu0 0.0
      %441 = vmatprep.subr.mxu0 0.0
      %442 = vmatpush1.msra.mxu0 0.0
      %443 = vmatprep.subr.mxu0 0.0
      %444 = vmatpush1.msra.mxu0 0.0
      %445 = vmatprep.subr.mxu0 0.0
      %446 = vmatpush1.msra.mxu0 0.0
      %447 = vmatprep.subr.mxu0 0.0
      %448 = vmatpush1.msra.mxu0 0.0
      %449 = vmatprep.subr.mxu0 0.0
      %450 = vmatpush1.msra.mxu0 0.0
      %451 = vmatprep.subr.mxu0 0.0
      %452 = vmatpush1.msra.mxu0 0.0
      %453 = vmatprep.subr.mxu0 0.0
      %454 = vmatpush1.msra.mxu0 0.0
      %455 = vmatprep.subr.mxu0 0.0
      %456 = vmatpush1.msra.mxu0 0.0
      %457 = vmatprep.subr.mxu0 0.0
      %458 = vmatpush1.msra.mxu0 0.0
      %459 = vmatprep.subr.mxu0 0.0
      %460 = vmatpush1.msra.mxu0 0.0
      %461 = vmatprep.subr.mxu0 0.0
      %462 = vmatpush1.msra.mxu0 0.0
      %463 = vmatprep.mubr.f32.mxu0 0.0
      %464 = vmatmul.mubr.f32.gmra.mrb[0].mxu0 %v218
      %v465 = vpop.f32.mrb[0].mxu0
      %v466 = vadd.f32 0.0, %v465
      %v467 = vpop.f32.mrb[0].mxu0
      %v468 = vadd.f32 0.0, %v467
      %469 = vmatprep.mubr.f32.mxu0 0.0
      %470 = vmatmul.mubr.f32.gmra.mrb[0].mxu0 %v221
      %v471 = vpop.f32.mrb[0].mxu0
      %v472 = vadd.f32 0.0, %v471
      %v473 = vpop.f32.mrb[0].mxu0
      %v474 = vadd.f32 0.0, %v473
      %475 = vdwg.mxu0
      %476 = vmatprep.subr.mxu0 0.0
      %477 = vmatpush1.msra.mxu0 %v152
      %478 = vmatprep.subr.mxu0 0.0
      %479 = vmatpush1.msra.mxu0 %v159
      %480 = vmatprep.subr.mxu0 0.0
      %481 = vmatpush1.msra.mxu0 %v166
      %482 = vmatprep.subr.mxu0 0.0
      %483 = vmatpush1.msra.mxu0 %v173
      %484 = vmatprep.subr.mxu0 0.0
      %485 = vmatpush1.msra.mxu0 %v180
      %486 = vmatprep.subr.mxu0 0.0
      %487 = vmatpush1.msra.mxu0 %v187
      %488 = vmatprep.subr.mxu0 0.0
      %489 = vmatpush1.msra.mxu0 %v194
      %490 = vmatprep.subr.mxu0 0.0
      %491 = vmatpush1.msra.mxu0 %v201
      %492 = vmatprep.subr.mxu0 0.0
      %493 = vmatpush1.msra.mxu0 %v208
      %494 = vmatprep.subr.mxu0 0.0
      %495 = vmatpush1.msra.mxu0 %v243
      %496 = vmatprep.subr.mxu0 0.0
      %497 = vmatpush1.msra.mxu0 0.0
      %498 = vmatprep.subr.mxu0 0.0
      %499 = vmatpush1.msra.mxu0 0.0
      %500 = vmatprep.subr.mxu0 0.0
      %501 = vmatpush1.msra.mxu0 0.0
      %502 = vmatprep.subr.mxu0 0.0
      %503 = vmatpush1.msra.mxu0 0.0
      %504 = vmatprep.subr.mxu0 0.0
      %505 = vmatpush1.msra.mxu0 0.0
      %506 = vmatprep.subr.mxu0 0.0
      %507 = vmatpush1.msra.mxu0 0.0
      %508 = vmatprep.subr.mxu0 0.0
      %509 = vmatpush1.msra.mxu0 0.0
      %510 = vmatprep.subr.mxu0 0.0
      %511 = vmatpush1.msra.mxu0 0.0
      %512 = vmatprep.subr.mxu0 0.0
      %513 = vmatpush1.msra.mxu0 0.0
      %514 = vmatprep.subr.mxu0 0.0
      %515 = vmatpush1.msra.mxu0 0.0
      %516 = vmatprep.subr.mxu0 0.0
      %517 = vmatpush1.msra.mxu0 0.0
      %518 = vmatprep.subr.mxu0 0.0
      %519 = vmatpush1.msra.mxu0 0.0
      %520 = vmatprep.subr.mxu0 0.0
      %521 = vmatpush1.msra.mxu0 0.0
      %522 = vmatprep.subr.mxu0 0.0
      %523 = vmatpush1.msra.mxu0 0.0
      %524 = vmatprep.subr.mxu0 0.0
      %525 = vmatpush1.msra.mxu0 0.0
      %526 = vmatprep.subr.mxu0 0.0
      %527 = vmatpush1.msra.mxu0 0.0
      %528 = vmatprep.subr.mxu0 0.0
      %529 = vmatpush1.msra.mxu0 0.0
      %530 = vmatprep.subr.mxu0 0.0
      %531 = vmatpush1.msra.mxu0 0.0
      %532 = vmatprep.subr.mxu0 0.0
      %533 = vmatpush1.msra.mxu0 0.0
      %534 = vmatprep.subr.mxu0 0.0
      %535 = vmatpush1.msra.mxu0 0.0
      %536 = vmatprep.subr.mxu0 0.0
      %537 = vmatpush1.msra.mxu0 0.0
      %538 = vmatprep.subr.mxu0 0.0
      %539 = vmatpush1.msra.mxu0 0.0
      %540 = vmatprep.mubr.f32.mxu0 0.0
      %541 = vmatmul.mubr.f32.gmra.mrb[0].mxu0 %v218
      %v542 = vpop.f32.mrb[0].mxu0
      %v543 = vadd.f32 0.0, %v542
      %v544 = vpop.f32.mrb[0].mxu0
      %545 = vmatprep.mubr.f32.mxu0 0.0
      %546 = vmatmul.mubr.f32.gmra.mrb[0].mxu0 %v221
      %v547 = vpop.f32.mrb[0].mxu0
      %v548 = vadd.f32 0.0, %v547
      %v549 = vpop.f32.mrb[0].mxu0
      %550 = vdwg.mxu0
      %v551 = vadd.f32 %v312, %v314
      %v552 = vadd.f32 %v551, %v389
      %v553 = vadd.f32 %v552, %v391
      %v554 = vadd.f32 %v553, %v466
      %v555 = vadd.f32 %v554, %v468
      %vm556 = vcmask 596992
      %v557 = vsel %vm556, %v543, 0.0
      %v558 = vadd.f32 %v555, %v557
      %559 = vadd.xlane.f32.xlu0 %v558
      %v560 = vpop.xlane.xlu0 %559
      %v561 = vadd.f32 %v318, %v320
      %v562 = vadd.f32 %v561, %v395
      %v563 = vadd.f32 %v562, %v397
      %v564 = vadd.f32 %v563, %v472
      %v565 = vadd.f32 %v564, %v474
      %v566 = vsel %vm556, %v548, 0.0
      %v567 = vadd.f32 %v565, %v566
      %568 = vadd.xlane.f32.xlu0 %v567
      %v569 = vpop.xlane.xlu0 %568
      %v570 = vrcp.pop 841.0
      %v571 = vmul.f32 %v560, %v570
      %v572 = vmul.f32 %v569, %v570
      %v573 = vmul.f32 %v312, %v312
      %v574 = vmul.f32 %v314, %v314
      %v575 = vmul.f32 %v389, %v389
      %v576 = vmul.f32 %v391, %v391
      %v577 = vmul.f32 %v466, %v466
      %v578 = vmul.f32 %v468, %v468
      %v579 = vmul.f32 %v543, %v543
      %v580 = vmul.f32 %v318, %v318
      %v581 = vmul.f32 %v320, %v320
      %v582 = vmul.f32 %v395, %v395
      %v583 = vmul.f32 %v397, %v397
      %v584 = vmul.f32 %v472, %v472
      %v585 = vmul.f32 %v474, %v474
      %v586 = vmul.f32 %v548, %v548
      %v587 = vadd.f32 %v573, %v574
      %v588 = vadd.f32 %v587, %v575
      %v589 = vadd.f32 %v588, %v576
      %v590 = vadd.f32 %v589, %v577
      %v591 = vadd.f32 %v590, %v578
      %v592 = vsel %vm556, %v579, 0.0
      %v593 = vadd.f32 %v591, %v592
      %594 = vadd.xlane.f32.xlu0 %v593
      %v595 = vpop.xlane.xlu0 %594
      %v596 = vadd.f32 %v580, %v581
      %v597 = vadd.f32 %v596, %v582
      %v598 = vadd.f32 %v597, %v583
      %v599 = vadd.f32 %v598, %v584
      %v600 = vadd.f32 %v599, %v585
      %v601 = vsel %vm556, %v586, 0.0
      %v602 = vadd.f32 %v600, %v601
      %603 = vadd.xlane.f32.xlu0 %v602
      %v604 = vpop.xlane.xlu0 %603
      %v605 = vmul.f32 %v595, %v570
      %v606 = vmul.f32 %v604, %v570
      %v607 = vmul.f32 %v571, %v571
      %v608 = vmul.f32 %v572, %v572
      %v609 = vsub.f32 %v605, %v607
      %v610 = vsub.f32 %v606, %v608
      %v611 = vmax.f32 %v609, 0.0
      %v612 = vmax.f32 %v610, 0.0
      %v613 = vsub.f32 %v312, %v571
      %v614 = vsub.f32 %v314, %v571
      %v615 = vsub.f32 %v389, %v571
      %v616 = vsub.f32 %v391, %v571
      %v617 = vsub.f32 %v466, %v571
      %v618 = vsub.f32 %v468, %v571
      %v619 = vsub.f32 %v543, %v571
      %v620 = vsub.f32 %v318, %v572
      %v621 = vsub.f32 %v320, %v572
      %v622 = vsub.f32 %v395, %v572
      %v623 = vsub.f32 %v397, %v572
      %v624 = vsub.f32 %v472, %v572
      %v625 = vsub.f32 %v474, %v572
      %v626 = vsub.f32 %v548, %v572
      %v627 = vadd.f32 %v611, 1e-05
      %v628 = vadd.f32 %v612, 1e-05
      %v629 = vrsqrt.pop %v627
      %v630 = vrsqrt.pop %v628
      %v631 = vmul.f32 %v613, %v629
      %v632 = vmul.f32 %v614, %v629
      %v633 = vmul.f32 %v615, %v629
      %v634 = vmul.f32 %v616, %v629
      %v635 = vmul.f32 %v617, %v629
      %v636 = vmul.f32 %v618, %v629
      %v637 = vmul.f32 %v619, %v629
      %v638 = vmul.f32 %v620, %v630
      %v639 = vmul.f32 %v621, %v630
      %v640 = vmul.f32 %v622, %v630
      %v641 = vmul.f32 %v623, %v630
      %v642 = vmul.f32 %v624, %v630
      %v643 = vmul.f32 %v625, %v630
      %v644 = vmul.f32 %v626, %v630
      %v645 = vmax.f32 %v631, 0.0
      %v646 = vmax.f32 %v632, 0.0
      %v647 = vmax.f32 %v633, 0.0
      %v648 = vmax.f32 %v634, 0.0
      %v649 = vmax.f32 %v635, 0.0
      %v650 = vmax.f32 %v636, 0.0
      %v651 = vmax.f32 %v637, 0.0
      %v652 = vmax.f32 %v638, 0.0
      %v653 = vmax.f32 %v639, 0.0
      %v654 = vmax.f32 %v640, 0.0
      %v655 = vmax.f32 %v641, 0.0
      %v656 = vmax.f32 %v642, 0.0
      %v657 = vmax.f32 %v643, 0.0
      %v658 = vmax.f32 %v644, 0.0
      %659 = vst [vmem:[%s143] sm:$0xff] %v645
      %660 = vst [vmem:[%s143 + $0x8] sm:$0xff] %v646
      %661 = vst [vmem:[%s143 + $0x10] sm:$0xff] %v647
      %662 = vst [vmem:[%s143 + $0x18] sm:$0xff] %v648
      %663 = vst [vmem:[%s143 + $0x20] sm:$0xff] %v649
      %664 = vst [vmem:[%s143 + $0x28] sm:$0xff] %v650
      %665 = vst.msk [vmem:[%s143 + $0x30] sm:$0xff] %vm556, %v651
      %666 = vst [vmem:[%s143 + $0x38] sm:$0xff] %v652
      %667 = vst [vmem:[%s143 + $0x40] sm:$0xff] %v653
      %668 = vst [vmem:[%s143 + $0x48] sm:$0xff] %v654
      %669 = vst [vmem:[%s143 + $0x50] sm:$0xff] %v655
      %670 = vst [vmem:[%s143 + $0x58] sm:$0xff] %v656
      %671 = vst [vmem:[%s143 + $0x60] sm:$0xff] %v657
      %672 = vst.msk [vmem:[%s143 + $0x68] sm:$0xff] %vm556, %v658
      %p673 = scmp.lt.s32.totalorder %s13, 1
      %s674 = scalar_select %p673, %s13, 1
      %s675 = smul.addr %s674, 14
      %s676 = smul.addr %s675, 8
      %s677 = scalar_lea.vmem %s2, %s676
      // Predicated region
      $region29: #{encoder_forward.4} parent=27 // pred_check
        %p678 = pneg %p78
      $region30: #{encoder_forward.4} parent=27 // pred_check_branch
        %680 = sbr.rel (%p678) target = $region32
      $region31: #{encoder_forward.4} parent=27 // pred_region
        _
      $region32: #{encoder_forward.4} parent=27 // pred_fallthru
        _
    $region28: #{encoder_forward.4} parent=5 // pred_fallthru
      _
    %p681 = scmp.le.s32.totalorder 2, %s8
    // Predicated region
    $region33: #{encoder_forward.4} parent=5 // pred_check
      %p682 = pneg %p681
    $region34: #{encoder_forward.4} parent=5 // pred_check_branch
      %684 = sbr.rel (%p682) target = $region36
    $region35: #{encoder_forward.4} parent=5 // pred_region
      %s685 = ssub.s32 %s8, 2
      // Predicated region
      $region37: #{encoder_forward.4} parent=35 // pred_check
        %p686 = pneg %p84
      $region38: #{encoder_forward.4} parent=35 // pred_check_branch
        %688 = sbr.rel (%p686) target = $region40
      $region39: #{encoder_forward.4} parent=35 // pred_region
        %p689 = scmp.lt.s32.totalorder %s14, 1
        %s690 = scalar_select %p689, %s14, 1
        %s691 = smul.addr %s690, 14
        %s692 = smul.addr %s691, 8
        %s693 = scalar_lea.vmem %s2, %s692
      $region40: #{encoder_forward.4} parent=35 // pred_fallthru
        _
    $region36: #{encoder_forward.4} parent=5 // pred_fallthru
      _
  $region6: #{encoder_forward.4} parent=0 // loop_footer
    %s12 = sadd.s32 1, %s8
  $region7: #{encoder_forward.4} parent=0 // loop_footer_branch
    %7 = sbr.rel target = $region3
  $region8: #{encoder_forward.4} parent=0 // loop_exit
    _

// kernel: encoder_forward.5
$region0: #{encoder_forward.5}
  #allocation0 [shape = 'u32[]', space=smem, size = 0x4, offset = 0x4, fixed_abs, tag = 'smem constant byte address 0x4 - core index']
  #allocation1 [shape = 'u32[144,128]{1,0:T(1,128)}', space=vmem, size = 0x12000, scoped, tag = 'internal scratch']
  %s0 = inlined_call_operand.vmem [shape: f32[2,400,196], index: 0, kind: input, shape index: {}]
  %s1 = inlined_call_operand.vmem [shape: f32[32,400], index: 1, kind: input, shape index: {}]
  %s2 = inlined_call_operand.vmem [shape: f32[2,32,196], index: 2, kind: output, shape index: {}]
  %s3 = sld [smem:[#allocation0]]
  $region41: #{encoder_forward.5} parent=0
    _
  %s5 = ssub.s32 1, %s3
  %s6 = scalar_select 0, %s5, %s3
  loop: start=0, step=1, limit=4
  $region2: #{encoder_forward.5} parent=0 // loop_pre_header
    _
  $region3: #{encoder_forward.5} parent=0 // loop_header
    %s8 = sphi 0, %s12
    %p9 = scmp.ge.s32.totalorder %s8, 4
    %s18 = sphi 0, %s20
    %s21 = sphi 0, %s18
    %s22 = sphi 0, %s21
    %s38 = sphi 0, %s22
    %s42 = sphi 0, %s42
    %s44 = sphi 0, %s42
    %s45 = sphi 0, %s44
    %s59 = sphi 0, %s45
    %s65 = sphi 0, %s67
    %s68 = sphi 0, %s65
    %s69 = sphi 0, %s68
    %s85 = sphi 0, %s69
  $region4: #{encoder_forward.5} parent=0 // loop_header_branch
    %11 = sbr.rel (%p9) target = $region8
  $region5: #{encoder_forward.5} parent=0 // loop_body
    %s13 = ssub.s32 %s8, 1
    %s14 = ssub.s32 %s8, 2
    %s15 = sadd.s32 %s8, 1
    %s16 = ssub.s32 %s8, %s15
    %p17 = scmp.eq.s32.totalorder %s16, 0
    %s19 = sadd.s32 %s18, 1
    %s20 = scalar_select %p17, %s18, %s19
    %p23 = pneg %p17
    %p24 = scmp.eq.s32.totalorder %s8, 1
    %p25 = por %p23, %p24
    %p26 = scmp.ne.s32.totalorder %s18, %s21
    %p27 = scmp.eq.s32.totalorder %s8, 0
    %p28 = por %p26, %p27
    %p29 = scmp.ne.s32.totalorder %s18, %s21
    %p30 = scmp.eq.s32.totalorder %s13, 1
    %p31 = por %p29, %p30
    %p32 = scmp.ne.s32.totalorder %s21, %s22
    %p33 = scmp.eq.s32.totalorder %s13, 0
    %p34 = por %p32, %p33
    %p35 = scmp.ne.s32.totalorder %s21, %s22
    %p36 = scmp.eq.s32.totalorder %s14, 1
    %p37 = por %p35, %p36
    %p39 = scmp.ne.s32.totalorder %s22, %s38
    %p40 = scmp.eq.s32.totalorder %s14, 0
    %p41 = por %p39, %p40
    %s43 = sadd.s32 %s42, 1
    %p46 = scmp.eq.s32.totalorder %s8, 1
    %p47 = scmp.ne.s32.totalorder %s42, %s44
    %p48 = scmp.eq.s32.totalorder %s8, 0
    %p49 = por %p47, %p48
    %p50 = scmp.ne.s32.totalorder %s42, %s44
    %p51 = scmp.eq.s32.totalorder %s13, 1
    %p52 = por %p50, %p51
    %p53 = scmp.ne.s32.totalorder %s44, %s45
    %p54 = scmp.eq.s32.totalorder %s13, 0
    %p55 = por %p53, %p54
    %p56 = scmp.ne.s32.totalorder %s44, %s45
    %p57 = scmp.eq.s32.totalorder %s14, 1
    %p58 = por %p56, %p57
    %p60 = scmp.ne.s32.totalorder %s45, %s59
    %p61 = scmp.eq.s32.totalorder %s14, 0
    %p62 = por %p60, %p61
    %s63 = ssub.s32 %s8, %s15
    %p64 = scmp.eq.s32.totalorder %s63, 0
    %s66 = sadd.s32 %s65, 1
    %s67 = scalar_select %p64, %s65, %s66
    %p70 = pneg %p64
    %p71 = scmp.eq.s32.totalorder %s8, 1
    %p72 = por %p70, %p71
    %p73 = scmp.ne.s32.totalorder %s65, %s68
    %p74 = scmp.eq.s32.totalorder %s8, 0
    %p75 = por %p73, %p74
    %p76 = scmp.ne.s32.totalorder %s65, %s68
    %p77 = scmp.eq.s32.totalorder %s13, 1
    %p78 = por %p76, %p77
    %p79 = scmp.ne.s32.totalorder %s68, %s69
    %p80 = scmp.eq.s32.totalorder %s13, 0
    %p81 = por %p79, %p80
    %p82 = scmp.ne.s32.totalorder %s68, %s69
    %p83 = scmp.eq.s32.totalorder %s14, 1
    %p84 = por %p82, %p83
    %p86 = scmp.ne.s32.totalorder %s69, %s85
    %p87 = scmp.eq.s32.totalorder %s14, 0
    %p88 = por %p86, %p87
    %p89 = scmp.le.s32.totalorder 1, %s8
    %p90 = scmp.lt.s32.totalorder %s8, 3
    %p91 = pnand %p89, %p90
    %p92 = pneg %p91
    // Predicated region
    $region9: #{encoder_forward.5} parent=5 // pred_check
      _
    $region10: #{encoder_forward.5} parent=5 // pred_check_branch
      %94 = sbr.rel (%p91) target = $region12
    $region11: #{encoder_forward.5} parent=5 // pred_region
      %s95 = ssub.s32 %s8, 1
      // Predicated region
      $region13: #{encoder_forward.5} parent=11 // pred_check
        %p96 = pneg %p55
      $region14: #{encoder_forward.5} parent=11 // pred_check_branch
        %98 = sbr.rel (%p96) target = $region16
      $region15: #{encoder_forward.5} parent=11 // pred_region
        _
      $region16: #{encoder_forward.5} parent=11 // pred_fallthru
        _
    $region12: #{encoder_forward.5} parent=5 // pred_fallthru
      _
    %p99 = scmp.lt.s32.totalorder %s8, 2
    // Predicated region
    $region17: #{encoder_forward.5} parent=5 // pred_check
      %p100 = pneg %p99
    $region18: #{encoder_forward.5} parent=5 // pred_check_branch
      %102 = sbr.rel (%p100) target = $region20
    $region19: #{encoder_forward.5} parent=5 // pred_region
      // Predicated region
      $region21: #{encoder_forward.5} parent=19 // pred_check
        %p103 = pneg %p28
      $region22: #{encoder_forward.5} parent=19 // pred_check_branch
        %105 = sbr.rel (%p103) target = $region24
      $region23: #{encoder_forward.5} parent=19 // pred_region
        %p106 = scmp.lt.s32.totalorder %s8, 1
        %s107 = scalar_select %p106, %s8, 1
        %s108 = smul.addr %s107, 100
        %s109 = smul.addr %s108, 8
        %s110 = scalar_lea.vmem %s0, %s109
      $region24: #{encoder_forward.5} parent=19 // pred_fallthru
        _
    $region20: #{encoder_forward.5} parent=5 // pred_fallthru
      _
    %p111 = scmp.le.s32.totalorder 1, %s8
    %p112 = scmp.lt.s32.totalorder %s8, 3
    %p113 = pnand %p111, %p112
    %p114 = pneg %p113
    // Predicated region
    $region25: #{encoder_forward.5} parent=5 // pred_check
      _
    $region26: #{encoder_forward.5} parent=5 // pred_check_branch
      %116 = sbr.rel (%p113) target = $region28
    $region27: #{encoder_forward.5} parent=5 // pred_region
      %s117 = ssub.s32 %s8, 1
      %p118 = scmp.lt.s32.totalorder %s13, 1
      %s119 = scalar_select %p118, %s13, 1
      %s120 = smul.addr %s119, 100
      %s121 = smul.addr %s120, 8
      %s122 = scalar_lea.vmem %s0, %s121
      %p123 = pneg %p34
      %p124 = pneg %p31
      %p125 = pneg %p55
      %p126 = pneg %p52
      %p127 = pneg %p81
      %p128 = pneg %p78
      %p129 = scmp.lt.s32.totalorder %s13, 1
      %s130 = scalar_select %p129, %s13, 1
      %s131 = smul.addr %s130, 8
      %s132 = smul.addr %s131, 8
      %s133 = scalar_lea.vmem %s2, %s132
      %p134 = scmp.lt.s32.totalorder %s13, 1
      %s135 = scalar_select %p134, %s13, 1
      %s136 = smul.addr %s135, 100
      %s137 = smul.addr %s136, 8
      %s138 = scalar_lea.vmem %s0, %s137
      %p139 = scmp.lt.s32.totalorder %s13, 1
      %s140 = scalar_select %p139, %s13, 1
      %s141 = smul.addr %s140, 8
      %s142 = smul.addr %s141, 8
      %s143 = scalar_lea.vmem %s2, %s142
      %v144 = vld [vmem:[%s1] sm:$0xff]
      %v145 = vld [vmem:[%s1 + $0x8] sm:$0xff]
      %v146 = vld [vmem:[%s1 + $0x10] sm:$0xff]
      %v147 = vld [vmem:[%s1 + $0x18] sm:$0xff]
      %v148 = vld [vmem:[%s1 + $0x20] sm:$0xff]
      %v149 = vld [vmem:[%s1 + $0x28] sm:$0xff]
      %v150 = vld [vmem:[%s1 + $0x30] sm:$0xff]
      %v151 = vld [vmem:[%s1 + $0x38] sm:$0xff]
      %v152 = vld [vmem:[%s1 + $0x40] sm:$0xff]
      %v153 = vld [vmem:[%s1 + $0x48] sm:$0xff]
      %v154 = vld [vmem:[%s1 + $0x50] sm:$0xff]
      %v155 = vld [vmem:[%s1 + $0x58] sm:$0xff]
      %v156 = vld [vmem:[%s1 + $0x60] sm:$0xff]
      %v157 = vld [vmem:[%s1 + $0x68] sm:$0xff]
      %v158 = vld [vmem:[%s1 + $0x70] sm:$0xff]
      %v159 = vld [vmem:[%s1 + $0x78] sm:$0xff]
      %v160 = vld [vmem:[%s138] sm:$0xff]
      %v161 = vld [vmem:[%s138 + $0x8] sm:$0xff]
      %v162 = vld [vmem:[%s138 + $0x10] sm:$0xff]
      %v163 = vld [vmem:[%s138 + $0x18] sm:$0xff]
      %v164 = vld [vmem:[%s138 + $0x20] sm:$0xff]
      %v165 = vld [vmem:[%s138 + $0x28] sm:$0xff]
      %v166 = vld [vmem:[%s138 + $0x30] sm:$0xff]
      %v167 = vld [vmem:[%s138 + $0x38] sm:$0xff]
      %v168 = vld [vmem:[%s138 + $0x40] sm:$0xff]
      %v169 = vld [vmem:[%s138 + $0x48] sm:$0xff]
      %v170 = vld [vmem:[%s138 + $0x50] sm:$0xff]
      %v171 = vld [vmem:[%s138 + $0x58] sm:$0xff]
      %v172 = vld [vmem:[%s138 + $0x60] sm:$0xff]
      %v173 = vld [vmem:[%s138 + $0x68] sm:$0xff]
      %v174 = vld [vmem:[%s138 + $0x70] sm:$0xff]
      %v175 = vld [vmem:[%s138 + $0x78] sm:$0xff]
      %v176 = vld [vmem:[%s138 + $0x80] sm:$0xff]
      %v177 = vld [vmem:[%s138 + $0x88] sm:$0xff]
      %v178 = vld [vmem:[%s138 + $0x90] sm:$0xff]
      %v179 = vld [vmem:[%s138 + $0x98] sm:$0xff]
      %v180 = vld [vmem:[%s138 + $0xa0] sm:$0xff]
      %v181 = vld [vmem:[%s138 + $0xa8] sm:$0xff]
      %v182 = vld [vmem:[%s138 + $0xb0] sm:$0xff]
      %v183 = vld [vmem:[%s138 + $0xb8] sm:$0xff]
      %v184 = vld [vmem:[%s138 + $0xc0] sm:$0xff]
      %v185 = vld [vmem:[%s138 + $0xc8] sm:$0xff]
      %v186 = vld [vmem:[%s138 + $0xd0] sm:$0xff]
      %v187 = vld [vmem:[%s138 + $0xd8] sm:$0xff]
      %v188 = vld [vmem:[%s138 + $0xe0] sm:$0xff]
      %v189 = vld [vmem:[%s138 + $0xe8] sm:$0xff]
      %v190 = vld [vmem:[%s138 + $0xf0] sm:$0xff]
      %v191 = vld [vmem:[%s138 + $0xf8] sm:$0xff]
      %v192 = vld [vmem:[%s138 + $0x100] sm:$0xff]
      %v193 = vld [vmem:[%s138 + $0x108] sm:$0xff]
      %v194 = vld [vmem:[%s138 + $0x110] sm:$0xff]
      %v195 = vld [vmem:[%s138 + $0x118] sm:$0xff]
      %v196 = vld [vmem:[%s138 + $0x120] sm:$0xff]
      %v197 = vld [vmem:[%s138 + $0x128] sm:$0xff]
      %v198 = vld [vmem:[%s138 + $0x130] sm:$0xff]
      %v199 = vld [vmem:[%s138 + $0x138] sm:$0xff]
      %v200 = vld [vmem:[%s138 + $0x140] sm:$0xff]
      %v201 = vld [vmem:[%s138 + $0x148] sm:$0xff]
      %v202 = vld [vmem:[%s138 + $0x150] sm:$0xff]
      %v203 = vld [vmem:[%s138 + $0x158] sm:$0xff]
      %v204 = vld [vmem:[%s138 + $0x160] sm:$0xff]
      %v205 = vld [vmem:[%s138 + $0x168] sm:$0xff]
      %v206 = vld [vmem:[%s138 + $0x170] sm:$0xff]
      %v207 = vld [vmem:[%s138 + $0x178] sm:$0xff]
      %v208 = vld [vmem:[%s138 + $0x180] sm:$0xff]
      %v209 = vld [vmem:[%s138 + $0x188] sm:$0xff]
      %v210 = vld [vmem:[%s138 + $0x190] sm:$0xff]
      %v211 = vld [vmem:[%s138 + $0x198] sm:$0xff]
      %v212 = vld [vmem:[%s138 + $0x1a0] sm:$0xff]
      %v213 = vld [vmem:[%s138 + $0x1a8] sm:$0xff]
      %v214 = vld [vmem:[%s138 + $0x1b0] sm:$0xff]
      %v215 = vld [vmem:[%s138 + $0x1b8] sm:$0xff]
      %v216 = vld [vmem:[%s138 + $0x1c0] sm:$0xff]
      %v217 = vld [vmem:[%s138 + $0x1c8] sm:$0xff]
      %v218 = vld [vmem:[%s138 + $0x1d0] sm:$0xff]
      %v219 = vld [vmem:[%s138 + $0x1d8] sm:$0xff]
      %v220 = vld [vmem:[%s138 + $0x1e0] sm:$0xff]
      %v221 = vld [vmem:[%s138 + $0x1e8] sm:$0xff]
      %v222 = vld [vmem:[%s138 + $0x1f0] sm:$0xff]
      %v223 = vld [vmem:[%s138 + $0x1f8] sm:$0xff]
      %v224 = vld [vmem:[%s138 + $0x200] sm:$0xff]
      %v225 = vld [vmem:[%s138 + $0x208] sm:$0xff]
      %v226 = vld [vmem:[%s138 + $0x210] sm:$0xff]
      %v227 = vld [vmem:[%s138 + $0x218] sm:$0xff]
      %v228 = vld [vmem:[%s138 + $0x220] sm:$0xff]
      %v229 = vld [vmem:[%s138 + $0x228] sm:$0xff]
      %v230 = vld [vmem:[%s138 + $0x230] sm:$0xff]
      %v231 = vld [vmem:[%s138 + $0x238] sm:$0xff]
      %v232 = vld [vmem:[%s138 + $0x240] sm:$0xff]
      %v233 = vld [vmem:[%s138 + $0x248] sm:$0xff]
      %v234 = vld [vmem:[%s138 + $0x250] sm:$0xff]
      %v235 = vld [vmem:[%s138 + $0x258] sm:$0xff]
      %v236 = vld [vmem:[%s138 + $0x260] sm:$0xff]
      %v237 = vld [vmem:[%s138 + $0x268] sm:$0xff]
      %v238 = vld [vmem:[%s138 + $0x270] sm:$0xff]
      %v239 = vld [vmem:[%s138 + $0x278] sm:$0xff]
      %v240 = vld [vmem:[%s138 + $0x280] sm:$0xff]
      %v241 = vld [vmem:[%s138 + $0x288] sm:$0xff]
      %v242 = vld [vmem:[%s138 + $0x290] sm:$0xff]
      %v243 = vld [vmem:[%s138 + $0x298] sm:$0xff]
      %v244 = vld [vmem:[%s138 + $0x2a0] sm:$0xff]
      %v245 = vld [vmem:[%s138 + $0x2a8] sm:$0xff]
      %v246 = vld [vmem:[%s138 + $0x2b0] sm:$0xff]
      %v247 = vld [vmem:[%s138 + $0x2b8] sm:$0xff]
      %v248 = vld [vmem:[%s138 + $0x2c0] sm:$0xff]
      %v249 = vld [vmem:[%s138 + $0x2c8] sm:$0xff]
      %v250 = vld [vmem:[%s138 + $0x2d0] sm:$0xff]
      %v251 = vld [vmem:[%s138 + $0x2d8] sm:$0xff]
      %v252 = vld [vmem:[%s138 + $0x2e0] sm:$0xff]
      %v253 = vld [vmem:[%s138 + $0x2e8] sm:$0xff]
      %v254 = vld [vmem:[%s138 + $0x2f0] sm:$0xff]
      %v255 = vld [vmem:[%s138 + $0x2f8] sm:$0xff]
      %v256 = vld [vmem:[%s138 + $0x300] sm:$0xff]
      %v257 = vld [vmem:[%s138 + $0x308] sm:$0xff]
      %v258 = vld [vmem:[%s138 + $0x310] sm:$0xff]
      %v259 = vld [vmem:[%s138 + $0x318] sm:$0xff]
      %vm260 = vcmask 130048
      %v262 = vsel %vm260, %v147, 0
      %v265 = vsel %vm260, %v151, 0
      %v268 = vsel %vm260, %v155, 0
      %v271 = vsel %vm260, %v159, 0
      %273 = vmatprep.subr.mxu0 %v161
      %274 = vmatpush1.msra.mxu0 %v160
      %275 = vmatprep.subr.mxu0 %v163
      %276 = vmatpush1.msra.mxu0 %v162
      %277 = vmatprep.subr.mxu0 %v165
      %278 = vmatpush1.msra.mxu0 %v164
      %279 = vmatprep.subr.mxu0 %v167
      %280 = vmatpush1.msra.mxu0 %v166
      %281 = vmatprep.subr.mxu0 %v169
      %282 = vmatpush1.msra.mxu0 %v168
      %283 = vmatprep.subr.mxu0 %v171
      %284 = vmatpush1.msra.mxu0 %v170
      %285 = vmatprep.subr.mxu0 %v173
      %286 = vmatpush1.msra.mxu0 %v172
      %287 = vmatprep.subr.mxu0 %v175
      %288 = vmatpush1.msra.mxu0 %v174
      %289 = vmatprep.subr.mxu0 %v177
      %290 = vmatpush1.msra.mxu0 %v176
      %291 = vmatprep.subr.mxu0 %v179
      %292 = vmatpush1.msra.mxu0 %v178
      %293 = vmatprep.subr.mxu0 %v181
      %294 = vmatpush1.msra.mxu0 %v180
      %295 = vmatprep.subr.mxu0 %v183
      %296 = vmatpush1.msra.mxu0 %v182
      %297 = vmatprep.subr.mxu0 %v185
      %298 = vmatpush1.msra.mxu0 %v184
      %299 = vmatprep.subr.mxu0 %v187
      %300 = vmatpush1.msra.mxu0 %v186
      %301 = vmatprep.subr.mxu0 %v189
      %302 = vmatpush1.msra.mxu0 %v188
      %303 = vmatprep.subr.mxu0 %v191
      %304 = vmatpush1.msra.mxu0 %v190
      %305 = vmatprep.subr.mxu0 %v193
      %306 = vmatpush1.msra.mxu0 %v192
      %307 = vmatprep.subr.mxu0 %v195
      %308 = vmatpush1.msra.mxu0 %v194
      %309 = vmatprep.subr.mxu0 %v197
      %310 = vmatpush1.msra.mxu0 %v196
      %311 = vmatprep.subr.mxu0 %v199
      %312 = vmatpush1.msra.mxu0 %v198
      %313 = vmatprep.subr.mxu0 %v201
      %314 = vmatpush1.msra.mxu0 %v200
      %315 = vmatprep.subr.mxu0 %v203
      %316 = vmatpush1.msra.mxu0 %v202
      %317 = vmatprep.subr.mxu0 %v205
      %318 = vmatpush1.msra.mxu0 %v204
      %319 = vmatprep.subr.mxu0 %v207
      %320 = vmatpush1.msra.mxu0 %v206
      %321 = vmatprep.subr.mxu0 %v209
      %322 = vmatpush1.msra.mxu0 %v208
      %323 = vmatprep.subr.mxu0 %v211
      %324 = vmatpush1.msra.mxu0 %v210
      %325 = vmatprep.subr.mxu0 %v213
      %326 = vmatpush1.msra.mxu0 %v212
      %327 = vmatprep.subr.mxu0 %v215
      %328 = vmatpush1.msra.mxu0 %v214
      %329 = vmatprep.subr.mxu0 %v217
      %330 = vmatpush1.msra.mxu0 %v216
      %331 = vmatprep.subr.mxu0 %v219
      %332 = vmatpush1.msra.mxu0 %v218
      %333 = vmatprep.subr.mxu0 %v221
      %334 = vmatpush1.msra.mxu0 %v220
      %335 = vmatprep.subr.mxu0 %v223
      %336 = vmatpush1.msra.mxu0 %v222
      %337 = vmatprep.mubr.f32.mxu0 %v145
      %338 = vmatmul.mubr.f32.gmra.mrb[0].mxu0 %v144
      %v339 = vpop.f32.mrb[0].mxu0
      %v340 = vadd.f32 0.0, %v339
      %v341 = vpop.f32.mrb[0].mxu0
      %v342 = vadd.f32 0.0, %v341
      %343 = vmatprep.mubr.f32.mxu0 %v149
      %344 = vmatmul.mubr.f32.gmra.mrb[0].mxu0 %v148
      %v345 = vpop.f32.mrb[0].mxu0
      %v346 = vadd.f32 0.0, %v345
      %v347 = vpop.f32.mrb[0].mxu0
      %v348 = vadd.f32 0.0, %v347
      %349 = vmatprep.mubr.f32.mxu0 %v153
      %350 = vmatmul.mubr.f32.gmra.mrb[0].mxu0 %v152
      %v351 = vpop.f32.mrb[0].mxu0
      %v352 = vadd.f32 0.0, %v351
      %v353 = vpop.f32.mrb[0].mxu0
      %v354 = vadd.f32 0.0, %v353
      %355 = vmatprep.mubr.f32.mxu0 %v157
      %356 = vmatmul.mubr.f32.gmra.mrb[0].mxu0 %v156
      %v357 = vpop.f32.mrb[0].mxu0
      %v358 = vadd.f32 0.0, %v357
      %v359 = vpop.f32.mrb[0].mxu0
      %v360 = vadd.f32 0.0, %v359
      %361 = vdwg.mxu0
      %362 = vmatprep.subr.mxu0 %v225
      %363 = vmatpush1.msra.mxu0 %v224
      %364 = vmatprep.subr.mxu0 %v227
      %365 = vmatpush1.msra.mxu0 %v226
      %366 = vmatprep.subr.mxu0 %v229
      %367 = vmatpush1.msra.mxu0 %v228
      %368 = vmatprep.subr.mxu0 %v231
      %369 = vmatpush1.msra.mxu0 %v230
      %370 = vmatprep.subr.mxu0 %v233
      %371 = vmatpush1.msra.mxu0 %v232
      %372 = vmatprep.subr.mxu0 %v235
      %373 = vmatpush1.msra.mxu0 %v234
      %374 = vmatprep.subr.mxu0 %v237
      %375 = vmatpush1.msra.mxu0 %v236
      %376 = vmatprep.subr.mxu0 %v239
      %377 = vmatpush1.msra.mxu0 %v238
      %378 = vmatprep.subr.mxu0 %v241
      %379 = vmatpush1.msra.mxu0 %v240
      %380 = vmatprep.subr.mxu0 %v243
      %381 = vmatpush1.msra.mxu0 %v242
      %382 = vmatprep.subr.mxu0 %v245
      %383 = vmatpush1.msra.mxu0 %v244
      %384 = vmatprep.subr.mxu0 %v247
      %385 = vmatpush1.msra.mxu0 %v246
      %386 = vmatprep.subr.mxu0 %v249
      %387 = vmatpush1.msra.mxu0 %v248
      %388 = vmatprep.subr.mxu0 %v251
      %389 = vmatpush1.msra.mxu0 %v250
      %390 = vmatprep.subr.mxu0 %v253
      %391 = vmatpush1.msra.mxu0 %v252
      %392 = vmatprep.subr.mxu0 %v255
      %393 = vmatpush1.msra.mxu0 %v254
      %394 = vmatprep.subr.mxu0 %v257
      %395 = vmatpush1.msra.mxu0 %v256
      %396 = vmatprep.subr.mxu0 %v259
      %397 = vmatpush1.msra.mxu0 %v258
      %398 = vmatprep.subr.mxu0 0.0
      %399 = vmatpush1.msra.mxu0 0.0
      %400 = vmatprep.subr.mxu0 0.0
      %401 = vmatpush1.msra.mxu0 0.0
      %402 = vmatprep.subr.mxu0 0.0
      %403 = vmatpush1.msra.mxu0 0.0
      %404 = vmatprep.subr.mxu0 0.0
      %405 = vmatpush1.msra.mxu0 0.0
      %406 = vmatprep.subr.mxu0 0.0
      %407 = vmatpush1.msra.mxu0 0.0
      %408 = vmatprep.subr.mxu0 0.0
      %409 = vmatpush1.msra.mxu0 0.0
      %410 = vmatprep.subr.mxu0 0.0
      %411 = vmatpush1.msra.mxu0 0.0
      %412 = vmatprep.subr.mxu0 0.0
      %413 = vmatpush1.msra.mxu0 0.0
      %414 = vmatprep.subr.mxu0 0.0
      %415 = vmatpush1.msra.mxu0 0.0
      %416 = vmatprep.subr.mxu0 0.0
      %417 = vmatpush1.msra.mxu0 0.0
      %418 = vmatprep.subr.mxu0 0.0
      %419 = vmatpush1.msra.mxu0 0.0
      %420 = vmatprep.subr.mxu0 0.0
      %421 = vmatpush1.msra.mxu0 0.0
      %422 = vmatprep.subr.mxu0 0.0
      %423 = vmatpush1.msra.mxu0 0.0
      %424 = vmatprep.subr.mxu0 0.0
      %425 = vmatpush1.msra.mxu0 0.0
      %426 = vmatprep.mubr.f32.mxu0 %v262
      %427 = vmatmul.mubr.f32.gmra.mrb[0].mxu0 %v146
      %v428 = vpop.f32.mrb[0].mxu0
      %v429 = vadd.f32 %v340, %v428
      %v430 = vpop.f32.mrb[0].mxu0
      %v431 = vadd.f32 %v342, %v430
      %432 = vmatprep.mubr.f32.mxu0 %v265
      %433 = vmatmul.mubr.f32.gmra.mrb[0].mxu0 %v150
      %v434 = vpop.f32.mrb[0].mxu0
      %v435 = vadd.f32 %v346, %v434
      %v436 = vpop.f32.mrb[0].mxu0
      %v437 = vadd.f32 %v348, %v436
      %438 = vmatprep.mubr.f32.mxu0 %v268
      %439 = vmatmul.mubr.f32.gmra.mrb[0].mxu0 %v154
      %v440 = vpop.f32.mrb[0].mxu0
      %v441 = vadd.f32 %v352, %v440
      %v442 = vpop.f32.mrb[0].mxu0
      %v443 = vadd.f32 %v354, %v442
      %444 = vmatprep.mubr.f32.mxu0 %v271
      %445 = vmatmul.mubr.f32.gmra.mrb[0].mxu0 %v158
      %v446 = vpop.f32.mrb[0].mxu0
      %v447 = vadd.f32 %v358, %v446
      %v448 = vpop.f32.mrb[0].mxu0
      %v449 = vadd.f32 %v360, %v448
      %450 = vdwg.mxu0
      %vm451 = vcmask 556032
      %v452 = vsel %vm451, %v431, 0.0
      %v453 = vadd.f32 %v429, %v452
      %454 = vadd.xlane.f32.xlu0 %v453
      %v455 = vpop.xlane.xlu0 %454
      %v456 = vsel %vm451, %v437, 0.0
      %v457 = vadd.f32 %v435, %v456
      %458 = vadd.xlane.f32.xlu0 %v457
      %v459 = vpop.xlane.xlu0 %458
      %v460 = vsel %vm451, %v443, 0.0
      %v461 = vadd.f32 %v441, %v460
      %462 = vadd.xlane.f32.xlu0 %v461
      %v463 = vpop.xlane.xlu0 %462
      %v464 = vsel %vm451, %v449, 0.0
      %v465 = vadd.f32 %v447, %v464
      %466 = vadd.xlane.f32.xlu0 %v465
      %v467 = vpop.xlane.xlu0 %466
      %v468 = vrcp.pop 196.0
      %v469 = vmul.f32 %v455, %v468
      %v470 = vmul.f32 %v459, %v468
      %v471 = vmul.f32 %v463, %v468
      %v472 = vmul.f32 %v467, %v468
      %v473 = vmul.f32 %v429, %v429
      %v474 = vmul.f32 %v431, %v431
      %v475 = vmul.f32 %v435, %v435
      %v476 = vmul.f32 %v437, %v437
      %v477 = vmul.f32 %v441, %v441
      %v478 = vmul.f32 %v443, %v443
      %v479 = vmul.f32 %v447, %v447
      %v480 = vmul.f32 %v449, %v449
      %v481 = vsel %vm451, %v474, 0.0
      %v482 = vadd.f32 %v473, %v481
      %483 = vadd.xlane.f32.xlu0 %v482
      %v484 = vpop.xlane.xlu0 %483
      %v485 = vsel %vm451, %v476, 0.0
      %v486 = vadd.f32 %v475, %v485
      %487 = vadd.xlane.f32.xlu0 %v486
      %v488 = vpop.xlane.xlu0 %487
      %v489 = vsel %vm451, %v478, 0.0
      %v490 = vadd.f32 %v477, %v489
      %491 = vadd.xlane.f32.xlu0 %v490
      %v492 = vpop.xlane.xlu0 %491
      %v493 = vsel %vm451, %v480, 0.0
      %v494 = vadd.f32 %v479, %v493
      %495 = vadd.xlane.f32.xlu0 %v494
      %v496 = vpop.xlane.xlu0 %495
      %v497 = vmul.f32 %v484, %v468
      %v498 = vmul.f32 %v488, %v468
      %v499 = vmul.f32 %v492, %v468
      %v500 = vmul.f32 %v496, %v468
      %v501 = vmul.f32 %v469, %v469
      %v502 = vmul.f32 %v470, %v470
      %v503 = vmul.f32 %v471, %v471
      %v504 = vmul.f32 %v472, %v472
      %v505 = vsub.f32 %v497, %v501
      %v506 = vsub.f32 %v498, %v502
      %v507 = vsub.f32 %v499, %v503
      %v508 = vsub.f32 %v500, %v504
      %v509 = vmax.f32 %v505, 0.0
      %v510 = vmax.f32 %v506, 0.0
      %v511 = vmax.f32 %v507, 0.0
      %v512 = vmax.f32 %v508, 0.0
      %v513 = vsub.f32 %v429, %v469
      %v514 = vsub.f32 %v431, %v469
      %v515 = vsub.f32 %v435, %v470
      %v516 = vsub.f32 %v437, %v470
      %v517 = vsub.f32 %v441, %v471
      %v518 = vsub.f32 %v443, %v471
      %v519 = vsub.f32 %v447, %v472
      %v520 = vsub.f32 %v449, %v472
      %v521 = vadd.f32 %v509, 1e-05
      %v522 = vadd.f32 %v510, 1e-05
      %v523 = vadd.f32 %v511, 1e-05
      %v524 = vadd.f32 %v512, 1e-05
      %v525 = vrsqrt.pop %v521
      %v526 = vrsqrt.pop %v522
      %v527 = vrsqrt.pop %v523
      %v528 = vrsqrt.pop %v524
      %v529 = vmul.f32 %v513, %v525
      %v530 = vmul.f32 %v514, %v525
      %v531 = vmul.f32 %v515, %v526
      %v532 = vmul.f32 %v516, %v526
      %v533 = vmul.f32 %v517, %v527
      %v534 = vmul.f32 %v518, %v527
      %v535 = vmul.f32 %v519, %v528
      %v536 = vmul.f32 %v520, %v528
      %v537 = vmax.f32 %v529, 0.0
      %v538 = vmax.f32 %v530, 0.0
      %v539 = vmax.f32 %v531, 0.0
      %v540 = vmax.f32 %v532, 0.0
      %v541 = vmax.f32 %v533, 0.0
      %v542 = vmax.f32 %v534, 0.0
      %v543 = vmax.f32 %v535, 0.0
      %v544 = vmax.f32 %v536, 0.0
      %545 = vst [vmem:[%s143] sm:$0xff] %v537
      %546 = vst.msk [vmem:[%s143 + $0x8] sm:$0xff] %vm451, %v538
      %547 = vst [vmem:[%s143 + $0x10] sm:$0xff] %v539
      %548 = vst.msk [vmem:[%s143 + $0x18] sm:$0xff] %vm451, %v540
      %549 = vst [vmem:[%s143 + $0x20] sm:$0xff] %v541
      %550 = vst.msk [vmem:[%s143 + $0x28] sm:$0xff] %vm451, %v542
      %551 = vst [vmem:[%s143 + $0x30] sm:$0xff] %v543
      %552 = vst.msk [vmem:[%s143 + $0x38] sm:$0xff] %vm451, %v544
      %p553 = scmp.lt.s32.totalorder %s13, 1
      %s554 = scalar_select %p553, %s13, 1
      %s555 = smul.addr %s554, 8
      %s556 = smul.addr %s555, 8
      %s557 = scalar_lea.vmem %s2, %s556
      // Predicated region
      $region29: #{encoder_forward.5} parent=27 // pred_check
        %p558 = pneg %p78
      $region30: #{encoder_forward.5} parent=27 // pred_check_branch
        %560 = sbr.rel (%p558) target = $region32
      $region31: #{encoder_forward.5} parent=27 // pred_region
        _
      $region32: #{encoder_forward.5} parent=27 // pred_fallthru
        _
    $region28: #{encoder_forward.5} parent=5 // pred_fallthru
      _
    %p561 = scmp.le.s32.totalorder 2, %s8
    // Predicated region
    $region33: #{encoder_forward.5} parent=5 // pred_check
      %p562 = pneg %p561
    $region34: #{encoder_forward.5} parent=5 // pred_check_branch
      %564 = sbr.rel (%p562) target = $region36
    $region35: #{encoder_forward.5} parent=5 // pred_region
      %s565 = ssub.s32 %s8, 2
      // Predicated region
      $region37: #{encoder_forward.5} parent=35 // pred_check
        %p566 = pneg %p84
      $region38: #{encoder_forward.5} parent=35 // pred_check_branch
        %568 = sbr.rel (%p566) target = $region40
      $region39: #{encoder_forward.5} parent=35 // pred_region
        %p569 = scmp.lt.s32.totalorder %s14, 1
        %s570 = scalar_select %p569, %s14, 1
        %s571 = smul.addr %s570, 8
        %s572 = smul.addr %s571, 8
        %s573 = scalar_lea.vmem %s2, %s572
      $region40: #{encoder_forward.5} parent=35 // pred_fallthru
        _
    $region36: #{encoder_forward.5} parent=5 // pred_fallthru
      _
  $region6: #{encoder_forward.5} parent=0 // loop_footer
    %s12 = sadd.s32 1, %s8
  $region7: #{encoder_forward.5} parent=0 // loop_footer_branch
    %7 = sbr.rel target = $region3
  $region8: #{encoder_forward.5} parent=0 // loop_exit
    _

// kernel: encoder_forward.6
$region0: #{encoder_forward.6}
  #allocation0 [shape = 'u32[]', space=smem, size = 0x4, offset = 0x4, fixed_abs, tag = 'smem constant byte address 0x4 - core index']
  #allocation1 [shape = 'u32[144,128]{1,0:T(1,128)}', space=vmem, size = 0x12000, scoped, tag = 'internal scratch']
  %s0 = inlined_call_operand.vmem [shape: f32[2,800,36], index: 0, kind: input, shape index: {}]
  %s1 = inlined_call_operand.vmem [shape: f32[64,800], index: 1, kind: input, shape index: {}]
  %s2 = inlined_call_operand.vmem [shape: f32[2,64,36], index: 2, kind: output, shape index: {}]
  %s3 = sld [smem:[#allocation0]]
  $region41: #{encoder_forward.6} parent=0
    _
  %s5 = ssub.s32 1, %s3
  %s6 = scalar_select 0, %s5, %s3
  loop: start=0, step=1, limit=4
  $region2: #{encoder_forward.6} parent=0 // loop_pre_header
    _
  $region3: #{encoder_forward.6} parent=0 // loop_header
    %s8 = sphi 0, %s12
    %p9 = scmp.ge.s32.totalorder %s8, 4
    %s18 = sphi 0, %s20
    %s21 = sphi 0, %s18
    %s22 = sphi 0, %s21
    %s38 = sphi 0, %s22
    %s42 = sphi 0, %s42
    %s44 = sphi 0, %s42
    %s45 = sphi 0, %s44
    %s59 = sphi 0, %s45
    %s65 = sphi 0, %s67
    %s68 = sphi 0, %s65
    %s69 = sphi 0, %s68
    %s85 = sphi 0, %s69
  $region4: #{encoder_forward.6} parent=0 // loop_header_branch
    %11 = sbr.rel (%p9) target = $region8
  $region5: #{encoder_forward.6} parent=0 // loop_body
    %s13 = ssub.s32 %s8, 1
    %s14 = ssub.s32 %s8, 2
    %s15 = sadd.s32 %s8, 1
    %s16 = ssub.s32 %s8, %s15
    %p17 = scmp.eq.s32.totalorder %s16, 0
    %s19 = sadd.s32 %s18, 1
    %s20 = scalar_select %p17, %s18, %s19
    %p23 = pneg %p17
    %p24 = scmp.eq.s32.totalorder %s8, 1
    %p25 = por %p23, %p24
    %p26 = scmp.ne.s32.totalorder %s18, %s21
    %p27 = scmp.eq.s32.totalorder %s8, 0
    %p28 = por %p26, %p27
    %p29 = scmp.ne.s32.totalorder %s18, %s21
    %p30 = scmp.eq.s32.totalorder %s13, 1
    %p31 = por %p29, %p30
    %p32 = scmp.ne.s32.totalorder %s21, %s22
    %p33 = scmp.eq.s32.totalorder %s13, 0
    %p34 = por %p32, %p33
    %p35 = scmp.ne.s32.totalorder %s21, %s22
    %p36 = scmp.eq.s32.totalorder %s14, 1
    %p37 = por %p35, %p36
    %p39 = scmp.ne.s32.totalorder %s22, %s38
    %p40 = scmp.eq.s32.totalorder %s14, 0
    %p41 = por %p39, %p40
    %s43 = sadd.s32 %s42, 1
    %p46 = scmp.eq.s32.totalorder %s8, 1
    %p47 = scmp.ne.s32.totalorder %s42, %s44
    %p48 = scmp.eq.s32.totalorder %s8, 0
    %p49 = por %p47, %p48
    %p50 = scmp.ne.s32.totalorder %s42, %s44
    %p51 = scmp.eq.s32.totalorder %s13, 1
    %p52 = por %p50, %p51
    %p53 = scmp.ne.s32.totalorder %s44, %s45
    %p54 = scmp.eq.s32.totalorder %s13, 0
    %p55 = por %p53, %p54
    %p56 = scmp.ne.s32.totalorder %s44, %s45
    %p57 = scmp.eq.s32.totalorder %s14, 1
    %p58 = por %p56, %p57
    %p60 = scmp.ne.s32.totalorder %s45, %s59
    %p61 = scmp.eq.s32.totalorder %s14, 0
    %p62 = por %p60, %p61
    %s63 = ssub.s32 %s8, %s15
    %p64 = scmp.eq.s32.totalorder %s63, 0
    %s66 = sadd.s32 %s65, 1
    %s67 = scalar_select %p64, %s65, %s66
    %p70 = pneg %p64
    %p71 = scmp.eq.s32.totalorder %s8, 1
    %p72 = por %p70, %p71
    %p73 = scmp.ne.s32.totalorder %s65, %s68
    %p74 = scmp.eq.s32.totalorder %s8, 0
    %p75 = por %p73, %p74
    %p76 = scmp.ne.s32.totalorder %s65, %s68
    %p77 = scmp.eq.s32.totalorder %s13, 1
    %p78 = por %p76, %p77
    %p79 = scmp.ne.s32.totalorder %s68, %s69
    %p80 = scmp.eq.s32.totalorder %s13, 0
    %p81 = por %p79, %p80
    %p82 = scmp.ne.s32.totalorder %s68, %s69
    %p83 = scmp.eq.s32.totalorder %s14, 1
    %p84 = por %p82, %p83
    %p86 = scmp.ne.s32.totalorder %s69, %s85
    %p87 = scmp.eq.s32.totalorder %s14, 0
    %p88 = por %p86, %p87
    %p89 = scmp.le.s32.totalorder 1, %s8
    %p90 = scmp.lt.s32.totalorder %s8, 3
    %p91 = pnand %p89, %p90
    %p92 = pneg %p91
    // Predicated region
    $region9: #{encoder_forward.6} parent=5 // pred_check
      _
    $region10: #{encoder_forward.6} parent=5 // pred_check_branch
      %94 = sbr.rel (%p91) target = $region12
    $region11: #{encoder_forward.6} parent=5 // pred_region
      %s95 = ssub.s32 %s8, 1
      // Predicated region
      $region13: #{encoder_forward.6} parent=11 // pred_check
        %p96 = pneg %p55
      $region14: #{encoder_forward.6} parent=11 // pred_check_branch
        %98 = sbr.rel (%p96) target = $region16
      $region15: #{encoder_forward.6} parent=11 // pred_region
        _
      $region16: #{encoder_forward.6} parent=11 // pred_fallthru
        _
    $region12: #{encoder_forward.6} parent=5 // pred_fallthru
      _
    %p99 = scmp.lt.s32.totalorder %s8, 2
    // Predicated region
    $region17: #{encoder_forward.6} parent=5 // pred_check
      %p100 = pneg %p99
    $region18: #{encoder_forward.6} parent=5 // pred_check_branch
      %102 = sbr.rel (%p100) target = $region20
    $region19: #{encoder_forward.6} parent=5 // pred_region
      // Predicated region
      $region21: #{encoder_forward.6} parent=19 // pred_check
        %p103 = pneg %p28
      $region22: #{encoder_forward.6} parent=19 // pred_check_branch
        %105 = sbr.rel (%p103) target = $region24
      $region23: #{encoder_forward.6} parent=19 // pred_region
        %p106 = scmp.lt.s32.totalorder %s8, 1
        %s107 = scalar_select %p106, %s8, 1
        %s108 = smul.addr %s107, 100
        %s109 = smul.addr %s108, 8
        %s110 = scalar_lea.vmem %s0, %s109
      $region24: #{encoder_forward.6} parent=19 // pred_fallthru
        _
    $region20: #{encoder_forward.6} parent=5 // pred_fallthru
      _
    %p111 = scmp.le.s32.totalorder 1, %s8
    %p112 = scmp.lt.s32.totalorder %s8, 3
    %p113 = pnand %p111, %p112
    %p114 = pneg %p113
    // Predicated region
    $region25: #{encoder_forward.6} parent=5 // pred_check
      _
    $region26: #{encoder_forward.6} parent=5 // pred_check_branch
      %116 = sbr.rel (%p113) target = $region28
    $region27: #{encoder_forward.6} parent=5 // pred_region
      %s117 = ssub.s32 %s8, 1
      %p118 = scmp.lt.s32.totalorder %s13, 1
      %s119 = scalar_select %p118, %s13, 1
      %s120 = smul.addr %s119, 100
      %s121 = smul.addr %s120, 8
      %s122 = scalar_lea.vmem %s0, %s121
      %p123 = pneg %p34
      %p124 = pneg %p31
      %p125 = pneg %p55
      %p126 = pneg %p52
      %p127 = pneg %p81
      %p128 = pneg %p78
      %p129 = scmp.lt.s32.totalorder %s13, 1
      %s130 = scalar_select %p129, %s13, 1
      %s131 = smul.addr %s130, 8
      %s132 = smul.addr %s131, 8
      %s133 = scalar_lea.vmem %s2, %s132
      %p134 = scmp.lt.s32.totalorder %s13, 1
      %s135 = scalar_select %p134, %s13, 1
      %s136 = smul.addr %s135, 100
      %s137 = smul.addr %s136, 8
      %s138 = scalar_lea.vmem %s0, %s137
      %p139 = scmp.lt.s32.totalorder %s13, 1
      %s140 = scalar_select %p139, %s13, 1
      %s141 = smul.addr %s140, 8
      %s142 = smul.addr %s141, 8
      %s143 = scalar_lea.vmem %s2, %s142
      %v144 = vld [vmem:[%s1] sm:$0xff]
      %v145 = vld [vmem:[%s1 + $0x8] sm:$0xff]
      %v146 = vld [vmem:[%s1 + $0x10] sm:$0xff]
      %v147 = vld [vmem:[%s1 + $0x18] sm:$0xff]
      %v148 = vld [vmem:[%s1 + $0x20] sm:$0xff]
      %v149 = vld [vmem:[%s1 + $0x28] sm:$0xff]
      %v150 = vld [vmem:[%s1 + $0x30] sm:$0xff]
      %v151 = vld [vmem:[%s1 + $0x38] sm:$0xff]
      %v152 = vld [vmem:[%s1 + $0x40] sm:$0xff]
      %v153 = vld [vmem:[%s1 + $0x48] sm:$0xff]
      %v154 = vld [vmem:[%s1 + $0x50] sm:$0xff]
      %v155 = vld [vmem:[%s1 + $0x58] sm:$0xff]
      %v156 = vld [vmem:[%s1 + $0x60] sm:$0xff]
      %v157 = vld [vmem:[%s1 + $0x68] sm:$0xff]
      %v158 = vld [vmem:[%s1 + $0x70] sm:$0xff]
      %v159 = vld [vmem:[%s1 + $0x78] sm:$0xff]
      %v160 = vld [vmem:[%s1 + $0x80] sm:$0xff]
      %v161 = vld [vmem:[%s1 + $0x88] sm:$0xff]
      %v162 = vld [vmem:[%s1 + $0x90] sm:$0xff]
      %v163 = vld [vmem:[%s1 + $0x98] sm:$0xff]
      %v164 = vld [vmem:[%s1 + $0xa0] sm:$0xff]
      %v165 = vld [vmem:[%s1 + $0xa8] sm:$0xff]
      %v166 = vld [vmem:[%s1 + $0xb0] sm:$0xff]
      %v167 = vld [vmem:[%s1 + $0xb8] sm:$0xff]
      %v168 = vld [vmem:[%s1 + $0xc0] sm:$0xff]
      %v169 = vld [vmem:[%s1 + $0xc8] sm:$0xff]
      %v170 = vld [vmem:[%s1 + $0xd0] sm:$0xff]
      %v171 = vld [vmem:[%s1 + $0xd8] sm:$0xff]
      %v172 = vld [vmem:[%s1 + $0xe0] sm:$0xff]
      %v173 = vld [vmem:[%s1 + $0xe8] sm:$0xff]
      %v174 = vld [vmem:[%s1 + $0xf0] sm:$0xff]
      %v175 = vld [vmem:[%s1 + $0xf8] sm:$0xff]
      %v176 = vld [vmem:[%s1 + $0x100] sm:$0xff]
      %v177 = vld [vmem:[%s1 + $0x108] sm:$0xff]
      %v178 = vld [vmem:[%s1 + $0x110] sm:$0xff]
      %v179 = vld [vmem:[%s1 + $0x118] sm:$0xff]
      %v180 = vld [vmem:[%s1 + $0x120] sm:$0xff]
      %v181 = vld [vmem:[%s1 + $0x128] sm:$0xff]
      %v182 = vld [vmem:[%s1 + $0x130] sm:$0xff]
      %v183 = vld [vmem:[%s1 + $0x138] sm:$0xff]
      %v184 = vld [vmem:[%s1 + $0x140] sm:$0xff]
      %v185 = vld [vmem:[%s1 + $0x148] sm:$0xff]
      %v186 = vld [vmem:[%s1 + $0x150] sm:$0xff]
      %v187 = vld [vmem:[%s1 + $0x158] sm:$0xff]
      %v188 = vld [vmem:[%s1 + $0x160] sm:$0xff]
      %v189 = vld [vmem:[%s1 + $0x168] sm:$0xff]
      %v190 = vld [vmem:[%s1 + $0x170] sm:$0xff]
      %v191 = vld [vmem:[%s1 + $0x178] sm:$0xff]
      %v192 = vld [vmem:[%s1 + $0x180] sm:$0xff]
      %v193 = vld [vmem:[%s1 + $0x188] sm:$0xff]
      %v194 = vld [vmem:[%s1 + $0x190] sm:$0xff]
      %v195 = vld [vmem:[%s1 + $0x198] sm:$0xff]
      %v196 = vld [vmem:[%s1 + $0x1a0] sm:$0xff]
      %v197 = vld [vmem:[%s1 + $0x1a8] sm:$0xff]
      %v198 = vld [vmem:[%s1 + $0x1b0] sm:$0xff]
      %v199 = vld [vmem:[%s1 + $0x1b8] sm:$0xff]
      %v200 = vld [vmem:[%s138] sm:$0xff]
      %v201 = vld [vmem:[%s138 + $0x8] sm:$0xff]
      %v202 = vld [vmem:[%s138 + $0x10] sm:$0xff]
      %v203 = vld [vmem:[%s138 + $0x18] sm:$0xff]
      %v204 = vld [vmem:[%s138 + $0x20] sm:$0xff]
      %v205 = vld [vmem:[%s138 + $0x28] sm:$0xff]
      %v206 = vld [vmem:[%s138 + $0x30] sm:$0xff]
      %v207 = vld [vmem:[%s138 + $0x38] sm:$0xff]
      %v208 = vld [vmem:[%s138 + $0x40] sm:$0xff]
      %v209 = vld [vmem:[%s138 + $0x48] sm:$0xff]
      %v210 = vld [vmem:[%s138 + $0x50] sm:$0xff]
      %v211 = vld [vmem:[%s138 + $0x58] sm:$0xff]
      %v212 = vld [vmem:[%s138 + $0x60] sm:$0xff]
      %v213 = vld [vmem:[%s138 + $0x68] sm:$0xff]
      %v214 = vld [vmem:[%s138 + $0x70] sm:$0xff]
      %v215 = vld [vmem:[%s138 + $0x78] sm:$0xff]
      %v216 = vld [vmem:[%s138 + $0x80] sm:$0xff]
      %v217 = vld [vmem:[%s138 + $0x88] sm:$0xff]
      %v218 = vld [vmem:[%s138 + $0x90] sm:$0xff]
      %v219 = vld [vmem:[%s138 + $0x98] sm:$0xff]
      %v220 = vld [vmem:[%s138 + $0xa0] sm:$0xff]
      %v221 = vld [vmem:[%s138 + $0xa8] sm:$0xff]
      %v222 = vld [vmem:[%s138 + $0xb0] sm:$0xff]
      %v223 = vld [vmem:[%s138 + $0xb8] sm:$0xff]
      %v224 = vld [vmem:[%s138 + $0xc0] sm:$0xff]
      %v225 = vld [vmem:[%s138 + $0xc8] sm:$0xff]
      %v226 = vld [vmem:[%s138 + $0xd0] sm:$0xff]
      %v227 = vld [vmem:[%s138 + $0xd8] sm:$0xff]
      %v228 = vld [vmem:[%s138 + $0xe0] sm:$0xff]
      %v229 = vld [vmem:[%s138 + $0xe8] sm:$0xff]
      %v230 = vld [vmem:[%s138 + $0xf0] sm:$0xff]
      %v231 = vld [vmem:[%s138 + $0xf8] sm:$0xff]
      %v232 = vld [vmem:[%s138 + $0x100] sm:$0xff]
      %v233 = vld [vmem:[%s138 + $0x108] sm:$0xff]
      %v234 = vld [vmem:[%s138 + $0x110] sm:$0xff]
      %v235 = vld [vmem:[%s138 + $0x118] sm:$0xff]
      %v236 = vld [vmem:[%s138 + $0x120] sm:$0xff]
      %v237 = vld [vmem:[%s138 + $0x128] sm:$0xff]
      %v238 = vld [vmem:[%s138 + $0x130] sm:$0xff]
      %v239 = vld [vmem:[%s138 + $0x138] sm:$0xff]
      %v240 = vld [vmem:[%s138 + $0x140] sm:$0xff]
      %v241 = vld [vmem:[%s138 + $0x148] sm:$0xff]
      %v242 = vld [vmem:[%s138 + $0x150] sm:$0xff]
      %v243 = vld [vmem:[%s138 + $0x158] sm:$0xff]
      %v244 = vld [vmem:[%s138 + $0x160] sm:$0xff]
      %v245 = vld [vmem:[%s138 + $0x168] sm:$0xff]
      %v246 = vld [vmem:[%s138 + $0x170] sm:$0xff]
      %v247 = vld [vmem:[%s138 + $0x178] sm:$0xff]
      %v248 = vld [vmem:[%s138 + $0x180] sm:$0xff]
      %v249 = vld [vmem:[%s138 + $0x188] sm:$0xff]
      %v250 = vld [vmem:[%s138 + $0x190] sm:$0xff]
      %v251 = vld [vmem:[%s138 + $0x198] sm:$0xff]
      %v252 = vld [vmem:[%s138 + $0x1a0] sm:$0xff]
      %v253 = vld [vmem:[%s138 + $0x1a8] sm:$0xff]
      %v254 = vld [vmem:[%s138 + $0x1b0] sm:$0xff]
      %v255 = vld [vmem:[%s138 + $0x1b8] sm:$0xff]
      %v256 = vld [vmem:[%s138 + $0x1c0] sm:$0xff]
      %v257 = vld [vmem:[%s138 + $0x1c8] sm:$0xff]
      %v258 = vld [vmem:[%s138 + $0x1d0] sm:$0xff]
      %v259 = vld [vmem:[%s138 + $0x1d8] sm:$0xff]
      %v260 = vld [vmem:[%s138 + $0x1e0] sm:$0xff]
      %v261 = vld [vmem:[%s138 + $0x1e8] sm:$0xff]
      %v262 = vld [vmem:[%s138 + $0x1f0] sm:$0xff]
      %v263 = vld [vmem:[%s138 + $0x1f8] sm:$0xff]
      %v264 = vld [vmem:[%s138 + $0x200] sm:$0xff]
      %v265 = vld [vmem:[%s138 + $0x208] sm:$0xff]
      %v266 = vld [vmem:[%s138 + $0x210] sm:$0xff]
      %v267 = vld [vmem:[%s138 + $0x218] sm:$0xff]
      %v268 = vld [vmem:[%s138 + $0x220] sm:$0xff]
      %v269 = vld [vmem:[%s138 + $0x228] sm:$0xff]
      %v270 = vld [vmem:[%s138 + $0x230] sm:$0xff]
      %v271 = vld [vmem:[%s138 + $0x238] sm:$0xff]
      %v272 = vld [vmem:[%s138 + $0x240] sm:$0xff]
      %v273 = vld [vmem:[%s138 + $0x248] sm:$0xff]
      %v274 = vld [vmem:[%s138 + $0x250] sm:$0xff]
      %v275 = vld [vmem:[%s138 + $0x258] sm:$0xff]
      %v276 = vld [vmem:[%s138 + $0x260] sm:$0xff]
      %v277 = vld [vmem:[%s138 + $0x268] sm:$0xff]
      %v278 = vld [vmem:[%s138 + $0x270] sm:$0xff]
      %v279 = vld [vmem:[%s138 + $0x278] sm:$0xff]
      %v280 = vld [vmem:[%s138 + $0x280] sm:$0xff]
      %v281 = vld [vmem:[%s138 + $0x288] sm:$0xff]
      %v282 = vld [vmem:[%s138 + $0x290] sm:$0xff]
      %v283 = vld [vmem:[%s138 + $0x298] sm:$0xff]
      %v284 = vld [vmem:[%s138 + $0x2a0] sm:$0xff]
      %v285 = vld [vmem:[%s138 + $0x2a8] sm:$0xff]
      %v286 = vld [vmem:[%s138 + $0x2b0] sm:$0xff]
      %v287 = vld [vmem:[%s138 + $0x2b8] sm:$0xff]
      %v288 = vld [vmem:[%s138 + $0x2c0] sm:$0xff]
      %v289 = vld [vmem:[%s138 + $0x2c8] sm:$0xff]
      %v290 = vld [vmem:[%s138 + $0x2d0] sm:$0xff]
      %v291 = vld [vmem:[%s138 + $0x2d8] sm:$0xff]
      %v292 = vld [vmem:[%s138 + $0x2e0] sm:$0xff]
      %v293 = vld [vmem:[%s138 + $0x2e8] sm:$0xff]
      %v294 = vld [vmem:[%s138 + $0x2f0] sm:$0xff]
      %v295 = vld [vmem:[%s138 + $0x2f8] sm:$0xff]
      %v296 = vld [vmem:[%s138 + $0x300] sm:$0xff]
      %v297 = vld [vmem:[%s138 + $0x308] sm:$0xff]
      %v298 = vld [vmem:[%s138 + $0x310] sm:$0xff]
      %v299 = vld [vmem:[%s138 + $0x318] sm:$0xff]
      %vm300 = vcmask 261120
      %v302 = vsel %vm300, %v150, 0
      %v305 = vsel %vm300, %v157, 0
      %v308 = vsel %vm300, %v164, 0
      %v311 = vsel %vm300, %v171, 0
      %v314 = vsel %vm300, %v178, 0
      %v317 = vsel %vm300, %v185, 0
      %v320 = vsel %vm300, %v192, 0
      %v323 = vsel %vm300, %v199, 0
      %325 = vmatprep.subr.mxu0 0.0
      %326 = vmatpush1.msra.mxu0 %v200
      %327 = vmatprep.subr.mxu0 0.0
      %328 = vmatpush1.msra.mxu0 %v201
      %329 = vmatprep.subr.mxu0 0.0
      %330 = vmatpush1.msra.mxu0 %v202
      %331 = vmatprep.subr.mxu0 0.0
      %332 = vmatpush1.msra.mxu0 %v203
      %333 = vmatprep.subr.mxu0 0.0
      %334 = vmatpush1.msra.mxu0 %v204
      %335 = vmatprep.subr.mxu0 0.0
      %336 = vmatpush1.msra.mxu0 %v205
      %337 = vmatprep.subr.mxu0 0.0
      %338 = vmatpush1.msra.mxu0 %v206
      %339 = vmatprep.subr.mxu0 0.0
      %340 = vmatpush1.msra.mxu0 %v207
      %341 = vmatprep.subr.mxu0 0.0
      %342 = vmatpush1.msra.mxu0 %v208
      %343 = vmatprep.subr.mxu0 0.0
      %344 = vmatpush1.msra.mxu0 %v209
      %345 = vmatprep.subr.mxu0 0.0
      %346 = vmatpush1.msra.mxu0 %v210
      %347 = vmatprep.subr.mxu0 0.0
      %348 = vmatpush1.msra.mxu0 %v211
      %349 = vmatprep.subr.mxu0 0.0
      %350 = vmatpush1.msra.mxu0 %v212
      %351 = vmatprep.subr.mxu0 0.0
      %352 = vmatpush1.msra.mxu0 %v213
      %353 = vmatprep.subr.mxu0 0.0
      %354 = vmatpush1.msra.mxu0 %v214
      %355 = vmatprep.subr.mxu0 0.0
      %356 = vmatpush1.msra.mxu0 %v215
      %357 = vmatprep.subr.mxu0 0.0
      %358 = vmatpush1.msra.mxu0 %v216
      %359 = vmatprep.subr.mxu0 0.0
      %360 = vmatpush1.msra.mxu0 %v217
      %361 = vmatprep.subr.mxu0 0.0
      %362 = vmatpush1.msra.mxu0 %v218
      %363 = vmatprep.subr.mxu0 0.0
      %364 = vmatpush1.msra.mxu0 %v219
      %365 = vmatprep.subr.mxu0 0.0
      %366 = vmatpush1.msra.mxu0 %v220
      %367 = vmatprep.subr.mxu0 0.0
      %368 = vmatpush1.msra.mxu0 %v221
      %369 = vmatprep.subr.mxu0 0.0
      %370 = vmatpush1.msra.mxu0 %v222
      %371 = vmatprep.subr.mxu0 0.0
      %372 = vmatpush1.msra.mxu0 %v223
      %373 = vmatprep.subr.mxu0 0.0
      %374 = vmatpush1.msra.mxu0 %v224
      %375 = vmatprep.subr.mxu0 0.0
      %376 = vmatpush1.msra.mxu0 %v225
      %377 = vmatprep.subr.mxu0 0.0
      %378 = vmatpush1.msra.mxu0 %v226
      %379 = vmatprep.subr.mxu0 0.0
      %380 = vmatpush1.msra.mxu0 %v227
      %381 = vmatprep.subr.mxu0 0.0
      %382 = vmatpush1.msra.mxu0 %v228
      %383 = vmatprep.subr.mxu0 0.0
      %384 = vmatpush1.msra.mxu0 %v229
      %385 = vmatprep.subr.mxu0 0.0
      %386 = vmatpush1.msra.mxu0 %v230
      %387 = vmatprep.subr.mxu0 0.0
      %388 = vmatpush1.msra.mxu0 %v231
      %389 = vmatprep.mubr.f32.mxu0 %v145
      %390 = vmatmul.mubr.f32.gmra.mrb[0].mxu0 %v144
      %v391 = vpop.f32.mrb[0].mxu0
      %v392 = vadd.f32 0.0, %v391
      %v393 = vpop.f32.mrb[0].mxu0
      %394 = vmatprep.mubr.f32.mxu0 %v152
      %395 = vmatmul.mubr.f32.gmra.mrb[0].mxu0 %v151
      %v396 = vpop.f32.mrb[0].mxu0
      %v397 = vadd.f32 0.0, %v396
      %v398 = vpop.f32.mrb[0].mxu0
      %399 = vmatprep.mubr.f32.mxu0 %v159
      %400 = vmatmul.mubr.f32.gmra.mrb[0].mxu0 %v158
      %v401 = vpop.f32.mrb[0].mxu0
      %v402 = vadd.f32 0.0, %v401
      %v403 = vpop.f32.mrb[0].mxu0
      %404 = vmatprep.mubr.f32.mxu0 %v166
      %405 = vmatmul.mubr.f32.gmra.mrb[0].mxu0 %v165
      %v406 = vpop.f32.mrb[0].mxu0
      %v407 = vadd.f32 0.0, %v406
      %v408 = vpop.f32.mrb[0].mxu0
      %409 = vmatprep.mubr.f32.mxu0 %v173
      %410 = vmatmul.mubr.f32.gmra.mrb[0].mxu0 %v172
      %v411 = vpop.f32.mrb[0].mxu0
      %v412 = vadd.f32 0.0, %v411
      %v413 = vpop.f32.mrb[0].mxu0
      %414 = vmatprep.mubr.f32.mxu0 %v180
      %415 = vmatmul.mubr.f32.gmra.mrb[0].mxu0 %v179
      %v416 = vpop.f32.mrb[0].mxu0
      %v417 = vadd.f32 0.0, %v416
      %v418 = vpop.f32.mrb[0].mxu0
      %419 = vmatprep.mubr.f32.mxu0 %v187
      %420 = vmatmul.mubr.f32.gmra.mrb[0].mxu0 %v186
      %v421 = vpop.f32.mrb[0].mxu0
      %v422 = vadd.f32 0.0, %v421
      %v423 = vpop.f32.mrb[0].mxu0
      %424 = vmatprep.mubr.f32.mxu0 %v194
      %425 = vmatmul.mubr.f32.gmra.mrb[0].mxu0 %v193
      %v426 = vpop.f32.mrb[0].mxu0
      %v427 = vadd.f32 0.0, %v426
      %v428 = vpop.f32.mrb[0].mxu0
      %429 = vdwg.mxu0
      %430 = vmatprep.subr.mxu0 0.0
      %431 = vmatpush1.msra.mxu0 %v232
      %432 = vmatprep.subr.mxu0 0.0
      %433 = vmatpush1.msra.mxu0 %v233
      %434 = vmatprep.subr.mxu0 0.0
      %435 = vmatpush1.msra.mxu0 %v234
      %436 = vmatprep.subr.mxu0 0.0
      %437 = vmatpush1.msra.mxu0 %v235
      %438 = vmatprep.subr.mxu0 0.0
      %439 = vmatpush1.msra.mxu0 %v236
      %440 = vmatprep.subr.mxu0 0.0
      %441 = vmatpush1.msra.mxu0 %v237
      %442 = vmatprep.subr.mxu0 0.0
      %443 = vmatpush1.msra.mxu0 %v238
      %444 = vmatprep.subr.mxu0 0.0
      %445 = vmatpush1.msra.mxu0 %v239
      %446 = vmatprep.subr.mxu0 0.0
      %447 = vmatpush1.msra.mxu0 %v240
      %448 = vmatprep.subr.mxu0 0.0
      %449 = vmatpush1.msra.mxu0 %v241
      %450 = vmatprep.subr.mxu0 0.0
      %451 = vmatpush1.msra.mxu0 %v242
      %452 = vmatprep.subr.mxu0 0.0
      %453 = vmatpush1.msra.mxu0 %v243
      %454 = vmatprep.subr.mxu0 0.0
      %455 = vmatpush1.msra.mxu0 %v244
      %456 = vmatprep.subr.mxu0 0.0
      %457 = vmatpush1.msra.mxu0 %v245
      %458 = vmatprep.subr.mxu0 0.0
      %459 = vmatpush1.msra.mxu0 %v246
      %460 = vmatprep.subr.mxu0 0.0
      %461 = vmatpush1.msra.mxu0 %v247
      %462 = vmatprep.subr.mxu0 0.0
      %463 = vmatpush1.msra.mxu0 %v248
      %464 = vmatprep.subr.mxu0 0.0
      %465 = vmatpush1.msra.mxu0 %v249
      %466 = vmatprep.subr.mxu0 0.0
      %467 = vmatpush1.msra.mxu0 %v250
      %468 = vmatprep.subr.mxu0 0.0
      %469 = vmatpush1.msra.mxu0 %v251
      %470 = vmatprep.subr.mxu0 0.0
      %471 = vmatpush1.msra.mxu0 %v252
      %472 = vmatprep.subr.mxu0 0.0
      %473 = vmatpush1.msra.mxu0 %v253
      %474 = vmatprep.subr.mxu0 0.0
      %475 = vmatpush1.msra.mxu0 %v254
      %476 = vmatprep.subr.mxu0 0.0
      %477 = vmatpush1.msra.mxu0 %v255
      %478 = vmatprep.subr.mxu0 0.0
      %479 = vmatpush1.msra.mxu0 %v256
      %480 = vmatprep.subr.mxu0 0.0
      %481 = vmatpush1.msra.mxu0 %v257
      %482 = vmatprep.subr.mxu0 0.0
      %483 = vmatpush1.msra.mxu0 %v258
      %484 = vmatprep.subr.mxu0 0.0
      %485 = vmatpush1.msra.mxu0 %v259
      %486 = vmatprep.subr.mxu0 0.0
      %487 = vmatpush1.msra.mxu0 %v260
      %488 = vmatprep.subr.mxu0 0.0
      %489 = vmatpush1.msra.mxu0 %v261
      %490 = vmatprep.subr.mxu0 0.0
      %491 = vmatpush1.msra.mxu0 %v262
      %492 = vmatprep.subr.mxu0 0.0
      %493 = vmatpush1.msra.mxu0 %v263
      %494 = vmatprep.mubr.f32.mxu0 %v147
      %495 = vmatmul.mubr.f32.gmra.mrb[0].mxu0 %v146
      %v496 = vpop.f32.mrb[0].mxu0
      %v497 = vadd.f32 %v392, %v496
      %v498 = vpop.f32.mrb[0].mxu0
      %499 = vmatprep.mubr.f32.mxu0 %v154
      %500 = vmatmul.mubr.f32.gmra.mrb[0].mxu0 %v153
      %v501 = vpop.f32.mrb[0].mxu0
      %v502 = vadd.f32 %v397, %v501
      %v503 = vpop.f32.mrb[0].mxu0
      %504 = vmatprep.mubr.f32.mxu0 %v161
      %505 = vmatmul.mubr.f32.gmra.mrb[0].mxu0 %v160
      %v506 = vpop.f32.mrb[0].mxu0
      %v507 = vadd.f32 %v402, %v506
      %v508 = vpop.f32.mrb[0].mxu0
      %509 = vmatprep.mubr.f32.mxu0 %v168
      %510 = vmatmul.mubr.f32.gmra.mrb[0].mxu0 %v167
      %v511 = vpop.f32.mrb[0].mxu0
      %v512 = vadd.f32 %v407, %v511
      %v513 = vpop.f32.mrb[0].mxu0
      %514 = vmatprep.mubr.f32.mxu0 %v175
      %515 = vmatmul.mubr.f32.gmra.mrb[0].mxu0 %v174
      %v516 = vpop.f32.mrb[0].mxu0
      %v517 = vadd.f32 %v412, %v516
      %v518 = vpop.f32.mrb[0].mxu0
      %519 = vmatprep.mubr.f32.mxu0 %v182
      %520 = vmatmul.mubr.f32.gmra.mrb[0].mxu0 %v181
      %v521 = vpop.f32.mrb[0].mxu0
      %v522 = vadd.f32 %v417, %v521
      %v523 = vpop.f32.mrb[0].mxu0
      %524 = vmatprep.mubr.f32.mxu0 %v189
      %525 = vmatmul.mubr.f32.gmra.mrb[0].mxu0 %v188
      %v526 = vpop.f32.mrb[0].mxu0
      %v527 = vadd.f32 %v422, %v526
      %v528 = vpop.f32.mrb[0].mxu0
      %529 = vmatprep.mubr.f32.mxu0 %v196
      %530 = vmatmul.mubr.f32.gmra.mrb[0].mxu0 %v195
      %v531 = vpop.f32.mrb[0].mxu0
      %v532 = vadd.f32 %v427, %v531
      %v533 = vpop.f32.mrb[0].mxu0
      %534 = vdwg.mxu0
      %535 = vmatprep.subr.mxu0 0.0
      %536 = vmatpush1.msra.mxu0 %v264
      %537 = vmatprep.subr.mxu0 0.0
      %538 = vmatpush1.msra.mxu0 %v265
      %539 = vmatprep.subr.mxu0 0.0
      %540 = vmatpush1.msra.mxu0 %v266
      %541 = vmatprep.subr.mxu0 0.0
      %542 = vmatpush1.msra.mxu0 %v267
      %543 = vmatprep.subr.mxu0 0.0
      %544 = vmatpush1.msra.mxu0 %v268
      %545 = vmatprep.subr.mxu0 0.0
      %546 = vmatpush1.msra.mxu0 %v269
      %547 = vmatprep.subr.mxu0 0.0
      %548 = vmatpush1.msra.mxu0 %v270
      %549 = vmatprep.subr.mxu0 0.0
      %550 = vmatpush1.msra.mxu0 %v271
      %551 = vmatprep.subr.mxu0 0.0
      %552 = vmatpush1.msra.mxu0 %v272
      %553 = vmatprep.subr.mxu0 0.0
      %554 = vmatpush1.msra.mxu0 %v273
      %555 = vmatprep.subr.mxu0 0.0
      %556 = vmatpush1.msra.mxu0 %v274
      %557 = vmatprep.subr.mxu0 0.0
      %558 = vmatpush1.msra.mxu0 %v275
      %559 = vmatprep.subr.mxu0 0.0
      %560 = vmatpush1.msra.mxu0 %v276
      %561 = vmatprep.subr.mxu0 0.0
      %562 = vmatpush1.msra.mxu0 %v277
      %563 = vmatprep.subr.mxu0 0.0
      %564 = vmatpush1.msra.mxu0 %v278
      %565 = vmatprep.subr.mxu0 0.0
      %566 = vmatpush1.msra.mxu0 %v279
      %567 = vmatprep.subr.mxu0 0.0
      %568 = vmatpush1.msra.mxu0 %v280
      %569 = vmatprep.subr.mxu0 0.0
      %570 = vmatpush1.msra.mxu0 %v281
      %571 = vmatprep.subr.mxu0 0.0
      %572 = vmatpush1.msra.mxu0 %v282
      %573 = vmatprep.subr.mxu0 0.0
      %574 = vmatpush1.msra.mxu0 %v283
      %575 = vmatprep.subr.mxu0 0.0
      %576 = vmatpush1.msra.mxu0 %v284
      %577 = vmatprep.subr.mxu0 0.0
      %578 = vmatpush1.msra.mxu0 %v285
      %579 = vmatprep.subr.mxu0 0.0
      %580 = vmatpush1.msra.mxu0 %v286
      %581 = vmatprep.subr.mxu0 0.0
      %582 = vmatpush1.msra.mxu0 %v287
      %583 = vmatprep.subr.mxu0 0.0
      %584 = vmatpush1.msra.mxu0 %v288
      %585 = vmatprep.subr.mxu0 0.0
      %586 = vmatpush1.msra.mxu0 %v289
      %587 = vmatprep.subr.mxu0 0.0
      %588 = vmatpush1.msra.mxu0 %v290
      %589 = vmatprep.subr.mxu0 0.0
      %590 = vmatpush1.msra.mxu0 %v291
      %591 = vmatprep.subr.mxu0 0.0
      %592 = vmatpush1.msra.mxu0 %v292
      %593 = vmatprep.subr.mxu0 0.0
      %594 = vmatpush1.msra.mxu0 %v293
      %595 = vmatprep.subr.mxu0 0.0
      %596 = vmatpush1.msra.mxu0 %v294
      %597 = vmatprep.subr.mxu0 0.0
      %598 = vmatpush1.msra.mxu0 %v295
      %599 = vmatprep.mubr.f32.mxu0 %v149
      %600 = vmatmul.mubr.f32.gmra.mrb[0].mxu0 %v148
      %v601 = vpop.f32.mrb[0].mxu0
      %v602 = vadd.f32 %v497, %v601
      %v603 = vpop.f32.mrb[0].mxu0
      %604 = vmatprep.mubr.f32.mxu0 %v156
      %605 = vmatmul.mubr.f32.gmra.mrb[0].mxu0 %v155
      %v606 = vpop.f32.mrb[0].mxu0
      %v607 = vadd.f32 %v502, %v606
      %v608 = vpop.f32.mrb[0].mxu0
      %609 = vmatprep.mubr.f32.mxu0 %v163
      %610 = vmatmul.mubr.f32.gmra.mrb[0].mxu0 %v162
      %v611 = vpop.f32.mrb[0].mxu0
      %v612 = vadd.f32 %v507, %v611
      %v613 = vpop.f32.mrb[0].mxu0
      %614 = vmatprep.mubr.f32.mxu0 %v170
      %615 = vmatmul.mubr.f32.gmra.mrb[0].mxu0 %v169
      %v616 = vpop.f32.mrb[0].mxu0
      %v617 = vadd.f32 %v512, %v616
      %v618 = vpop.f32.mrb[0].mxu0
      %619 = vmatprep.mubr.f32.mxu0 %v177
      %620 = vmatmul.mubr.f32.gmra.mrb[0].mxu0 %v176
      %v621 = vpop.f32.mrb[0].mxu0
      %v622 = vadd.f32 %v517, %v621
      %v623 = vpop.f32.mrb[0].mxu0
      %624 = vmatprep.mubr.f32.mxu0 %v184
      %625 = vmatmul.mubr.f32.gmra.mrb[0].mxu0 %v183
      %v626 = vpop.f32.mrb[0].mxu0
      %v627 = vadd.f32 %v522, %v626
      %v628 = vpop.f32.mrb[0].mxu0
      %629 = vmatprep.mubr.f32.mxu0 %v191
      %630 = vmatmul.mubr.f32.gmra.mrb[0].mxu0 %v190
      %v631 = vpop.f32.mrb[0].mxu0
      %v632 = vadd.f32 %v527, %v631
      %v633 = vpop.f32.mrb[0].mxu0
      %634 = vmatprep.mubr.f32.mxu0 %v198
      %635 = vmatmul.mubr.f32.gmra.mrb[0].mxu0 %v197
      %v636 = vpop.f32.mrb[0].mxu0
      %v637 = vadd.f32 %v532, %v636
      %v638 = vpop.f32.mrb[0].mxu0
      %639 = vdwg.mxu0
      %640 = vmatprep.subr.mxu0 0.0
      %641 = vmatpush1.msra.mxu0 %v296
      %642 = vmatprep.subr.mxu0 0.0
      %643 = vmatpush1.msra.mxu0 %v297
      %644 = vmatprep.subr.mxu0 0.0
      %645 = vmatpush1.msra.mxu0 %v298
      %646 = vmatprep.subr.mxu0 0.0
      %647 = vmatpush1.msra.mxu0 %v299
      %648 = vmatprep.subr.mxu0 0.0
      %649 = vmatpush1.msra.mxu0 0.0
      %650 = vmatprep.subr.mxu0 0.0
      %651 = vmatpush1.msra.mxu0 0.0
      %652 = vmatprep.subr.mxu0 0.0
      %653 = vmatpush1.msra.mxu0 0.0
      %654 = vmatprep.subr.mxu0 0.0
      %655 = vmatpush1.msra.mxu0 0.0
      %656 = vmatprep.subr.mxu0 0.0
      %657 = vmatpush1.msra.mxu0 0.0
      %658 = vmatprep.subr.mxu0 0.0
      %659 = vmatpush1.msra.mxu0 0.0
      %660 = vmatprep.subr.mxu0 0.0
      %661 = vmatpush1.msra.mxu0 0.0
      %662 = vmatprep.subr.mxu0 0.0
      %663 = vmatpush1.msra.mxu0 0.0
      %664 = vmatprep.subr.mxu0 0.0
      %665 = vmatpush1.msra.mxu0 0.0
      %666 = vmatprep.subr.mxu0 0.0
      %667 = vmatpush1.msra.mxu0 0.0
      %668 = vmatprep.subr.mxu0 0.0
      %669 = vmatpush1.msra.mxu0 0.0
      %670 = vmatprep.subr.mxu0 0.0
      %671 = vmatpush1.msra.mxu0 0.0
      %672 = vmatprep.subr.mxu0 0.0
      %673 = vmatpush1.msra.mxu0 0.0
      %674 = vmatprep.subr.mxu0 0.0
      %675 = vmatpush1.msra.mxu0 0.0
      %676 = vmatprep.subr.mxu0 0.0
      %677 = vmatpush1.msra.mxu0 0.0
      %678 = vmatprep.subr.mxu0 0.0
      %679 = vmatpush1.msra.mxu0 0.0
      %680 = vmatprep.subr.mxu0 0.0
      %681 = vmatpush1.msra.mxu0 0.0
      %682 = vmatprep.subr.mxu0 0.0
      %683 = vmatpush1.msra.mxu0 0.0
      %684 = vmatprep.subr.mxu0 0.0
      %685 = vmatpush1.msra.mxu0 0.0
      %686 = vmatprep.subr.mxu0 0.0
      %687 = vmatpush1.msra.mxu0 0.0
      %688 = vmatprep.subr.mxu0 0.0
      %689 = vmatpush1.msra.mxu0 0.0
      %690 = vmatprep.subr.mxu0 0.0
      %691 = vmatpush1.msra.mxu0 0.0
      %692 = vmatprep.subr.mxu0 0.0
      %693 = vmatpush1.msra.mxu0 0.0
      %694 = vmatprep.subr.mxu0 0.0
      %695 = vmatpush1.msra.mxu0 0.0
      %696 = vmatprep.subr.mxu0 0.0
      %697 = vmatpush1.msra.mxu0 0.0
      %698 = vmatprep.subr.mxu0 0.0
      %699 = vmatpush1.msra.mxu0 0.0
      %700 = vmatprep.subr.mxu0 0.0
      %701 = vmatpush1.msra.mxu0 0.0
      %702 = vmatprep.subr.mxu0 0.0
      %703 = vmatpush1.msra.mxu0 0.0
      %704 = vmatprep.mubr.f32.mxu0 0.0
      %705 = vmatmul.mubr.f32.gmra.mrb[0].mxu0 %v302
      %v706 = vpop.f32.mrb[0].mxu0
      %v707 = vadd.f32 %v602, %v706
      %v708 = vpop.f32.mrb[0].mxu0
      %709 = vmatprep.mubr.f32.mxu0 0.0
      %710 = vmatmul.mubr.f32.gmra.mrb[0].mxu0 %v305
      %v711 = vpop.f32.mrb[0].mxu0
      %v712 = vadd.f32 %v607, %v711
      %v713 = vpop.f32.mrb[0].mxu0
      %714 = vmatprep.mubr.f32.mxu0 0.0
      %715 = vmatmul.mubr.f32.gmra.mrb[0].mxu0 %v308
      %v716 = vpop.f32.mrb[0].mxu0
      %v717 = vadd.f32 %v612, %v716
      %v718 = vpop.f32.mrb[0].mxu0
      %719 = vmatprep.mubr.f32.mxu0 0.0
      %720 = vmatmul.mubr.f32.gmra.mrb[0].mxu0 %v311
      %v721 = vpop.f32.mrb[0].mxu0
      %v722 = vadd.f32 %v617, %v721
      %v723 = vpop.f32.mrb[0].mxu0
      %724 = vmatprep.mubr.f32.mxu0 0.0
      %725 = vmatmul.mubr.f32.gmra.mrb[0].mxu0 %v314
      %v726 = vpop.f32.mrb[0].mxu0
      %v727 = vadd.f32 %v622, %v726
      %v728 = vpop.f32.mrb[0].mxu0
      %729 = vmatprep.mubr.f32.mxu0 0.0
      %730 = vmatmul.mubr.f32.gmra.mrb[0].mxu0 %v317
      %v731 = vpop.f32.mrb[0].mxu0
      %v732 = vadd.f32 %v627, %v731
      %v733 = vpop.f32.mrb[0].mxu0
      %734 = vmatprep.mubr.f32.mxu0 0.0
      %735 = vmatmul.mubr.f32.gmra.mrb[0].mxu0 %v320
      %v736 = vpop.f32.mrb[0].mxu0
      %v737 = vadd.f32 %v632, %v736
      %v738 = vpop.f32.mrb[0].mxu0
      %739 = vmatprep.mubr.f32.mxu0 0.0
      %740 = vmatmul.mubr.f32.gmra.mrb[0].mxu0 %v323
      %v741 = vpop.f32.mrb[0].mxu0
      %v742 = vadd.f32 %v637, %v741
      %v743 = vpop.f32.mrb[0].mxu0
      %744 = vdwg.mxu0
      %vm745 = vcmask 293888
      %v746 = vsel %vm745, %v707, 0.0
      %747 = vadd.xlane.f32.xlu0 %v746
      %v748 = vpop.xlane.xlu0 %747
      %v749 = vsel %vm745, %v712, 0.0
      %750 = vadd.xlane.f32.xlu0 %v749
      %v751 = vpop.xlane.xlu0 %750
      %v752 = vsel %vm745, %v717, 0.0
      %753 = vadd.xlane.f32.xlu0 %v752
      %v754 = vpop.xlane.xlu0 %753
      %v755 = vsel %vm745, %v722, 0.0
      %756 = vadd.xlane.f32.xlu0 %v755
      %v757 = vpop.xlane.xlu0 %756
      %v758 = vsel %vm745, %v727, 0.0
      %759 = vadd.xlane.f32.xlu0 %v758
      %v760 = vpop.xlane.xlu0 %759
      %v761 = vsel %vm745, %v732, 0.0
      %762 = vadd.xlane.f32.xlu0 %v761
      %v763 = vpop.xlane.xlu0 %762
      %v764 = vsel %vm745, %v737, 0.0
      %765 = vadd.xlane.f32.xlu0 %v764
      %v766 = vpop.xlane.xlu0 %765
      %v767 = vsel %vm745, %v742, 0.0
      %768 = vadd.xlane.f32.xlu0 %v767
      %v769 = vpop.xlane.xlu0 %768
      %v770 = vrcp.pop 36.0
      %v771 = vmul.f32 %v748, %v770
      %v772 = vmul.f32 %v751, %v770
      %v773 = vmul.f32 %v754, %v770
      %v774 = vmul.f32 %v757, %v770
      %v775 = vmul.f32 %v760, %v770
      %v776 = vmul.f32 %v763, %v770
      %v777 = vmul.f32 %v766, %v770
      %v778 = vmul.f32 %v769, %v770
      %v779 = vmul.f32 %v707, %v707
      %v780 = vmul.f32 %v712, %v712
      %v781 = vmul.f32 %v717, %v717
      %v782 = vmul.f32 %v722, %v722
      %v783 = vmul.f32 %v727, %v727
      %v784 = vmul.f32 %v732, %v732
      %v785 = vmul.f32 %v737, %v737
      %v786 = vmul.f32 %v742, %v742
      %v787 = vsel %vm745, %v779, 0.0
      %788 = vadd.xlane.f32.xlu0 %v787
      %v789 = vpop.xlane.xlu0 %788
      %v790 = vsel %vm745, %v780, 0.0
      %791 = vadd.xlane.f32.xlu0 %v790
      %v792 = vpop.xlane.xlu0 %791
      %v793 = vsel %vm745, %v781, 0.0
      %794 = vadd.xlane.f32.xlu0 %v793
      %v795 = vpop.xlane.xlu0 %794
      %v796 = vsel %vm745, %v782, 0.0
      %797 = vadd.xlane.f32.xlu0 %v796
      %v798 = vpop.xlane.xlu0 %797
      %v799 = vsel %vm745, %v783, 0.0
      %800 = vadd.xlane.f32.xlu0 %v799
      %v801 = vpop.xlane.xlu0 %800
      %v802 = vsel %vm745, %v784, 0.0
      %803 = vadd.xlane.f32.xlu0 %v802
      %v804 = vpop.xlane.xlu0 %803
      %v805 = vsel %vm745, %v785, 0.0
      %806 = vadd.xlane.f32.xlu0 %v805
      %v807 = vpop.xlane.xlu0 %806
      %v808 = vsel %vm745, %v786, 0.0
      %809 = vadd.xlane.f32.xlu0 %v808
      %v810 = vpop.xlane.xlu0 %809
      %v811 = vmul.f32 %v789, %v770
      %v812 = vmul.f32 %v792, %v770
      %v813 = vmul.f32 %v795, %v770
      %v814 = vmul.f32 %v798, %v770
      %v815 = vmul.f32 %v801, %v770
      %v816 = vmul.f32 %v804, %v770
      %v817 = vmul.f32 %v807, %v770
      %v818 = vmul.f32 %v810, %v770
      %v819 = vmul.f32 %v771, %v771
      %v820 = vmul.f32 %v772, %v772
      %v821 = vmul.f32 %v773, %v773
      %v822 = vmul.f32 %v774, %v774
      %v823 = vmul.f32 %v775, %v775
      %v824 = vmul.f32 %v776, %v776
      %v825 = vmul.f32 %v777, %v777
      %v826 = vmul.f32 %v778, %v778
      %v827 = vsub.f32 %v811, %v819
      %v828 = vsub.f32 %v812, %v820
      %v829 = vsub.f32 %v813, %v821
      %v830 = vsub.f32 %v814, %v822
      %v831 = vsub.f32 %v815, %v823
      %v832 = vsub.f32 %v816, %v824
      %v833 = vsub.f32 %v817, %v825
      %v834 = vsub.f32 %v818, %v826
      %v835 = vmax.f32 %v827, 0.0
      %v836 = vmax.f32 %v828, 0.0
      %v837 = vmax.f32 %v829, 0.0
      %v838 = vmax.f32 %v830, 0.0
      %v839 = vmax.f32 %v831, 0.0
      %v840 = vmax.f32 %v832, 0.0
      %v841 = vmax.f32 %v833, 0.0
      %v842 = vmax.f32 %v834, 0.0
      %v843 = vsub.f32 %v707, %v771
      %v844 = vsub.f32 %v712, %v772
      %v845 = vsub.f32 %v717, %v773
      %v846 = vsub.f32 %v722, %v774
      %v847 = vsub.f32 %v727, %v775
      %v848 = vsub.f32 %v732, %v776
      %v849 = vsub.f32 %v737, %v777
      %v850 = vsub.f32 %v742, %v778
      %v851 = vadd.f32 %v835, 1e-05
      %v852 = vadd.f32 %v836, 1e-05
      %v853 = vadd.f32 %v837, 1e-05
      %v854 = vadd.f32 %v838, 1e-05
      %v855 = vadd.f32 %v839, 1e-05
      %v856 = vadd.f32 %v840, 1e-05
      %v857 = vadd.f32 %v841, 1e-05
      %v858 = vadd.f32 %v842, 1e-05
      %v859 = vrsqrt.pop %v851
      %v860 = vrsqrt.pop %v852
      %v861 = vrsqrt.pop %v853
      %v862 = vrsqrt.pop %v854
      %v863 = vrsqrt.pop %v855
      %v864 = vrsqrt.pop %v856
      %v865 = vrsqrt.pop %v857
      %v866 = vrsqrt.pop %v858
      %v867 = vmul.f32 %v843, %v859
      %v868 = vmul.f32 %v844, %v860
      %v869 = vmul.f32 %v845, %v861
      %v870 = vmul.f32 %v846, %v862
      %v871 = vmul.f32 %v847, %v863
      %v872 = vmul.f32 %v848, %v864
      %v873 = vmul.f32 %v849, %v865
      %v874 = vmul.f32 %v850, %v866
      %v875 = vmax.f32 %v867, 0.0
      %v876 = vmax.f32 %v868, 0.0
      %v877 = vmax.f32 %v869, 0.0
      %v878 = vmax.f32 %v870, 0.0
      %v879 = vmax.f32 %v871, 0.0
      %v880 = vmax.f32 %v872, 0.0
      %v881 = vmax.f32 %v873, 0.0
      %v882 = vmax.f32 %v874, 0.0
      %883 = vst.msk [vmem:[%s143] sm:$0xff] %vm745, %v875
      %884 = vst.msk [vmem:[%s143 + $0x8] sm:$0xff] %vm745, %v876
      %885 = vst.msk [vmem:[%s143 + $0x10] sm:$0xff] %vm745, %v877
      %886 = vst.msk [vmem:[%s143 + $0x18] sm:$0xff] %vm745, %v878
      %887 = vst.msk [vmem:[%s143 + $0x20] sm:$0xff] %vm745, %v879
      %888 = vst.msk [vmem:[%s143 + $0x28] sm:$0xff] %vm745, %v880
      %889 = vst.msk [vmem:[%s143 + $0x30] sm:$0xff] %vm745, %v881
      %890 = vst.msk [vmem:[%s143 + $0x38] sm:$0xff] %vm745, %v882
      %p891 = scmp.lt.s32.totalorder %s13, 1
      %s892 = scalar_select %p891, %s13, 1
      %s893 = smul.addr %s892, 8
      %s894 = smul.addr %s893, 8
      %s895 = scalar_lea.vmem %s2, %s894
      // Predicated region
      $region29: #{encoder_forward.6} parent=27 // pred_check
        %p896 = pneg %p78
      $region30: #{encoder_forward.6} parent=27 // pred_check_branch
        %898 = sbr.rel (%p896) target = $region32
      $region31: #{encoder_forward.6} parent=27 // pred_region
        _
      $region32: #{encoder_forward.6} parent=27 // pred_fallthru
        _
    $region28: #{encoder_forward.6} parent=5 // pred_fallthru
      _
    %p899 = scmp.le.s32.totalorder 2, %s8
    // Predicated region
    $region33: #{encoder_forward.6} parent=5 // pred_check
      %p900 = pneg %p899
    $region34: #{encoder_forward.6} parent=5 // pred_check_branch
      %902 = sbr.rel (%p900) target = $region36
    $region35: #{encoder_forward.6} parent=5 // pred_region
      %s903 = ssub.s32 %s8, 2
      // Predicated region
      $region37: #{encoder_forward.6} parent=35 // pred_check
        %p904 = pneg %p84
      $region38: #{encoder_forward.6} parent=35 // pred_check_branch
        %906 = sbr.rel (%p904) target = $region40
      $region39: #{encoder_forward.6} parent=35 // pred_region
        %p907 = scmp.lt.s32.totalorder %s14, 1
        %s908 = scalar_select %p907, %s14, 1
        %s909 = smul.addr %s908, 8
        %s910 = smul.addr %s909, 8
        %s911 = scalar_lea.vmem %s2, %s910
      $region40: #{encoder_forward.6} parent=35 // pred_fallthru
        _
    $region36: #{encoder_forward.6} parent=5 // pred_fallthru
      _
  $region6: #{encoder_forward.6} parent=0 // loop_footer
    %s12 = sadd.s32 1, %s8
  $region7: #{encoder_forward.6} parent=0 // loop_footer_branch
    %7 = sbr.rel target = $region3
  $region8: #{encoder_forward.6} parent=0 // loop_exit
    _

// kernel: encoder_forward.7
$region0: #{encoder_forward.7}
  #allocation0 [shape = 'u32[]', space=smem, size = 0x4, offset = 0x4, fixed_abs, tag = 'smem constant byte address 0x4 - core index']
  #allocation1 [shape = 'u32[144,128]{1,0:T(1,128)}', space=vmem, size = 0x12000, scoped, tag = 'internal scratch']
  %s0 = inlined_call_operand.vmem [shape: f32[8,1600], index: 0, kind: input, shape index: {}]
  %s1 = inlined_call_operand.vmem [shape: f32[1600,128], index: 1, kind: input, shape index: {}]
  %s2 = inlined_call_operand.vmem [shape: f32[4,128,32], index: 2, kind: input, shape index: {}]
  %s3 = inlined_call_operand.vmem [shape: f32[1,32], index: 3, kind: input, shape index: {}]
  %s4 = inlined_call_operand.vmem [shape: f32[2,32], index: 4, kind: output, shape index: {}]
  %s5 = sld [smem:[#allocation0]]
  $region26: #{encoder_forward.7} parent=0
    _
  %s7 = ssub.s32 1, %s5
  %s8 = scalar_select 0, %s7, %s5
  // Predicated region
  $region2: #{encoder_forward.7} parent=0 // pred_check
    _
  $region3: #{encoder_forward.7} parent=0 // pred_check_branch
    %10 = sbr.rel (0) target = $region5
  $region4: #{encoder_forward.7} parent=0 // pred_region
    _
  $region5: #{encoder_forward.7} parent=0 // pred_fallthru
    _
  // Predicated region
  $region6: #{encoder_forward.7} parent=0 // pred_check
    _
  $region7: #{encoder_forward.7} parent=0 // pred_check_branch
    %12 = sbr.rel (0) target = $region9
  $region8: #{encoder_forward.7} parent=0 // pred_region
    _
  $region9: #{encoder_forward.7} parent=0 // pred_fallthru
    _
  // Predicated region
  $region10: #{encoder_forward.7} parent=0 // pred_check
    _
  $region11: #{encoder_forward.7} parent=0 // pred_check_branch
    %14 = sbr.rel (0) target = $region13
  $region12: #{encoder_forward.7} parent=0 // pred_region
    _
  $region13: #{encoder_forward.7} parent=0 // pred_fallthru
    _
  // Predicated region
  $region14: #{encoder_forward.7} parent=0 // pred_check
    _
  $region15: #{encoder_forward.7} parent=0 // pred_check_branch
    %16 = sbr.rel (0) target = $region17
  $region16: #{encoder_forward.7} parent=0 // pred_region
    _
  $region17: #{encoder_forward.7} parent=0 // pred_fallthru
    _
  %v17 = vld [vmem:[%s0] sm:$0xff]
  %v18 = vld [vmem:[%s0 + $0x8] sm:$0xff]
  %v19 = vld [vmem:[%s0 + $0x10] sm:$0xff]
  %v20 = vld [vmem:[%s0 + $0x18] sm:$0xff]
  %v21 = vld [vmem:[%s0 + $0x20] sm:$0xff]
  %v22 = vld [vmem:[%s0 + $0x28] sm:$0xff]
  %v23 = vld [vmem:[%s0 + $0x30] sm:$0xff]
  %v24 = vld [vmem:[%s0 + $0x38] sm:$0xff]
  %v25 = vld [vmem:[%s0 + $0x40] sm:$0xff]
  %v26 = vld [vmem:[%s0 + $0x48] sm:$0xff]
  %v27 = vld [vmem:[%s0 + $0x50] sm:$0xff]
  %v28 = vld [vmem:[%s0 + $0x58] sm:$0xff]
  %v29 = vld [vmem:[%s0 + $0x60] sm:$0xff]
  %v30 = vld [vmem:[%s1] sm:$0xff]
  %v31 = vld [vmem:[%s1 + $0x8] sm:$0xff]
  %v32 = vld [vmem:[%s1 + $0x10] sm:$0xff]
  %v33 = vld [vmem:[%s1 + $0x18] sm:$0xff]
  %v34 = vld [vmem:[%s1 + $0x20] sm:$0xff]
  %v35 = vld [vmem:[%s1 + $0x28] sm:$0xff]
  %v36 = vld [vmem:[%s1 + $0x30] sm:$0xff]
  %v37 = vld [vmem:[%s1 + $0x38] sm:$0xff]
  %v38 = vld [vmem:[%s1 + $0x40] sm:$0xff]
  %v39 = vld [vmem:[%s1 + $0x48] sm:$0xff]
  %v40 = vld [vmem:[%s1 + $0x50] sm:$0xff]
  %v41 = vld [vmem:[%s1 + $0x58] sm:$0xff]
  %v42 = vld [vmem:[%s1 + $0x60] sm:$0xff]
  %v43 = vld [vmem:[%s1 + $0x68] sm:$0xff]
  %v44 = vld [vmem:[%s1 + $0x70] sm:$0xff]
  %v45 = vld [vmem:[%s1 + $0x78] sm:$0xff]
  %v46 = vld [vmem:[%s1 + $0x80] sm:$0xff]
  %v47 = vld [vmem:[%s1 + $0x88] sm:$0xff]
  %v48 = vld [vmem:[%s1 + $0x90] sm:$0xff]
  %v49 = vld [vmem:[%s1 + $0x98] sm:$0xff]
  %v50 = vld [vmem:[%s1 + $0xa0] sm:$0xff]
  %v51 = vld [vmem:[%s1 + $0xa8] sm:$0xff]
  %v52 = vld [vmem:[%s1 + $0xb0] sm:$0xff]
  %v53 = vld [vmem:[%s1 + $0xb8] sm:$0xff]
  %v54 = vld [vmem:[%s1 + $0xc0] sm:$0xff]
  %v55 = vld [vmem:[%s1 + $0xc8] sm:$0xff]
  %v56 = vld [vmem:[%s1 + $0xd0] sm:$0xff]
  %v57 = vld [vmem:[%s1 + $0xd8] sm:$0xff]
  %v58 = vld [vmem:[%s1 + $0xe0] sm:$0xff]
  %v59 = vld [vmem:[%s1 + $0xe8] sm:$0xff]
  %v60 = vld [vmem:[%s1 + $0xf0] sm:$0xff]
  %v61 = vld [vmem:[%s1 + $0xf8] sm:$0xff]
  %v62 = vld [vmem:[%s1 + $0x100] sm:$0xff]
  %v63 = vld [vmem:[%s1 + $0x108] sm:$0xff]
  %v64 = vld [vmem:[%s1 + $0x110] sm:$0xff]
  %v65 = vld [vmem:[%s1 + $0x118] sm:$0xff]
  %v66 = vld [vmem:[%s1 + $0x120] sm:$0xff]
  %v67 = vld [vmem:[%s1 + $0x128] sm:$0xff]
  %v68 = vld [vmem:[%s1 + $0x130] sm:$0xff]
  %v69 = vld [vmem:[%s1 + $0x138] sm:$0xff]
  %v70 = vld [vmem:[%s1 + $0x140] sm:$0xff]
  %v71 = vld [vmem:[%s1 + $0x148] sm:$0xff]
  %v72 = vld [vmem:[%s1 + $0x150] sm:$0xff]
  %v73 = vld [vmem:[%s1 + $0x158] sm:$0xff]
  %v74 = vld [vmem:[%s1 + $0x160] sm:$0xff]
  %v75 = vld [vmem:[%s1 + $0x168] sm:$0xff]
  %v76 = vld [vmem:[%s1 + $0x170] sm:$0xff]
  %v77 = vld [vmem:[%s1 + $0x178] sm:$0xff]
  %v78 = vld [vmem:[%s1 + $0x180] sm:$0xff]
  %v79 = vld [vmem:[%s1 + $0x188] sm:$0xff]
  %v80 = vld [vmem:[%s1 + $0x190] sm:$0xff]
  %v81 = vld [vmem:[%s1 + $0x198] sm:$0xff]
  %v82 = vld [vmem:[%s1 + $0x1a0] sm:$0xff]
  %v83 = vld [vmem:[%s1 + $0x1a8] sm:$0xff]
  %v84 = vld [vmem:[%s1 + $0x1b0] sm:$0xff]
  %v85 = vld [vmem:[%s1 + $0x1b8] sm:$0xff]
  %v86 = vld [vmem:[%s1 + $0x1c0] sm:$0xff]
  %v87 = vld [vmem:[%s1 + $0x1c8] sm:$0xff]
  %v88 = vld [vmem:[%s1 + $0x1d0] sm:$0xff]
  %v89 = vld [vmem:[%s1 + $0x1d8] sm:$0xff]
  %v90 = vld [vmem:[%s1 + $0x1e0] sm:$0xff]
  %v91 = vld [vmem:[%s1 + $0x1e8] sm:$0xff]
  %v92 = vld [vmem:[%s1 + $0x1f0] sm:$0xff]
  %v93 = vld [vmem:[%s1 + $0x1f8] sm:$0xff]
  %v94 = vld [vmem:[%s1 + $0x200] sm:$0xff]
  %v95 = vld [vmem:[%s1 + $0x208] sm:$0xff]
  %v96 = vld [vmem:[%s1 + $0x210] sm:$0xff]
  %v97 = vld [vmem:[%s1 + $0x218] sm:$0xff]
  %v98 = vld [vmem:[%s1 + $0x220] sm:$0xff]
  %v99 = vld [vmem:[%s1 + $0x228] sm:$0xff]
  %v100 = vld [vmem:[%s1 + $0x230] sm:$0xff]
  %v101 = vld [vmem:[%s1 + $0x238] sm:$0xff]
  %v102 = vld [vmem:[%s1 + $0x240] sm:$0xff]
  %v103 = vld [vmem:[%s1 + $0x248] sm:$0xff]
  %v104 = vld [vmem:[%s1 + $0x250] sm:$0xff]
  %v105 = vld [vmem:[%s1 + $0x258] sm:$0xff]
  %v106 = vld [vmem:[%s1 + $0x260] sm:$0xff]
  %v107 = vld [vmem:[%s1 + $0x268] sm:$0xff]
  %v108 = vld [vmem:[%s1 + $0x270] sm:$0xff]
  %v109 = vld [vmem:[%s1 + $0x278] sm:$0xff]
  %v110 = vld [vmem:[%s1 + $0x280] sm:$0xff]
  %v111 = vld [vmem:[%s1 + $0x288] sm:$0xff]
  %v112 = vld [vmem:[%s1 + $0x290] sm:$0xff]
  %v113 = vld [vmem:[%s1 + $0x298] sm:$0xff]
  %v114 = vld [vmem:[%s1 + $0x2a0] sm:$0xff]
  %v115 = vld [vmem:[%s1 + $0x2a8] sm:$0xff]
  %v116 = vld [vmem:[%s1 + $0x2b0] sm:$0xff]
  %v117 = vld [vmem:[%s1 + $0x2b8] sm:$0xff]
  %v118 = vld [vmem:[%s1 + $0x2c0] sm:$0xff]
  %v119 = vld [vmem:[%s1 + $0x2c8] sm:$0xff]
  %v120 = vld [vmem:[%s1 + $0x2d0] sm:$0xff]
  %v121 = vld [vmem:[%s1 + $0x2d8] sm:$0xff]
  %v122 = vld [vmem:[%s1 + $0x2e0] sm:$0xff]
  %v123 = vld [vmem:[%s1 + $0x2e8] sm:$0xff]
  %v124 = vld [vmem:[%s1 + $0x2f0] sm:$0xff]
  %v125 = vld [vmem:[%s1 + $0x2f8] sm:$0xff]
  %v126 = vld [vmem:[%s1 + $0x300] sm:$0xff]
  %v127 = vld [vmem:[%s1 + $0x308] sm:$0xff]
  %v128 = vld [vmem:[%s1 + $0x310] sm:$0xff]
  %v129 = vld [vmem:[%s1 + $0x318] sm:$0xff]
  %v130 = vld [vmem:[%s1 + $0x320] sm:$0xff]
  %v131 = vld [vmem:[%s1 + $0x328] sm:$0xff]
  %v132 = vld [vmem:[%s1 + $0x330] sm:$0xff]
  %v133 = vld [vmem:[%s1 + $0x338] sm:$0xff]
  %v134 = vld [vmem:[%s1 + $0x340] sm:$0xff]
  %v135 = vld [vmem:[%s1 + $0x348] sm:$0xff]
  %v136 = vld [vmem:[%s1 + $0x350] sm:$0xff]
  %v137 = vld [vmem:[%s1 + $0x358] sm:$0xff]
  %v138 = vld [vmem:[%s1 + $0x360] sm:$0xff]
  %v139 = vld [vmem:[%s1 + $0x368] sm:$0xff]
  %v140 = vld [vmem:[%s1 + $0x370] sm:$0xff]
  %v141 = vld [vmem:[%s1 + $0x378] sm:$0xff]
  %v142 = vld [vmem:[%s1 + $0x380] sm:$0xff]
  %v143 = vld [vmem:[%s1 + $0x388] sm:$0xff]
  %v144 = vld [vmem:[%s1 + $0x390] sm:$0xff]
  %v145 = vld [vmem:[%s1 + $0x398] sm:$0xff]
  %v146 = vld [vmem:[%s1 + $0x3a0] sm:$0xff]
  %v147 = vld [vmem:[%s1 + $0x3a8] sm:$0xff]
  %v148 = vld [vmem:[%s1 + $0x3b0] sm:$0xff]
  %v149 = vld [vmem:[%s1 + $0x3b8] sm:$0xff]
  %v150 = vld [vmem:[%s1 + $0x3c0] sm:$0xff]
  %v151 = vld [vmem:[%s1 + $0x3c8] sm:$0xff]
  %v152 = vld [vmem:[%s1 + $0x3d0] sm:$0xff]
  %v153 = vld [vmem:[%s1 + $0x3d8] sm:$0xff]
  %v154 = vld [vmem:[%s1 + $0x3e0] sm:$0xff]
  %v155 = vld [vmem:[%s1 + $0x3e8] sm:$0xff]
  %v156 = vld [vmem:[%s1 + $0x3f0] sm:$0xff]
  %v157 = vld [vmem:[%s1 + $0x3f8] sm:$0xff]
  %v158 = vld [vmem:[%s1 + $0x400] sm:$0xff]
  %v159 = vld [vmem:[%s1 + $0x408] sm:$0xff]
  %v160 = vld [vmem:[%s1 + $0x410] sm:$0xff]
  %v161 = vld [vmem:[%s1 + $0x418] sm:$0xff]
  %v162 = vld [vmem:[%s1 + $0x420] sm:$0xff]
  %v163 = vld [vmem:[%s1 + $0x428] sm:$0xff]
  %v164 = vld [vmem:[%s1 + $0x430] sm:$0xff]
  %v165 = vld [vmem:[%s1 + $0x438] sm:$0xff]
  %v166 = vld [vmem:[%s1 + $0x440] sm:$0xff]
  %v167 = vld [vmem:[%s1 + $0x448] sm:$0xff]
  %v168 = vld [vmem:[%s1 + $0x450] sm:$0xff]
  %v169 = vld [vmem:[%s1 + $0x458] sm:$0xff]
  %v170 = vld [vmem:[%s1 + $0x460] sm:$0xff]
  %v171 = vld [vmem:[%s1 + $0x468] sm:$0xff]
  %v172 = vld [vmem:[%s1 + $0x470] sm:$0xff]
  %v173 = vld [vmem:[%s1 + $0x478] sm:$0xff]
  %v174 = vld [vmem:[%s1 + $0x480] sm:$0xff]
  %v175 = vld [vmem:[%s1 + $0x488] sm:$0xff]
  %v176 = vld [vmem:[%s1 + $0x490] sm:$0xff]
  %v177 = vld [vmem:[%s1 + $0x498] sm:$0xff]
  %v178 = vld [vmem:[%s1 + $0x4a0] sm:$0xff]
  %v179 = vld [vmem:[%s1 + $0x4a8] sm:$0xff]
  %v180 = vld [vmem:[%s1 + $0x4b0] sm:$0xff]
  %v181 = vld [vmem:[%s1 + $0x4b8] sm:$0xff]
  %v182 = vld [vmem:[%s1 + $0x4c0] sm:$0xff]
  %v183 = vld [vmem:[%s1 + $0x4c8] sm:$0xff]
  %v184 = vld [vmem:[%s1 + $0x4d0] sm:$0xff]
  %v185 = vld [vmem:[%s1 + $0x4d8] sm:$0xff]
  %v186 = vld [vmem:[%s1 + $0x4e0] sm:$0xff]
  %v187 = vld [vmem:[%s1 + $0x4e8] sm:$0xff]
  %v188 = vld [vmem:[%s1 + $0x4f0] sm:$0xff]
  %v189 = vld [vmem:[%s1 + $0x4f8] sm:$0xff]
  %v190 = vld [vmem:[%s1 + $0x500] sm:$0xff]
  %v191 = vld [vmem:[%s1 + $0x508] sm:$0xff]
  %v192 = vld [vmem:[%s1 + $0x510] sm:$0xff]
  %v193 = vld [vmem:[%s1 + $0x518] sm:$0xff]
  %v194 = vld [vmem:[%s1 + $0x520] sm:$0xff]
  %v195 = vld [vmem:[%s1 + $0x528] sm:$0xff]
  %v196 = vld [vmem:[%s1 + $0x530] sm:$0xff]
  %v197 = vld [vmem:[%s1 + $0x538] sm:$0xff]
  %v198 = vld [vmem:[%s1 + $0x540] sm:$0xff]
  %v199 = vld [vmem:[%s1 + $0x548] sm:$0xff]
  %v200 = vld [vmem:[%s1 + $0x550] sm:$0xff]
  %v201 = vld [vmem:[%s1 + $0x558] sm:$0xff]
  %v202 = vld [vmem:[%s1 + $0x560] sm:$0xff]
  %v203 = vld [vmem:[%s1 + $0x568] sm:$0xff]
  %v204 = vld [vmem:[%s1 + $0x570] sm:$0xff]
  %v205 = vld [vmem:[%s1 + $0x578] sm:$0xff]
  %v206 = vld [vmem:[%s1 + $0x580] sm:$0xff]
  %v207 = vld [vmem:[%s1 + $0x588] sm:$0xff]
  %v208 = vld [vmem:[%s1 + $0x590] sm:$0xff]
  %v209 = vld [vmem:[%s1 + $0x598] sm:$0xff]
  %v210 = vld [vmem:[%s1 + $0x5a0] sm:$0xff]
  %v211 = vld [vmem:[%s1 + $0x5a8] sm:$0xff]
  %v212 = vld [vmem:[%s1 + $0x5b0] sm:$0xff]
  %v213 = vld [vmem:[%s1 + $0x5b8] sm:$0xff]
  %v214 = vld [vmem:[%s1 + $0x5c0] sm:$0xff]
  %v215 = vld [vmem:[%s1 + $0x5c8] sm:$0xff]
  %v216 = vld [vmem:[%s1 + $0x5d0] sm:$0xff]
  %v217 = vld [vmem:[%s1 + $0x5d8] sm:$0xff]
  %v218 = vld [vmem:[%s1 + $0x5e0] sm:$0xff]
  %v219 = vld [vmem:[%s1 + $0x5e8] sm:$0xff]
  %v220 = vld [vmem:[%s1 + $0x5f0] sm:$0xff]
  %v221 = vld [vmem:[%s1 + $0x5f8] sm:$0xff]
  %v222 = vld [vmem:[%s1 + $0x600] sm:$0xff]
  %v223 = vld [vmem:[%s1 + $0x608] sm:$0xff]
  %v224 = vld [vmem:[%s1 + $0x610] sm:$0xff]
  %v225 = vld [vmem:[%s1 + $0x618] sm:$0xff]
  %v226 = vld [vmem:[%s1 + $0x620] sm:$0xff]
  %v227 = vld [vmem:[%s1 + $0x628] sm:$0xff]
  %v228 = vld [vmem:[%s1 + $0x630] sm:$0xff]
  %v229 = vld [vmem:[%s1 + $0x638] sm:$0xff]
  %vm230 = vcmask 523264
  %v232 = vsel %vm230, %v29, 0
  %234 = vmatprep.subr.mxu0 0.0
  %235 = vmatpush1.msra.mxu0 %v30
  %236 = vmatprep.subr.mxu0 0.0
  %237 = vmatpush1.msra.mxu0 %v31
  %238 = vmatprep.subr.mxu0 0.0
  %239 = vmatpush1.msra.mxu0 %v32
  %240 = vmatprep.subr.mxu0 0.0
  %241 = vmatpush1.msra.mxu0 %v33
  %242 = vmatprep.subr.mxu0 0.0
  %243 = vmatpush1.msra.mxu0 %v34
  %244 = vmatprep.subr.mxu0 0.0
  %245 = vmatpush1.msra.mxu0 %v35
  %246 = vmatprep.subr.mxu0 0.0
  %247 = vmatpush1.msra.mxu0 %v36
  %248 = vmatprep.subr.mxu0 0.0
  %249 = vmatpush1.msra.mxu0 %v37
  %250 = vmatprep.subr.mxu0 0.0
  %251 = vmatpush1.msra.mxu0 %v38
  %252 = vmatprep.subr.mxu0 0.0
  %253 = vmatpush1.msra.mxu0 %v39
  %254 = vmatprep.subr.mxu0 0.0
  %255 = vmatpush1.msra.mxu0 %v40
  %256 = vmatprep.subr.mxu0 0.0
  %257 = vmatpush1.msra.mxu0 %v41
  %258 = vmatprep.subr.mxu0 0.0
  %259 = vmatpush1.msra.mxu0 %v42
  %260 = vmatprep.subr.mxu0 0.0
  %261 = vmatpush1.msra.mxu0 %v43
  %262 = vmatprep.subr.mxu0 0.0
  %263 = vmatpush1.msra.mxu0 %v44
  %264 = vmatprep.subr.mxu0 0.0
  %265 = vmatpush1.msra.mxu0 %v45
  %266 = vmatprep.subr.mxu0 0.0
  %267 = vmatpush1.msra.mxu0 %v46
  %268 = vmatprep.subr.mxu0 0.0
  %269 = vmatpush1.msra.mxu0 %v47
  %270 = vmatprep.subr.mxu0 0.0
  %271 = vmatpush1.msra.mxu0 %v48
  %272 = vmatprep.subr.mxu0 0.0
  %273 = vmatpush1.msra.mxu0 %v49
  %274 = vmatprep.subr.mxu0 0.0
  %275 = vmatpush1.msra.mxu0 %v50
  %276 = vmatprep.subr.mxu0 0.0
  %277 = vmatpush1.msra.mxu0 %v51
  %278 = vmatprep.subr.mxu0 0.0
  %279 = vmatpush1.msra.mxu0 %v52
  %280 = vmatprep.subr.mxu0 0.0
  %281 = vmatpush1.msra.mxu0 %v53
  %282 = vmatprep.subr.mxu0 0.0
  %283 = vmatpush1.msra.mxu0 %v54
  %284 = vmatprep.subr.mxu0 0.0
  %285 = vmatpush1.msra.mxu0 %v55
  %286 = vmatprep.subr.mxu0 0.0
  %287 = vmatpush1.msra.mxu0 %v56
  %288 = vmatprep.subr.mxu0 0.0
  %289 = vmatpush1.msra.mxu0 %v57
  %290 = vmatprep.subr.mxu0 0.0
  %291 = vmatpush1.msra.mxu0 %v58
  %292 = vmatprep.subr.mxu0 0.0
  %293 = vmatpush1.msra.mxu0 %v59
  %294 = vmatprep.subr.mxu0 0.0
  %295 = vmatpush1.msra.mxu0 %v60
  %296 = vmatprep.subr.mxu0 0.0
  %297 = vmatpush1.msra.mxu0 %v61
  %298 = vmatprep.mubr.f32.mxu0 %v18
  %299 = vmatmul.mubr.f32.gmra.mrb[0].mxu0 %v17
  %v300 = vpop.f32.mrb[0].mxu0
  %v301 = vadd.f32 0.0, %v300
  %v302 = vpop.f32.mrb[0].mxu0
  %303 = vdwg.mxu0
  %304 = vmatprep.subr.mxu0 0.0
  %305 = vmatpush1.msra.mxu0 %v62
  %306 = vmatprep.subr.mxu0 0.0
  %307 = vmatpush1.msra.mxu0 %v63
  %308 = vmatprep.subr.mxu0 0.0
  %309 = vmatpush1.msra.mxu0 %v64
  %310 = vmatprep.subr.mxu0 0.0
  %311 = vmatpush1.msra.mxu0 %v65
  %312 = vmatprep.subr.mxu0 0.0
  %313 = vmatpush1.msra.mxu0 %v66
  %314 = vmatprep.subr.mxu0 0.0
  %315 = vmatpush1.msra.mxu0 %v67
  %316 = vmatprep.subr.mxu0 0.0
  %317 = vmatpush1.msra.mxu0 %v68
  %318 = vmatprep.subr.mxu0 0.0
  %319 = vmatpush1.msra.mxu0 %v69
  %320 = vmatprep.subr.mxu0 0.0
  %321 = vmatpush1.msra.mxu0 %v70
  %322 = vmatprep.subr.mxu0 0.0
  %323 = vmatpush1.msra.mxu0 %v71
  %324 = vmatprep.subr.mxu0 0.0
  %325 = vmatpush1.msra.mxu0 %v72
  %326 = vmatprep.subr.mxu0 0.0
  %327 = vmatpush1.msra.mxu0 %v73
  %328 = vmatprep.subr.mxu0 0.0
  %329 = vmatpush1.msra.mxu0 %v74
  %330 = vmatprep.subr.mxu0 0.0
  %331 = vmatpush1.msra.mxu0 %v75
  %332 = vmatprep.subr.mxu0 0.0
  %333 = vmatpush1.msra.mxu0 %v76
  %334 = vmatprep.subr.mxu0 0.0
  %335 = vmatpush1.msra.mxu0 %v77
  %336 = vmatprep.subr.mxu0 0.0
  %337 = vmatpush1.msra.mxu0 %v78
  %338 = vmatprep.subr.mxu0 0.0
  %339 = vmatpush1.msra.mxu0 %v79
  %340 = vmatprep.subr.mxu0 0.0
  %341 = vmatpush1.msra.mxu0 %v80
  %342 = vmatprep.subr.mxu0 0.0
  %343 = vmatpush1.msra.mxu0 %v81
  %344 = vmatprep.subr.mxu0 0.0
  %345 = vmatpush1.msra.mxu0 %v82
  %346 = vmatprep.subr.mxu0 0.0
  %347 = vmatpush1.msra.mxu0 %v83
  %348 = vmatprep.subr.mxu0 0.0
  %349 = vmatpush1.msra.mxu0 %v84
  %350 = vmatprep.subr.mxu0 0.0
  %351 = vmatpush1.msra.mxu0 %v85
  %352 = vmatprep.subr.mxu0 0.0
  %353 = vmatpush1.msra.mxu0 %v86
  %354 = vmatprep.subr.mxu0 0.0
  %355 = vmatpush1.msra.mxu0 %v87
  %356 = vmatprep.subr.mxu0 0.0
  %357 = vmatpush1.msra.mxu0 %v88
  %358 = vmatprep.subr.mxu0 0.0
  %359 = vmatpush1.msra.mxu0 %v89
  %360 = vmatprep.subr.mxu0 0.0
  %361 = vmatpush1.msra.mxu0 %v90
  %362 = vmatprep.subr.mxu0 0.0
  %363 = vmatpush1.msra.mxu0 %v91
  %364 = vmatprep.subr.mxu0 0.0
  %365 = vmatpush1.msra.mxu0 %v92
  %366 = vmatprep.subr.mxu0 0.0
  %367 = vmatpush1.msra.mxu0 %v93
  %368 = vmatprep.mubr.f32.mxu0 %v20
  %369 = vmatmul.mubr.f32.gmra.mrb[0].mxu0 %v19
  %v370 = vpop.f32.mrb[0].mxu0
  %v371 = vadd.f32 %v301, %v370
  %v372 = vpop.f32.mrb[0].mxu0
  %373 = vdwg.mxu0
  %374 = vmatprep.subr.mxu0 0.0
  %375 = vmatpush1.msra.mxu0 %v94
  %376 = vmatprep.subr.mxu0 0.0
  %377 = vmatpush1.msra.mxu0 %v95
  %378 = vmatprep.subr.mxu0 0.0
  %379 = vmatpush1.msra.mxu0 %v96
  %380 = vmatprep.subr.mxu0 0.0
  %381 = vmatpush1.msra.mxu0 %v97
  %382 = vmatprep.subr.mxu0 0.0
  %383 = vmatpush1.msra.mxu0 %v98
  %384 = vmatprep.subr.mxu0 0.0
  %385 = vmatpush1.msra.mxu0 %v99
  %386 = vmatprep.subr.mxu0 0.0
  %387 = vmatpush1.msra.mxu0 %v100
  %388 = vmatprep.subr.mxu0 0.0
  %389 = vmatpush1.msra.mxu0 %v101
  %390 = vmatprep.subr.mxu0 0.0
  %391 = vmatpush1.msra.mxu0 %v102
  %392 = vmatprep.subr.mxu0 0.0
  %393 = vmatpush1.msra.mxu0 %v103
  %394 = vmatprep.subr.mxu0 0.0
  %395 = vmatpush1.msra.mxu0 %v104
  %396 = vmatprep.subr.mxu0 0.0
  %397 = vmatpush1.msra.mxu0 %v105
  %398 = vmatprep.subr.mxu0 0.0
  %399 = vmatpush1.msra.mxu0 %v106
  %400 = vmatprep.subr.mxu0 0.0
  %401 = vmatpush1.msra.mxu0 %v107
  %402 = vmatprep.subr.mxu0 0.0
  %403 = vmatpush1.msra.mxu0 %v108
  %404 = vmatprep.subr.mxu0 0.0
  %405 = vmatpush1.msra.mxu0 %v109
  %406 = vmatprep.subr.mxu0 0.0
  %407 = vmatpush1.msra.mxu0 %v110
  %408 = vmatprep.subr.mxu0 0.0
  %409 = vmatpush1.msra.mxu0 %v111
  %410 = vmatprep.subr.mxu0 0.0
  %411 = vmatpush1.msra.mxu0 %v112
  %412 = vmatprep.subr.mxu0 0.0
  %413 = vmatpush1.msra.mxu0 %v113
  %414 = vmatprep.subr.mxu0 0.0
  %415 = vmatpush1.msra.mxu0 %v114
  %416 = vmatprep.subr.mxu0 0.0
  %417 = vmatpush1.msra.mxu0 %v115
  %418 = vmatprep.subr.mxu0 0.0
  %419 = vmatpush1.msra.mxu0 %v116
  %420 = vmatprep.subr.mxu0 0.0
  %421 = vmatpush1.msra.mxu0 %v117
  %422 = vmatprep.subr.mxu0 0.0
  %423 = vmatpush1.msra.mxu0 %v118
  %424 = vmatprep.subr.mxu0 0.0
  %425 = vmatpush1.msra.mxu0 %v119
  %426 = vmatprep.subr.mxu0 0.0
  %427 = vmatpush1.msra.mxu0 %v120
  %428 = vmatprep.subr.mxu0 0.0
  %429 = vmatpush1.msra.mxu0 %v121
  %430 = vmatprep.subr.mxu0 0.0
  %431 = vmatpush1.msra.mxu0 %v122
  %432 = vmatprep.subr.mxu0 0.0
  %433 = vmatpush1.msra.mxu0 %v123
  %434 = vmatprep.subr.mxu0 0.0
  %435 = vmatpush1.msra.mxu0 %v124
  %436 = vmatprep.subr.mxu0 0.0
  %437 = vmatpush1.msra.mxu0 %v125
  %438 = vmatprep.mubr.f32.mxu0 %v22
  %439 = vmatmul.mubr.f32.gmra.mrb[0].mxu0 %v21
  %v440 = vpop.f32.mrb[0].mxu0
  %v441 = vadd.f32 %v371, %v440
  %v442 = vpop.f32.mrb[0].mxu0
  %443 = vdwg.mxu0
  %444 = vmatprep.subr.mxu0 0.0
  %445 = vmatpush1.msra.mxu0 %v126
  %446 = vmatprep.subr.mxu0 0.0
  %447 = vmatpush1.msra.mxu0 %v127
  %448 = vmatprep.subr.mxu0 0.0
  %449 = vmatpush1.msra.mxu0 %v128
  %450 = vmatprep.subr.mxu0 0.0
  %451 = vmatpush1.msra.mxu0 %v129
  %452 = vmatprep.subr.mxu0 0.0
  %453 = vmatpush1.msra.mxu0 %v130
  %454 = vmatprep.subr.mxu0 0.0
  %455 = vmatpush1.msra.mxu0 %v131
  %456 = vmatprep.subr.mxu0 0.0
  %457 = vmatpush1.msra.mxu0 %v132
  %458 = vmatprep.subr.mxu0 0.0
  %459 = vmatpush1.msra.mxu0 %v133
  %460 = vmatprep.subr.mxu0 0.0
  %461 = vmatpush1.msra.mxu0 %v134
  %462 = vmatprep.subr.mxu0 0.0
  %463 = vmatpush1.msra.mxu0 %v135
  %464 = vmatprep.subr.mxu0 0.0
  %465 = vmatpush1.msra.mxu0 %v136
  %466 = vmatprep.subr.mxu0 0.0
  %467 = vmatpush1.msra.mxu0 %v137
  %468 = vmatprep.subr.mxu0 0.0
  %469 = vmatpush1.msra.mxu0 %v138
  %470 = vmatprep.subr.mxu0 0.0
  %471 = vmatpush1.msra.mxu0 %v139
  %472 = vmatprep.subr.mxu0 0.0
  %473 = vmatpush1.msra.mxu0 %v140
  %474 = vmatprep.subr.mxu0 0.0
  %475 = vmatpush1.msra.mxu0 %v141
  %476 = vmatprep.subr.mxu0 0.0
  %477 = vmatpush1.msra.mxu0 %v142
  %478 = vmatprep.subr.mxu0 0.0
  %479 = vmatpush1.msra.mxu0 %v143
  %480 = vmatprep.subr.mxu0 0.0
  %481 = vmatpush1.msra.mxu0 %v144
  %482 = vmatprep.subr.mxu0 0.0
  %483 = vmatpush1.msra.mxu0 %v145
  %484 = vmatprep.subr.mxu0 0.0
  %485 = vmatpush1.msra.mxu0 %v146
  %486 = vmatprep.subr.mxu0 0.0
  %487 = vmatpush1.msra.mxu0 %v147
  %488 = vmatprep.subr.mxu0 0.0
  %489 = vmatpush1.msra.mxu0 %v148
  %490 = vmatprep.subr.mxu0 0.0
  %491 = vmatpush1.msra.mxu0 %v149
  %492 = vmatprep.subr.mxu0 0.0
  %493 = vmatpush1.msra.mxu0 %v150
  %494 = vmatprep.subr.mxu0 0.0
  %495 = vmatpush1.msra.mxu0 %v151
  %496 = vmatprep.subr.mxu0 0.0
  %497 = vmatpush1.msra.mxu0 %v152
  %498 = vmatprep.subr.mxu0 0.0
  %499 = vmatpush1.msra.mxu0 %v153
  %500 = vmatprep.subr.mxu0 0.0
  %501 = vmatpush1.msra.mxu0 %v154
  %502 = vmatprep.subr.mxu0 0.0
  %503 = vmatpush1.msra.mxu0 %v155
  %504 = vmatprep.subr.mxu0 0.0
  %505 = vmatpush1.msra.mxu0 %v156
  %506 = vmatprep.subr.mxu0 0.0
  %507 = vmatpush1.msra.mxu0 %v157
  %508 = vmatprep.mubr.f32.mxu0 %v24
  %509 = vmatmul.mubr.f32.gmra.mrb[0].mxu0 %v23
  %v510 = vpop.f32.mrb[0].mxu0
  %v511 = vadd.f32 %v441, %v510
  %v512 = vpop.f32.mrb[0].mxu0
  %513 = vdwg.mxu0
  %514 = vmatprep.subr.mxu0 0.0
  %515 = vmatpush1.msra.mxu0 %v158
  %516 = vmatprep.subr.mxu0 0.0
  %517 = vmatpush1.msra.mxu0 %v159
  %518 = vmatprep.subr.mxu0 0.0
  %519 = vmatpush1.msra.mxu0 %v160
  %520 = vmatprep.subr.mxu0 0.0
  %521 = vmatpush1.msra.mxu0 %v161
  %522 = vmatprep.subr.mxu0 0.0
  %523 = vmatpush1.msra.mxu0 %v162
  %524 = vmatprep.subr.mxu0 0.0
  %525 = vmatpush1.msra.mxu0 %v163
  %526 = vmatprep.subr.mxu0 0.0
  %527 = vmatpush1.msra.mxu0 %v164
  %528 = vmatprep.subr.mxu0 0.0
  %529 = vmatpush1.msra.mxu0 %v165
  %530 = vmatprep.subr.mxu0 0.0
  %531 = vmatpush1.msra.mxu0 %v166
  %532 = vmatprep.subr.mxu0 0.0
  %533 = vmatpush1.msra.mxu0 %v167
  %534 = vmatprep.subr.mxu0 0.0
  %535 = vmatpush1.msra.mxu0 %v168
  %536 = vmatprep.subr.mxu0 0.0
  %537 = vmatpush1.msra.mxu0 %v169
  %538 = vmatprep.subr.mxu0 0.0
  %539 = vmatpush1.msra.mxu0 %v170
  %540 = vmatprep.subr.mxu0 0.0
  %541 = vmatpush1.msra.mxu0 %v171
  %542 = vmatprep.subr.mxu0 0.0
  %543 = vmatpush1.msra.mxu0 %v172
  %544 = vmatprep.subr.mxu0 0.0
  %545 = vmatpush1.msra.mxu0 %v173
  %546 = vmatprep.subr.mxu0 0.0
  %547 = vmatpush1.msra.mxu0 %v174
  %548 = vmatprep.subr.mxu0 0.0
  %549 = vmatpush1.msra.mxu0 %v175
  %550 = vmatprep.subr.mxu0 0.0
  %551 = vmatpush1.msra.mxu0 %v176
  %552 = vmatprep.subr.mxu0 0.0
  %553 = vmatpush1.msra.mxu0 %v177
  %554 = vmatprep.subr.mxu0 0.0
  %555 = vmatpush1.msra.mxu0 %v178
  %556 = vmatprep.subr.mxu0 0.0
  %557 = vmatpush1.msra.mxu0 %v179
  %558 = vmatprep.subr.mxu0 0.0
  %559 = vmatpush1.msra.mxu0 %v180
  %560 = vmatprep.subr.mxu0 0.0
  %561 = vmatpush1.msra.mxu0 %v181
  %562 = vmatprep.subr.mxu0 0.0
  %563 = vmatpush1.msra.mxu0 %v182
  %564 = vmatprep.subr.mxu0 0.0
  %565 = vmatpush1.msra.mxu0 %v183
  %566 = vmatprep.subr.mxu0 0.0
  %567 = vmatpush1.msra.mxu0 %v184
  %568 = vmatprep.subr.mxu0 0.0
  %569 = vmatpush1.msra.mxu0 %v185
  %570 = vmatprep.subr.mxu0 0.0
  %571 = vmatpush1.msra.mxu0 %v186
  %572 = vmatprep.subr.mxu0 0.0
  %573 = vmatpush1.msra.mxu0 %v187
  %574 = vmatprep.subr.mxu0 0.0
  %575 = vmatpush1.msra.mxu0 %v188
  %576 = vmatprep.subr.mxu0 0.0
  %577 = vmatpush1.msra.mxu0 %v189
  %578 = vmatprep.mubr.f32.mxu0 %v26
  %579 = vmatmul.mubr.f32.gmra.mrb[0].mxu0 %v25
  %v580 = vpop.f32.mrb[0].mxu0
  %v581 = vadd.f32 %v511, %v580
  %v582 = vpop.f32.mrb[0].mxu0
  %583 = vdwg.mxu0
  %584 = vmatprep.subr.mxu0 0.0
  %585 = vmatpush1.msra.mxu0 %v190
  %586 = vmatprep.subr.mxu0 0.0
  %587 = vmatpush1.msra.mxu0 %v191
  %588 = vmatprep.subr.mxu0 0.0
  %589 = vmatpush1.msra.mxu0 %v192
  %590 = vmatprep.subr.mxu0 0.0
  %591 = vmatpush1.msra.mxu0 %v193
  %592 = vmatprep.subr.mxu0 0.0
  %593 = vmatpush1.msra.mxu0 %v194
  %594 = vmatprep.subr.mxu0 0.0
  %595 = vmatpush1.msra.mxu0 %v195
  %596 = vmatprep.subr.mxu0 0.0
  %597 = vmatpush1.msra.mxu0 %v196
  %598 = vmatprep.subr.mxu0 0.0
  %599 = vmatpush1.msra.mxu0 %v197
  %600 = vmatprep.subr.mxu0 0.0
  %601 = vmatpush1.msra.mxu0 %v198
  %602 = vmatprep.subr.mxu0 0.0
  %603 = vmatpush1.msra.mxu0 %v199
  %604 = vmatprep.subr.mxu0 0.0
  %605 = vmatpush1.msra.mxu0 %v200
  %606 = vmatprep.subr.mxu0 0.0
  %607 = vmatpush1.msra.mxu0 %v201
  %608 = vmatprep.subr.mxu0 0.0
  %609 = vmatpush1.msra.mxu0 %v202
  %610 = vmatprep.subr.mxu0 0.0
  %611 = vmatpush1.msra.mxu0 %v203
  %612 = vmatprep.subr.mxu0 0.0
  %613 = vmatpush1.msra.mxu0 %v204
  %614 = vmatprep.subr.mxu0 0.0
  %615 = vmatpush1.msra.mxu0 %v205
  %616 = vmatprep.subr.mxu0 0.0
  %617 = vmatpush1.msra.mxu0 %v206
  %618 = vmatprep.subr.mxu0 0.0
  %619 = vmatpush1.msra.mxu0 %v207
  %620 = vmatprep.subr.mxu0 0.0
  %621 = vmatpush1.msra.mxu0 %v208
  %622 = vmatprep.subr.mxu0 0.0
  %623 = vmatpush1.msra.mxu0 %v209
  %624 = vmatprep.subr.mxu0 0.0
  %625 = vmatpush1.msra.mxu0 %v210
  %626 = vmatprep.subr.mxu0 0.0
  %627 = vmatpush1.msra.mxu0 %v211
  %628 = vmatprep.subr.mxu0 0.0
  %629 = vmatpush1.msra.mxu0 %v212
  %630 = vmatprep.subr.mxu0 0.0
  %631 = vmatpush1.msra.mxu0 %v213
  %632 = vmatprep.subr.mxu0 0.0
  %633 = vmatpush1.msra.mxu0 %v214
  %634 = vmatprep.subr.mxu0 0.0
  %635 = vmatpush1.msra.mxu0 %v215
  %636 = vmatprep.subr.mxu0 0.0
  %637 = vmatpush1.msra.mxu0 %v216
  %638 = vmatprep.subr.mxu0 0.0
  %639 = vmatpush1.msra.mxu0 %v217
  %640 = vmatprep.subr.mxu0 0.0
  %641 = vmatpush1.msra.mxu0 %v218
  %642 = vmatprep.subr.mxu0 0.0
  %643 = vmatpush1.msra.mxu0 %v219
  %644 = vmatprep.subr.mxu0 0.0
  %645 = vmatpush1.msra.mxu0 %v220
  %646 = vmatprep.subr.mxu0 0.0
  %647 = vmatpush1.msra.mxu0 %v221
  %648 = vmatprep.mubr.f32.mxu0 %v28
  %649 = vmatmul.mubr.f32.gmra.mrb[0].mxu0 %v27
  %v650 = vpop.f32.mrb[0].mxu0
  %v651 = vadd.f32 %v581, %v650
  %v652 = vpop.f32.mrb[0].mxu0
  %653 = vdwg.mxu0
  %654 = vmatprep.subr.mxu0 0.0
  %655 = vmatpush1.msra.mxu0 %v222
  %656 = vmatprep.subr.mxu0 0.0
  %657 = vmatpush1.msra.mxu0 %v223
  %658 = vmatprep.subr.mxu0 0.0
  %659 = vmatpush1.msra.mxu0 %v224
  %660 = vmatprep.subr.mxu0 0.0
  %661 = vmatpush1.msra.mxu0 %v225
  %662 = vmatprep.subr.mxu0 0.0
  %663 = vmatpush1.msra.mxu0 %v226
  %664 = vmatprep.subr.mxu0 0.0
  %665 = vmatpush1.msra.mxu0 %v227
  %666 = vmatprep.subr.mxu0 0.0
  %667 = vmatpush1.msra.mxu0 %v228
  %668 = vmatprep.subr.mxu0 0.0
  %669 = vmatpush1.msra.mxu0 %v229
  %670 = vmatprep.subr.mxu0 0.0
  %671 = vmatpush1.msra.mxu0 0.0
  %672 = vmatprep.subr.mxu0 0.0
  %673 = vmatpush1.msra.mxu0 0.0
  %674 = vmatprep.subr.mxu0 0.0
  %675 = vmatpush1.msra.mxu0 0.0
  %676 = vmatprep.subr.mxu0 0.0
  %677 = vmatpush1.msra.mxu0 0.0
  %678 = vmatprep.subr.mxu0 0.0
  %679 = vmatpush1.msra.mxu0 0.0
  %680 = vmatprep.subr.mxu0 0.0
  %681 = vmatpush1.msra.mxu0 0.0
  %682 = vmatprep.subr.mxu0 0.0
  %683 = vmatpush1.msra.mxu0 0.0
  %684 = vmatprep.subr.mxu0 0.0
  %685 = vmatpush1.msra.mxu0 0.0
  %686 = vmatprep.subr.mxu0 0.0
  %687 = vmatpush1.msra.mxu0 0.0
  %688 = vmatprep.subr.mxu0 0.0
  %689 = vmatpush1.msra.mxu0 0.0
  %690 = vmatprep.subr.mxu0 0.0
  %691 = vmatpush1.msra.mxu0 0.0
  %692 = vmatprep.subr.mxu0 0.0
  %693 = vmatpush1.msra.mxu0 0.0
  %694 = vmatprep.subr.mxu0 0.0
  %695 = vmatpush1.msra.mxu0 0.0
  %696 = vmatprep.subr.mxu0 0.0
  %697 = vmatpush1.msra.mxu0 0.0
  %698 = vmatprep.subr.mxu0 0.0
  %699 = vmatpush1.msra.mxu0 0.0
  %700 = vmatprep.subr.mxu0 0.0
  %701 = vmatpush1.msra.mxu0 0.0
  %702 = vmatprep.subr.mxu0 0.0
  %703 = vmatpush1.msra.mxu0 0.0
  %704 = vmatprep.subr.mxu0 0.0
  %705 = vmatpush1.msra.mxu0 0.0
  %706 = vmatprep.subr.mxu0 0.0
  %707 = vmatpush1.msra.mxu0 0.0
  %708 = vmatprep.subr.mxu0 0.0
  %709 = vmatpush1.msra.mxu0 0.0
  %710 = vmatprep.subr.mxu0 0.0
  %711 = vmatpush1.msra.mxu0 0.0
  %712 = vmatprep.subr.mxu0 0.0
  %713 = vmatpush1.msra.mxu0 0.0
  %714 = vmatprep.subr.mxu0 0.0
  %715 = vmatpush1.msra.mxu0 0.0
  %716 = vmatprep.subr.mxu0 0.0
  %717 = vmatpush1.msra.mxu0 0.0
  %718 = vmatprep.mubr.f32.mxu0 0.0
  %719 = vmatmul.mubr.f32.gmra.mrb[0].mxu0 %v232
  %v720 = vpop.f32.mrb[0].mxu0
  %v721 = vadd.f32 %v651, %v720
  %v722 = vpop.f32.mrb[0].mxu0
  %723 = vdwg.mxu0
  %v725 = vcombine.high %v721, %v721
  %vm727 = vcmask 1043456
  %v728 = vsel %vm727, %v721, 0.0
  %v729 = vrot.slane %v728, 4
  %v730 = vadd.f32 %v728, %v729
  %v731 = vrot.slane %v730, 2
  %v732 = vadd.f32 %v730, %v731
  %v733 = vrot.slane %v732, 1
  %v734 = vadd.f32 %v732, %v733
  %v735 = vsel %vm727, %v725, 0.0
  %v736 = vrot.slane %v735, 4
  %v737 = vadd.f32 %v735, %v736
  %v738 = vrot.slane %v737, 2
  %v739 = vadd.f32 %v737, %v738
  %v740 = vrot.slane %v739, 1
  %v741 = vadd.f32 %v739, %v740
  %v742 = vrcp.pop 4.0
  %v743 = vmul.f32 %v734, %v742
  %v744 = vmul.f32 %v741, %v742
  %v745 = vmul.f32 %v721, %v721
  %v746 = vmul.f32 %v725, %v725
  %v747 = vsel %vm727, %v745, 0.0
  %v748 = vrot.slane %v747, 4
  %v749 = vadd.f32 %v747, %v748
  %v750 = vrot.slane %v749, 2
  %v751 = vadd.f32 %v749, %v750
  %v752 = vrot.slane %v751, 1
  %v753 = vadd.f32 %v751, %v752
  %v754 = vsel %vm727, %v746, 0.0
  %v755 = vrot.slane %v754, 4
  %v756 = vadd.f32 %v754, %v755
  %v757 = vrot.slane %v756, 2
  %v758 = vadd.f32 %v756, %v757
  %v759 = vrot.slane %v758, 1
  %v760 = vadd.f32 %v758, %v759
  %v761 = vmul.f32 %v753, %v742
  %v762 = vmul.f32 %v760, %v742
  %v763 = vmul.f32 %v743, %v743
  %v764 = vmul.f32 %v744, %v744
  %v765 = vsub.f32 %v761, %v763
  %v766 = vsub.f32 %v762, %v764
  %v767 = vmax.f32 %v765, 0.0
  %v768 = vmax.f32 %v766, 0.0
  %v769 = vsub.f32 %v721, %v743
  %v770 = vsub.f32 %v725, %v744
  %v771 = vadd.f32 %v767, 1e-05
  %v772 = vadd.f32 %v768, 1e-05
  %v773 = vrsqrt.pop %v771
  %v774 = vrsqrt.pop %v772
  %v775 = vmul.f32 %v769, %v773
  %v776 = vmul.f32 %v770, %v774
  %v777 = vmax.f32 %v775, 0.0
  %v778 = vmax.f32 %v776, 0.0
  %v779 = vld [vmem:[%s3] sm:$0x1]
  %v780 = vld [vmem:[%s2] sm:$0xff]
  %v781 = vld [vmem:[%s2 + $0x8] sm:$0xff]
  %v782 = vld [vmem:[%s2 + $0x10] sm:$0xff]
  %v783 = vld [vmem:[%s2 + $0x18] sm:$0xff]
  %v784 = vld [vmem:[%s2 + $0x20] sm:$0xff]
  %v785 = vld [vmem:[%s2 + $0x28] sm:$0xff]
  %v786 = vld [vmem:[%s2 + $0x30] sm:$0xff]
  %v787 = vld [vmem:[%s2 + $0x38] sm:$0xff]
  %v788 = vld [vmem:[%s2 + $0x40] sm:$0xff]
  %v789 = vld [vmem:[%s2 + $0x48] sm:$0xff]
  %v790 = vld [vmem:[%s2 + $0x50] sm:$0xff]
  %v791 = vld [vmem:[%s2 + $0x58] sm:$0xff]
  %v792 = vld [vmem:[%s2 + $0x60] sm:$0xff]
  %v793 = vld [vmem:[%s2 + $0x68] sm:$0xff]
  %v794 = vld [vmem:[%s2 + $0x70] sm:$0xff]
  %v795 = vld [vmem:[%s2 + $0x78] sm:$0xff]
  %v798 = vlaneseq
  %v799 = vshrl.u32 %v798, 7
  %v800 = vsub.s32 0, %v799
  %v801 = vrot.slane %v777, %v800
  %v802 = vlaneseq
  %v803 = vshrl.u32 %v802, 7
  %v804 = vsub.s32 0, %v803
  %v805 = vrot.slane %v778, %v804
  %vm806 = vcmask 1041409
  %v807 = vsel %vm806, %v805, %v801
  %809 = vmatprep.subr.mxu0 0.0
  %810 = vmatpush1.msra.mxu0 %v780
  %811 = vmatprep.subr.mxu0 0.0
  %812 = vmatpush1.msra.mxu0 %v781
  %813 = vmatprep.subr.mxu0 0.0
  %814 = vmatpush1.msra.mxu0 %v782
  %815 = vmatprep.subr.mxu0 0.0
  %816 = vmatpush1.msra.mxu0 %v783
  %817 = vmatprep.subr.mxu0 0.0
  %818 = vmatpush1.msra.mxu0 %v784
  %819 = vmatprep.subr.mxu0 0.0
  %820 = vmatpush1.msra.mxu0 %v785
  %821 = vmatprep.subr.mxu0 0.0
  %822 = vmatpush1.msra.mxu0 %v786
  %823 = vmatprep.subr.mxu0 0.0
  %824 = vmatpush1.msra.mxu0 %v787
  %825 = vmatprep.subr.mxu0 0.0
  %826 = vmatpush1.msra.mxu0 %v788
  %827 = vmatprep.subr.mxu0 0.0
  %828 = vmatpush1.msra.mxu0 %v789
  %829 = vmatprep.subr.mxu0 0.0
  %830 = vmatpush1.msra.mxu0 %v790
  %831 = vmatprep.subr.mxu0 0.0
  %832 = vmatpush1.msra.mxu0 %v791
  %833 = vmatprep.subr.mxu0 0.0
  %834 = vmatpush1.msra.mxu0 %v792
  %835 = vmatprep.subr.mxu0 0.0
  %836 = vmatpush1.msra.mxu0 %v793
  %837 = vmatprep.subr.mxu0 0.0
  %838 = vmatpush1.msra.mxu0 %v794
  %839 = vmatprep.subr.mxu0 0.0
  %840 = vmatpush1.msra.mxu0 %v795
  %841 = vmatprep.subr.mxu0 0.0
  %842 = vmatpush1.msra.mxu0 0.0
  %843 = vmatprep.subr.mxu0 0.0
  %844 = vmatpush1.msra.mxu0 0.0
  %845 = vmatprep.subr.mxu0 0.0
  %846 = vmatpush1.msra.mxu0 0.0
  %847 = vmatprep.subr.mxu0 0.0
  %848 = vmatpush1.msra.mxu0 0.0
  %849 = vmatprep.subr.mxu0 0.0
  %850 = vmatpush1.msra.mxu0 0.0
  %851 = vmatprep.subr.mxu0 0.0
  %852 = vmatpush1.msra.mxu0 0.0
  %853 = vmatprep.subr.mxu0 0.0
  %854 = vmatpush1.msra.mxu0 0.0
  %855 = vmatprep.subr.mxu0 0.0
  %856 = vmatpush1.msra.mxu0 0.0
  %857 = vmatprep.subr.mxu0 0.0
  %858 = vmatpush1.msra.mxu0 0.0
  %859 = vmatprep.subr.mxu0 0.0
  %860 = vmatpush1.msra.mxu0 0.0
  %861 = vmatprep.subr.mxu0 0.0
  %862 = vmatpush1.msra.mxu0 0.0
  %863 = vmatprep.subr.mxu0 0.0
  %864 = vmatpush1.msra.mxu0 0.0
  %865 = vmatprep.subr.mxu0 0.0
  %866 = vmatpush1.msra.mxu0 0.0
  %867 = vmatprep.subr.mxu0 0.0
  %868 = vmatpush1.msra.mxu0 0.0
  %869 = vmatprep.subr.mxu0 0.0
  %870 = vmatpush1.msra.mxu0 0.0
  %871 = vmatprep.subr.mxu0 0.0
  %872 = vmatpush1.msra.mxu0 0.0
  %873 = vmatprep.mubr.f32.mxu0 0.0
  %874 = vmatmul.mubr.f32.gmra.mrb[0].mxu0 %v807
  %v875 = vpop.f32.mrb[0].mxu0
  %v876 = vadd.f32 0.0, %v875
  %v877 = vpop.f32.mrb[0].mxu0
  %878 = vdwg.mxu0
  %v880 = vlaneseq
  %v881 = vshrl.u32 %v880, 7
  %v882 = vsub.s32 0, %v881
  %v883 = vrot.slane %v779, %v882
  %v885 = vadd.f32 %v883, %v876
  %s886 = scalar_lea.vmem %s2, 128
  %v887 = vld [vmem:[%s886] sm:$0xff]
  %v888 = vld [vmem:[%s886 + $0x8] sm:$0xff]
  %v889 = vld [vmem:[%s886 + $0x10] sm:$0xff]
  %v890 = vld [vmem:[%s886 + $0x18] sm:$0xff]
  %v891 = vld [vmem:[%s886 + $0x20] sm:$0xff]
  %v892 = vld [vmem:[%s886 + $0x28] sm:$0xff]
  %v893 = vld [vmem:[%s886 + $0x30] sm:$0xff]
  %v894 = vld [vmem:[%s886 + $0x38] sm:$0xff]
  %v895 = vld [vmem:[%s886 + $0x40] sm:$0xff]
  %v896 = vld [vmem:[%s886 + $0x48] sm:$0xff]
  %v897 = vld [vmem:[%s886 + $0x50] sm:$0xff]
  %v898 = vld [vmem:[%s886 + $0x58] sm:$0xff]
  %v899 = vld [vmem:[%s886 + $0x60] sm:$0xff]
  %v900 = vld [vmem:[%s886 + $0x68] sm:$0xff]
  %v901 = vld [vmem:[%s886 + $0x70] sm:$0xff]
  %v902 = vld [vmem:[%s886 + $0x78] sm:$0xff]
  %v903 = vlaneseq
  %v904 = vshrl.u32 %v903, 7
  %v905 = vsub.s32 1, %v904
  %v906 = vrot.slane %v777, %v905
  %v907 = vlaneseq
  %v908 = vshrl.u32 %v907, 7
  %v909 = vsub.s32 1, %v908
  %v910 = vrot.slane %v778, %v909
  %v911 = vsel %vm806, %v910, %v906
  %913 = vmatprep.subr.mxu0 0.0
  %914 = vmatpush1.msra.mxu0 %v887
  %915 = vmatprep.subr.mxu0 0.0
  %916 = vmatpush1.msra.mxu0 %v888
  %917 = vmatprep.subr.mxu0 0.0
  %918 = vmatpush1.msra.mxu0 %v889
  %919 = vmatprep.subr.mxu0 0.0
  %920 = vmatpush1.msra.mxu0 %v890
  %921 = vmatprep.subr.mxu0 0.0
  %922 = vmatpush1.msra.mxu0 %v891
  %923 = vmatprep.subr.mxu0 0.0
  %924 = vmatpush1.msra.mxu0 %v892
  %925 = vmatprep.subr.mxu0 0.0
  %926 = vmatpush1.msra.mxu0 %v893
  %927 = vmatprep.subr.mxu0 0.0
  %928 = vmatpush1.msra.mxu0 %v894
  %929 = vmatprep.subr.mxu0 0.0
  %930 = vmatpush1.msra.mxu0 %v895
  %931 = vmatprep.subr.mxu0 0.0
  %932 = vmatpush1.msra.mxu0 %v896
  %933 = vmatprep.subr.mxu0 0.0
  %934 = vmatpush1.msra.mxu0 %v897
  %935 = vmatprep.subr.mxu0 0.0
  %936 = vmatpush1.msra.mxu0 %v898
  %937 = vmatprep.subr.mxu0 0.0
  %938 = vmatpush1.msra.mxu0 %v899
  %939 = vmatprep.subr.mxu0 0.0
  %940 = vmatpush1.msra.mxu0 %v900
  %941 = vmatprep.subr.mxu0 0.0
  %942 = vmatpush1.msra.mxu0 %v901
  %943 = vmatprep.subr.mxu0 0.0
  %944 = vmatpush1.msra.mxu0 %v902
  %945 = vmatprep.subr.mxu0 0.0
  %946 = vmatpush1.msra.mxu0 0.0
  %947 = vmatprep.subr.mxu0 0.0
  %948 = vmatpush1.msra.mxu0 0.0
  %949 = vmatprep.subr.mxu0 0.0
  %950 = vmatpush1.msra.mxu0 0.0
  %951 = vmatprep.subr.mxu0 0.0
  %952 = vmatpush1.msra.mxu0 0.0
  %953 = vmatprep.subr.mxu0 0.0
  %954 = vmatpush1.msra.mxu0 0.0
  %955 = vmatprep.subr.mxu0 0.0
  %956 = vmatpush1.msra.mxu0 0.0
  %957 = vmatprep.subr.mxu0 0.0
  %958 = vmatpush1.msra.mxu0 0.0
  %959 = vmatprep.subr.mxu0 0.0
  %960 = vmatpush1.msra.mxu0 0.0
  %961 = vmatprep.subr.mxu0 0.0
  %962 = vmatpush1.msra.mxu0 0.0
  %963 = vmatprep.subr.mxu0 0.0
  %964 = vmatpush1.msra.mxu0 0.0
  %965 = vmatprep.subr.mxu0 0.0
  %966 = vmatpush1.msra.mxu0 0.0
  %967 = vmatprep.subr.mxu0 0.0
  %968 = vmatpush1.msra.mxu0 0.0
  %969 = vmatprep.subr.mxu0 0.0
  %970 = vmatpush1.msra.mxu0 0.0
  %971 = vmatprep.subr.mxu0 0.0
  %972 = vmatpush1.msra.mxu0 0.0
  %973 = vmatprep.subr.mxu0 0.0
  %974 = vmatpush1.msra.mxu0 0.0
  %975 = vmatprep.subr.mxu0 0.0
  %976 = vmatpush1.msra.mxu0 0.0
  %977 = vmatprep.mubr.f32.mxu0 0.0
  %978 = vmatmul.mubr.f32.gmra.mrb[0].mxu0 %v911
  %v979 = vpop.f32.mrb[0].mxu0
  %v980 = vadd.f32 0.0, %v979
  %v981 = vpop.f32.mrb[0].mxu0
  %982 = vdwg.mxu0
  %v983 = vadd.f32 %v885, %v980
  %s984 = scalar_lea.vmem %s2, 256
  %v985 = vld [vmem:[%s984] sm:$0xff]
  %v986 = vld [vmem:[%s984 + $0x8] sm:$0xff]
  %v987 = vld [vmem:[%s984 + $0x10] sm:$0xff]
  %v988 = vld [vmem:[%s984 + $0x18] sm:$0xff]
  %v989 = vld [vmem:[%s984 + $0x20] sm:$0xff]
  %v990 = vld [vmem:[%s984 + $0x28] sm:$0xff]
  %v991 = vld [vmem:[%s984 + $0x30] sm:$0xff]
  %v992 = vld [vmem:[%s984 + $0x38] sm:$0xff]
  %v993 = vld [vmem:[%s984 + $0x40] sm:$0xff]
  %v994 = vld [vmem:[%s984 + $0x48] sm:$0xff]
  %v995 = vld [vmem:[%s984 + $0x50] sm:$0xff]
  %v996 = vld [vmem:[%s984 + $0x58] sm:$0xff]
  %v997 = vld [vmem:[%s984 + $0x60] sm:$0xff]
  %v998 = vld [vmem:[%s984 + $0x68] sm:$0xff]
  %v999 = vld [vmem:[%s984 + $0x70] sm:$0xff]
  %v1000 = vld [vmem:[%s984 + $0x78] sm:$0xff]
  %v1001 = vlaneseq
  %v1002 = vshrl.u32 %v1001, 7
  %v1003 = vsub.s32 2, %v1002
  %v1004 = vrot.slane %v777, %v1003
  %v1005 = vlaneseq
  %v1006 = vshrl.u32 %v1005, 7
  %v1007 = vsub.s32 2, %v1006
  %v1008 = vrot.slane %v778, %v1007
  %v1009 = vsel %vm806, %v1008, %v1004
  %1011 = vmatprep.subr.mxu0 0.0
  %1012 = vmatpush1.msra.mxu0 %v985
  %1013 = vmatprep.subr.mxu0 0.0
  %1014 = vmatpush1.msra.mxu0 %v986
  %1015 = vmatprep.subr.mxu0 0.0
  %1016 = vmatpush1.msra.mxu0 %v987
  %1017 = vmatprep.subr.mxu0 0.0
  %1018 = vmatpush1.msra.mxu0 %v988
  %1019 = vmatprep.subr.mxu0 0.0
  %1020 = vmatpush1.msra.mxu0 %v989
  %1021 = vmatprep.subr.mxu0 0.0
  %1022 = vmatpush1.msra.mxu0 %v990
  %1023 = vmatprep.subr.mxu0 0.0
  %1024 = vmatpush1.msra.mxu0 %v991
  %1025 = vmatprep.subr.mxu0 0.0
  %1026 = vmatpush1.msra.mxu0 %v992
  %1027 = vmatprep.subr.mxu0 0.0
  %1028 = vmatpush1.msra.mxu0 %v993
  %1029 = vmatprep.subr.mxu0 0.0
  %1030 = vmatpush1.msra.mxu0 %v994
  %1031 = vmatprep.subr.mxu0 0.0
  %1032 = vmatpush1.msra.mxu0 %v995
  %1033 = vmatprep.subr.mxu0 0.0
  %1034 = vmatpush1.msra.mxu0 %v996
  %1035 = vmatprep.subr.mxu0 0.0
  %1036 = vmatpush1.msra.mxu0 %v997
  %1037 = vmatprep.subr.mxu0 0.0
  %1038 = vmatpush1.msra.mxu0 %v998
  %1039 = vmatprep.subr.mxu0 0.0
  %1040 = vmatpush1.msra.mxu0 %v999
  %1041 = vmatprep.subr.mxu0 0.0
  %1042 = vmatpush1.msra.mxu0 %v1000
  %1043 = vmatprep.subr.mxu0 0.0
  %1044 = vmatpush1.msra.mxu0 0.0
  %1045 = vmatprep.subr.mxu0 0.0
  %1046 = vmatpush1.msra.mxu0 0.0
  %1047 = vmatprep.subr.mxu0 0.0
  %1048 = vmatpush1.msra.mxu0 0.0
  %1049 = vmatprep.subr.mxu0 0.0
  %1050 = vmatpush1.msra.mxu0 0.0
  %1051 = vmatprep.subr.mxu0 0.0
  %1052 = vmatpush1.msra.mxu0 0.0
  %1053 = vmatprep.subr.mxu0 0.0
  %1054 = vmatpush1.msra.mxu0 0.0
  %1055 = vmatprep.subr.mxu0 0.0
  %1056 = vmatpush1.msra.mxu0 0.0
  %1057 = vmatprep.subr.mxu0 0.0
  %1058 = vmatpush1.msra.mxu0 0.0
  %1059 = vmatprep.subr.mxu0 0.0
  %1060 = vmatpush1.msra.mxu0 0.0
  %1061 = vmatprep.subr.mxu0 0.0
  %1062 = vmatpush1.msra.mxu0 0.0
  %1063 = vmatprep.subr.mxu0 0.0
  %1064 = vmatpush1.msra.mxu0 0.0
  %1065 = vmatprep.subr.mxu0 0.0
  %1066 = vmatpush1.msra.mxu0 0.0
  %1067 = vmatprep.subr.mxu0 0.0
  %1068 = vmatpush1.msra.mxu0 0.0
  %1069 = vmatprep.subr.mxu0 0.0
  %1070 = vmatpush1.msra.mxu0 0.0
  %1071 = vmatprep.subr.mxu0 0.0
  %1072 = vmatpush1.msra.mxu0 0.0
  %1073 = vmatprep.subr.mxu0 0.0
  %1074 = vmatpush1.msra.mxu0 0.0
  %1075 = vmatprep.mubr.f32.mxu0 0.0
  %1076 = vmatmul.mubr.f32.gmra.mrb[0].mxu0 %v1009
  %v1077 = vpop.f32.mrb[0].mxu0
  %v1078 = vadd.f32 0.0, %v1077
  %v1079 = vpop.f32.mrb[0].mxu0
  %1080 = vdwg.mxu0
  %v1081 = vadd.f32 %v983, %v1078
  %s1082 = scalar_lea.vmem %s2, 384
  %v1083 = vld [vmem:[%s1082] sm:$0xff]
  %v1084 = vld [vmem:[%s1082 + $0x8] sm:$0xff]
  %v1085 = vld [vmem:[%s1082 + $0x10] sm:$0xff]
  %v1086 = vld [vmem:[%s1082 + $0x18] sm:$0xff]
  %v1087 = vld [vmem:[%s1082 + $0x20] sm:$0xff]
  %v1088 = vld [vmem:[%s1082 + $0x28] sm:$0xff]
  %v1089 = vld [vmem:[%s1082 + $0x30] sm:$0xff]
  %v1090 = vld [vmem:[%s1082 + $0x38] sm:$0xff]
  %v1091 = vld [vmem:[%s1082 + $0x40] sm:$0xff]
  %v1092 = vld [vmem:[%s1082 + $0x48] sm:$0xff]
  %v1093 = vld [vmem:[%s1082 + $0x50] sm:$0xff]
  %v1094 = vld [vmem:[%s1082 + $0x58] sm:$0xff]
  %v1095 = vld [vmem:[%s1082 + $0x60] sm:$0xff]
  %v1096 = vld [vmem:[%s1082 + $0x68] sm:$0xff]
  %v1097 = vld [vmem:[%s1082 + $0x70] sm:$0xff]
  %v1098 = vld [vmem:[%s1082 + $0x78] sm:$0xff]
  %v1099 = vlaneseq
  %v1100 = vshrl.u32 %v1099, 7
  %v1101 = vsub.s32 3, %v1100
  %v1102 = vrot.slane %v777, %v1101
  %v1103 = vlaneseq
  %v1104 = vshrl.u32 %v1103, 7
  %v1105 = vsub.s32 3, %v1104
  %v1106 = vrot.slane %v778, %v1105
  %v1107 = vsel %vm806, %v1106, %v1102
  %1109 = vmatprep.subr.mxu0 0.0
  %1110 = vmatpush1.msra.mxu0 %v1083
  %1111 = vmatprep.subr.mxu0 0.0
  %1112 = vmatpush1.msra.mxu0 %v1084
  %1113 = vmatprep.subr.mxu0 0.0
  %1114 = vmatpush1.msra.mxu0 %v1085
  %1115 = vmatprep.subr.mxu0 0.0
  %1116 = vmatpush1.msra.mxu0 %v1086
  %1117 = vmatprep.subr.mxu0 0.0
  %1118 = vmatpush1.msra.mxu0 %v1087
  %1119 = vmatprep.subr.mxu0 0.0
  %1120 = vmatpush1.msra.mxu0 %v1088
  %1121 = vmatprep.subr.mxu0 0.0
  %1122 = vmatpush1.msra.mxu0 %v1089
  %1123 = vmatprep.subr.mxu0 0.0
  %1124 = vmatpush1.msra.mxu0 %v1090
  %1125 = vmatprep.subr.mxu0 0.0
  %1126 = vmatpush1.msra.mxu0 %v1091
  %1127 = vmatprep.subr.mxu0 0.0
  %1128 = vmatpush1.msra.mxu0 %v1092
  %1129 = vmatprep.subr.mxu0 0.0
  %1130 = vmatpush1.msra.mxu0 %v1093
  %1131 = vmatprep.subr.mxu0 0.0
  %1132 = vmatpush1.msra.mxu0 %v1094
  %1133 = vmatprep.subr.mxu0 0.0
  %1134 = vmatpush1.msra.mxu0 %v1095
  %1135 = vmatprep.subr.mxu0 0.0
  %1136 = vmatpush1.msra.mxu0 %v1096
  %1137 = vmatprep.subr.mxu0 0.0
  %1138 = vmatpush1.msra.mxu0 %v1097
  %1139 = vmatprep.subr.mxu0 0.0
  %1140 = vmatpush1.msra.mxu0 %v1098
  %1141 = vmatprep.subr.mxu0 0.0
  %1142 = vmatpush1.msra.mxu0 0.0
  %1143 = vmatprep.subr.mxu0 0.0
  %1144 = vmatpush1.msra.mxu0 0.0
  %1145 = vmatprep.subr.mxu0 0.0
  %1146 = vmatpush1.msra.mxu0 0.0
  %1147 = vmatprep.subr.mxu0 0.0
  %1148 = vmatpush1.msra.mxu0 0.0
  %1149 = vmatprep.subr.mxu0 0.0
  %1150 = vmatpush1.msra.mxu0 0.0
  %1151 = vmatprep.subr.mxu0 0.0
  %1152 = vmatpush1.msra.mxu0 0.0
  %1153 = vmatprep.subr.mxu0 0.0
  %1154 = vmatpush1.msra.mxu0 0.0
  %1155 = vmatprep.subr.mxu0 0.0
  %1156 = vmatpush1.msra.mxu0 0.0
  %1157 = vmatprep.subr.mxu0 0.0
  %1158 = vmatpush1.msra.mxu0 0.0
  %1159 = vmatprep.subr.mxu0 0.0
  %1160 = vmatpush1.msra.mxu0 0.0
  %1161 = vmatprep.subr.mxu0 0.0
  %1162 = vmatpush1.msra.mxu0 0.0
  %1163 = vmatprep.subr.mxu0 0.0
  %1164 = vmatpush1.msra.mxu0 0.0
  %1165 = vmatprep.subr.mxu0 0.0
  %1166 = vmatpush1.msra.mxu0 0.0
  %1167 = vmatprep.subr.mxu0 0.0
  %1168 = vmatpush1.msra.mxu0 0.0
  %1169 = vmatprep.subr.mxu0 0.0
  %1170 = vmatpush1.msra.mxu0 0.0
  %1171 = vmatprep.subr.mxu0 0.0
  %1172 = vmatpush1.msra.mxu0 0.0
  %1173 = vmatprep.mubr.f32.mxu0 0.0
  %1174 = vmatmul.mubr.f32.gmra.mrb[0].mxu0 %v1107
  %v1175 = vpop.f32.mrb[0].mxu0
  %v1176 = vadd.f32 0.0, %v1175
  %v1177 = vpop.f32.mrb[0].mxu0
  %1178 = vdwg.mxu0
  %v1179 = vadd.f32 %v1081, %v1176
  %vm1180 = vcmask 254976
  %1181 = vst.msk [vmem:[%s4] sm:$0x3] %vm1180, %v1179
  // Predicated region
  $region18: #{encoder_forward.7} parent=0 // pred_check
    _
  $region19: #{encoder_forward.7} parent=0 // pred_check_branch
    %1183 = sbr.rel (0) target = $region21
  $region20: #{encoder_forward.7} parent=0 // pred_region
    _
  $region21: #{encoder_forward.7} parent=0 // pred_fallthru
    _
  // Predicated region
  $region22: #{encoder_forward.7} parent=0 // pred_check
    _
  $region23: #{encoder_forward.7} parent=0 // pred_check_branch
    %1185 = sbr.rel (0) target = $region25
  $region24: #{encoder_forward.7} parent=0 // pred_region
    _
  $region25: #{encoder_forward.7} parent=0 // pred_fallthru
    _

</llo_original>
